<compile_context>
chip_gen: v7x
topology: tpu7x:2x2x1
jax: 0.10.0
libtpu: 0.0.40
codegen_flags: <defaults>
</compile_context>

<pallas_src>
import math

import jax
import jax.numpy as jnp
import numpy as np
from jax.experimental import pallas as pl
from jax.experimental.pallas import tpu as pltpu

# ----------------------------- model config (small) -----------------------------
D_MODEL = 32
NUM_HEADS = 4
D_FF = 64
D_K = D_MODEL // NUM_HEADS
EPS = 1e-6
MASK_NEG = 1e9

# vec slab row layout, each row is 128 lanes wide:
#   row 0: [self  bq | bk | bv | bo]                (4 x 32)
#   row 1: [cross bq | bk | bv | bo]                (4 x 32)
#   row 2: [b_ff1 (64) | b_ff2 (32) | pad (32)]
#   row 3: [g1 | be1 | g2 | be2]                    (4 x 32)
#   row 4: [g3 | be3 | pad | pad]                   (4 x 32)


# ----------------------------- the Pallas kernel -----------------------------


def decoder_layer_kernel(x_ref, mem_ref, mask_ref, w_attn_ref, w_ff_ref, vec_ref,
                         out_ref):
    S = x_ref.shape[1]
    SM = mem_ref.shape[1]
    scale = 1.0 / math.sqrt(D_K)

    x = x_ref[0]                                  # (S, D)   this batch element
    mem = mem_ref[0]                              # (SM, D)
    masks = mask_ref[0]                           # (S, S + SM)  [tgt | src], {0,1} float
    # additive mask bias, computed once: 0 where attended, -1e9 where masked
    tbias = (masks[:, 0:S] - 1.0) * MASK_NEG      # (S, S)
    sbias = (masks[:, S:S + SM] - 1.0) * MASK_NEG  # (S, SM)

    vec = vec_ref[...]                            # (5, 128) biases + LN params

    def layer_norm(z, gamma, beta):
        # Matches the PyTorch module: unbiased std, eps added to std (outside sqrt).
        mean = jnp.mean(z, axis=-1, keepdims=True)
        c = z - mean
        var = jnp.sum(c * c, axis=-1, keepdims=True) * (1.0 / (D_MODEL - 1))
        inv = pl.reciprocal(jnp.sqrt(var) + EPS, approx=False)   # exact EUP recip
        return gamma * (c * inv) + beta

    def split_heads(t, L):
        # (L, H*D_K) -> (H, L, D_K): one reshape + one transpose per tensor
        # (replaces the 4 masked D_K-wide lane slices of the per-head formulation).
        return jnp.transpose(t.reshape(L, NUM_HEADS, D_K), (1, 0, 2))

    def mha(xq, xkv, bias, idx, fused):
        w = w_attn_ref[idx]                                   # (D, 4D) [Wq|Wk|Wv|Wo]
        b_qkv = vec[idx:idx + 1, 0:3 * D_MODEL]               # (1, 96)
        b_o = vec[idx:idx + 1, 3 * D_MODEL:4 * D_MODEL]       # (1, 32)
        if fused:
            # self-attention: ONE fused lane-dense QKV matmul (N = 96)
            qkv = jnp.dot(xq, w[:, 0:3 * D_MODEL],
                          preferred_element_type=jnp.float32) + b_qkv
            q = qkv[:, 0:D_MODEL]
            k = qkv[:, D_MODEL:2 * D_MODEL]
            v = qkv[:, 2 * D_MODEL:3 * D_MODEL]
        else:
            # cross-attention: Q from the decoder stream, fused KV (N = 64) from memory
            q = jnp.dot(xq, w[:, 0:D_MODEL],
                        preferred_element_type=jnp.float32) + b_qkv[:, 0:D_MODEL]
            kv = jnp.dot(xkv, w[:, D_MODEL:3 * D_MODEL],
                         preferred_element_type=jnp.float32) + b_qkv[:, D_MODEL:3 * D_MODEL]
            k = kv[:, 0:D_MODEL]
            v = kv[:, D_MODEL:2 * D_MODEL]

        Lq, Lk = xq.shape[0], xkv.shape[0]
        qh = split_heads(q, Lq)                               # (H, Lq, D_K)
        kh = split_heads(k, Lk)                               # (H, Lk, D_K)
        vh = split_heads(v, Lk)                               # (H, Lk, D_K)

        # all heads in one batched MXU einsum; single mask-bias broadcast
        s = jnp.einsum('hqd,hkd->hqk', qh, kh,
                       preferred_element_type=jnp.float32) * scale
        s = s + bias[None, :, :]
        m = jnp.max(s, axis=-1, keepdims=True)
        p = jnp.exp(s - m)
        p = p * pl.reciprocal(jnp.sum(p, axis=-1, keepdims=True), approx=True)
        ctx = jnp.einsum('hqk,hkd->hqd', p, vh,
                         preferred_element_type=jnp.float32)  # (H, Lq, D_K)
        ctx = jnp.transpose(ctx, (1, 0, 2)).reshape(Lq, D_MODEL)
        # single K=32 output projection (replaces 4 per-head K=8 dots)
        return jnp.dot(ctx, w[:, 3 * D_MODEL:4 * D_MODEL],
                       preferred_element_type=jnp.float32) + b_o

    g1, be1 = vec[3:4, 0:32], vec[3:4, 32:64]
    g2, be2 = vec[3:4, 64:96], vec[3:4, 96:128]
    g3, be3 = vec[4:5, 0:32], vec[4:5, 32:64]
    b_ff1, b_ff2 = vec[2:3, 0:64], vec[2:3, 64:96]

    # --- self-attention block (dropout1 = identity in eval mode) ---
    h = layer_norm(x + mha(x, x, tbias, 0, True), g1, be1)
    # --- cross-attention block (dropout2 = identity) ---
    h = layer_norm(h + mha(h, mem, sbias, 1, False), g2, be2)
    # --- feed-forward block (dropouts = identity) ---
    w1 = w_ff_ref[0:D_MODEL, :]                               # (32, 64)
    w2 = w_ff_ref[D_MODEL:D_MODEL + D_FF, 0:D_MODEL]          # (64, 32)
    hidden = jnp.maximum(
        jnp.dot(h, w1, preferred_element_type=jnp.float32) + b_ff1, 0.0)
    ff = jnp.dot(hidden, w2, preferred_element_type=jnp.float32) + b_ff2
    out_ref[0] = layer_norm(h + ff, g3, be3)


# ----------------------------- wrapper -----------------------------


def _pack_params(params):
    (swq, sbq, swk, sbk, swv, sbv, swo, sbo,
     cwq, cbq, cwk, cbk, cwv, cbv, cwo, cbo,
     fw1, fb1, fw2, fb2,
     g1, be1, g2, be2, g3, be3) = params

    # (2, 32, 128): per attention block, lane-dense [Wq | Wk | Wv | Wo]
    w_self = jnp.concatenate([swq, swk, swv, swo], axis=1)
    w_cross = jnp.concatenate([cwq, cwk, cwv, cwo], axis=1)
    w_attn = jnp.stack([w_self, w_cross], axis=0)

    # (96, 64): rows 0:32 = W_ff1 (32,64); rows 32:96 cols 0:32 = W_ff2 (64,32)
    w_ff = jnp.concatenate(
        [fw1,
         jnp.concatenate([fw2, jnp.zeros((D_FF, D_FF - D_MODEL), jnp.float32)], axis=1)],
        axis=0)

    # (5, 128): biases + LayerNorm params, one 128-wide row per group
    z32 = jnp.zeros((1, D_MODEL), jnp.float32)
    vec = jnp.stack([
        jnp.concatenate([sbq, sbk, sbv, sbo], axis=1)[0],
        jnp.concatenate([cbq, cbk, cbv, cbo], axis=1)[0],
        jnp.concatenate([fb1, fb2, z32], axis=1)[0],
        jnp.concatenate([g1, be1, g2, be2], axis=1)[0],
        jnp.concatenate([g3, be3, z32, z32], axis=1)[0],
    ], axis=0)
    return w_attn, w_ff, vec


@jax.jit
def decoder_layer(x, memory, src_mask, tgt_mask, params):
    B, S, D = x.shape
    SM = memory.shape[1]
    w_attn, w_ff, vec = _pack_params(params)
    masks = jnp.concatenate([tgt_mask, src_mask], axis=-1)    # (B, S, S + SM), one DMA

    flops = 2 * B * (S * D * 3 * D                    # self QKV
                     + S * D * D + SM * D * 2 * D     # cross Q + fused KV
                     + 2 * S * D * D                  # two output projections
                     + 2 * NUM_HEADS * S * S * D_K    # self scores + context
                     + 2 * NUM_HEADS * S * SM * D_K   # cross scores + context
                     + 2 * S * D * D_FF)              # FFN
    transcendentals = B * NUM_HEADS * S * (S + SM) + 3 * B * S
    bytes_accessed = 4 * (x.size + memory.size + masks.size + w_attn.size
                          + w_ff.size + vec.size + x.size)

    grid_spec = pltpu.PrefetchScalarGridSpec(
        num_scalar_prefetch=0,
        grid=(B,),
        in_specs=[
            pl.BlockSpec((1, S, D), lambda b: (b, 0, 0)),         # x
            pl.BlockSpec((1, SM, D), lambda b: (b, 0, 0)),        # memory
            pl.BlockSpec((1, S, S + SM), lambda b: (b, 0, 0)),    # packed masks
            pl.BlockSpec(w_attn.shape, lambda b: (0, 0, 0)),      # attention weights
            pl.BlockSpec(w_ff.shape, lambda b: (0, 0)),           # FFN weights
            pl.BlockSpec(vec.shape, lambda b: (0, 0)),            # biases / LN params
        ],
        out_specs=pl.BlockSpec((1, S, D), lambda b: (b, 0, 0)),
    )
    return pl.pallas_call(
        decoder_layer_kernel,
        out_shape=jax.ShapeDtypeStruct((B, S, D), jnp.float32),
        grid_spec=grid_spec,
        compiler_params=pltpu.CompilerParams(dimension_semantics=("parallel",)),
        cost_estimate=pl.CostEstimate(flops=int(flops),
                                      transcendentals=int(transcendentals),
                                      bytes_accessed=int(bytes_accessed)),
    )(x, memory, masks, w_attn, w_ff, vec)


# ----------------------------- pure-JAX reference -----------------------------


def ref_decoder_layer(x, memory, src_mask, tgt_mask, params):
    (swq, sbq, swk, sbk, swv, sbv, swo, sbo,
     cwq, cbq, cwk, cbk, cwv, cbv, cwo, cbo,
     fw1, fb1, fw2, fb2,
     g1, be1, g2, be2, g3, be3) = params

    def mha(xq, xkv, mask, wq, bq, wk, bk, wv, bv, wo, bo):
        B, Sq, Dm = xq.shape
        Sk = xkv.shape[1]
        q = (xq @ wq + bq).reshape(B, Sq, NUM_HEADS, D_K).transpose(0, 2, 1, 3)
        k = (xkv @ wk + bk).reshape(B, Sk, NUM_HEADS, D_K).transpose(0, 2, 1, 3)
        v = (xkv @ wv + bv).reshape(B, Sk, NUM_HEADS, D_K).transpose(0, 2, 1, 3)
        s = jnp.einsum("bhqd,bhkd->bhqk", q, k) / math.sqrt(D_K)
        s = jnp.where(mask[:, None, :, :] == 0.0, -1e9, s)
        p = jax.nn.softmax(s, axis=-1)
        o = jnp.einsum("bhqk,bhkd->bhqd", p, v).transpose(0, 2, 1, 3).reshape(B, Sq, Dm)
        return o @ wo + bo

    def ln(z, g, b):
        mean = jnp.mean(z, -1, keepdims=True)
        c = z - mean
        std = jnp.sqrt(jnp.sum(c * c, -1, keepdims=True) / (z.shape[-1] - 1))
        return g * c / (std + EPS) + b

    x = ln(x + mha(x, x, tgt_mask, swq, sbq, swk, sbk, swv, sbv, swo, sbo), g1, be1)
    x = ln(x + mha(x, memory, src_mask, cwq, cbq, cwk, cbk, cwv, cbv, cwo, cbo), g2, be2)
    ff = jnp.maximum(x @ fw1 + fb1, 0.0) @ fw2 + fb2
    return ln(x + ff, g3, be3)


# ----------------------------- params -----------------------------


def init_params(key):
    def lin(k, din, dout):
        kw, kb = jax.random.split(k)
        w = jax.random.normal(kw, (din, dout), jnp.float32) * 0.05
        b = jax.random.normal(kb, (1, dout), jnp.float32) * 0.05
        return w, b

    keys = jax.random.split(key, 10)
    swq, sbq = lin(keys[0], D_MODEL, D_MODEL)
    swk, sbk = lin(keys[1], D_MODEL, D_MODEL)
    swv, sbv = lin(keys[2], D_MODEL, D_MODEL)
    swo, sbo = lin(keys[3], D_MODEL, D_MODEL)
    cwq, cbq = lin(keys[4], D_MODEL, D_MODEL)
    cwk, cbk = lin(keys[5], D_MODEL, D_MODEL)
    cwv, cbv = lin(keys[6], D_MODEL, D_MODEL)
    cwo, cbo = lin(keys[7], D_MODEL, D_MODEL)
    fw1, fb1 = lin(keys[8], D_MODEL, D_FF)
    fw2, fb2 = lin(keys[9], D_FF, D_MODEL)
    g1, be1 = jnp.ones((1, D_MODEL), jnp.float32), jnp.zeros((1, D_MODEL), jnp.float32)
    g2, be2 = jnp.ones((1, D_MODEL), jnp.float32), jnp.zeros((1, D_MODEL), jnp.float32)
    g3, be3 = jnp.ones((1, D_MODEL), jnp.float32), jnp.zeros((1, D_MODEL), jnp.float32)
    return (swq, sbq, swk, sbk, swv, sbv, swo, sbo,
            cwq, cbq, cwk, cbk, cwv, cbv, cwo, cbo,
            fw1, fb1, fw2, fb2,
            g1, be1, g2, be2, g3, be3)


# ----------------------------- main -----------------------------

if __name__ == "__main__":
    B, S, SM = 2, 8, 8
    key = jax.random.PRNGKey(0)
    kx, km, kp = jax.random.split(key, 3)

    x = jax.random.normal(kx, (B, S, D_MODEL), jnp.float32)
    memory = jax.random.normal(km, (B, SM, D_MODEL), jnp.float32)
    # causal target mask (lower triangular), full source mask — float {0,1}
    tgt_mask = jnp.broadcast_to(jnp.tril(jnp.ones((S, S), jnp.float32)), (B, S, S))
    src_mask = jnp.ones((B, S, SM), jnp.float32)

    params = init_params(kp)

    out = jax.block_until_ready(decoder_layer(x, memory, src_mask, tgt_mask, params))
    ref = ref_decoder_layer(x, memory, src_mask, tgt_mask, params)

    assert out.shape == (B, S, D_MODEL)
    # Tolerance covers the approximate softmax reciprocal (pl.reciprocal approx=True).
    assert np.allclose(np.asarray(out), np.asarray(ref), atol=5e-3, rtol=5e-3)

    print("KERNEL_OK")
</pallas_src>

<mosaic_0001>
module attributes {stable_mosaic.version = 11 : i64} {
  func.func @decoder_layer_kernel(%arg0: i32, %arg1: memref<1x8x32xf32, #tpu.memory_space<vmem>>, %arg2: memref<1x8x32xf32, #tpu.memory_space<vmem>>, %arg3: memref<1x8x16xf32, #tpu.memory_space<vmem>>, %arg4: memref<2x32x128xf32, #tpu.memory_space<vmem>>, %arg5: memref<96x64xf32, #tpu.memory_space<vmem>>, %arg6: memref<5x128xf32, #tpu.memory_space<vmem>>, %arg7: memref<1x8x32xf32, #tpu.memory_space<vmem>>) attributes {dimension_semantics = [#tpu.dimension_semantics<parallel>], iteration_bounds = array<i64: 2>, scalar_prefetch = 0 : i64, scratch_operands = 0 : i64, tpu.core_type = #tpu.core_type<tc>, window_params = [{transform_indices = @transform_0, window_bounds = array<i64: 1, 8, 32>}, {transform_indices = @transform_1, window_bounds = array<i64: 1, 8, 32>}, {transform_indices = @transform_2, window_bounds = array<i64: 1, 8, 16>}, {pipeline_mode = #tpu.pipeline_mode<synchronous>, transform_indices = @transform_3, window_bounds = array<i64: 2, 32, 128>}, {pipeline_mode = #tpu.pipeline_mode<synchronous>, transform_indices = @transform_4, window_bounds = array<i64: 96, 64>}, {pipeline_mode = #tpu.pipeline_mode<synchronous>, transform_indices = @transform_5, window_bounds = array<i64: 5, 128>}, {transform_indices = @transform_6, window_bounds = array<i64: 1, 8, 32>}]} {
    %c0 = arith.constant 0 : index
    %c0_0 = arith.constant 0 : index
    %c0_1 = arith.constant 0 : index
    %0 = vector.load %arg1[%c0, %c0_0, %c0_1] : memref<1x8x32xf32, #tpu.memory_space<vmem>>, vector<1x8x32xf32>
    %1 = vector.shape_cast %0 : vector<1x8x32xf32> to vector<8x32xf32>
    %c0_2 = arith.constant 0 : index
    %c0_3 = arith.constant 0 : index
    %c0_4 = arith.constant 0 : index
    %2 = vector.load %arg2[%c0_2, %c0_3, %c0_4] : memref<1x8x32xf32, #tpu.memory_space<vmem>>, vector<1x8x32xf32>
    %3 = vector.shape_cast %2 : vector<1x8x32xf32> to vector<8x32xf32>
    %c0_5 = arith.constant 0 : index
    %c0_6 = arith.constant 0 : index
    %c0_7 = arith.constant 0 : index
    %4 = vector.load %arg3[%c0_5, %c0_6, %c0_7] : memref<1x8x16xf32, #tpu.memory_space<vmem>>, vector<1x8x16xf32>
    %5 = vector.shape_cast %4 : vector<1x8x16xf32> to vector<8x16xf32>
    %6 = vector.extract_strided_slice %5 {offsets = [0, 0], sizes = [8, 8], strides = [1, 1]} : vector<8x16xf32> to vector<8x8xf32>
    %cst = arith.constant 1.000000e+00 : f32
    %7 = vector.broadcast %cst : f32 to vector<8x8xf32>
    %8 = arith.subf %6, %7 : vector<8x8xf32>
    %cst_8 = arith.constant 1.000000e+09 : f32
    %9 = vector.broadcast %cst_8 : f32 to vector<8x8xf32>
    %10 = arith.mulf %8, %9 : vector<8x8xf32>
    %11 = vector.extract_strided_slice %5 {offsets = [0, 8], sizes = [8, 8], strides = [1, 1]} : vector<8x16xf32> to vector<8x8xf32>
    %cst_9 = arith.constant 1.000000e+00 : f32
    %12 = vector.broadcast %cst_9 : f32 to vector<8x8xf32>
    %13 = arith.subf %11, %12 : vector<8x8xf32>
    %cst_10 = arith.constant 1.000000e+09 : f32
    %14 = vector.broadcast %cst_10 : f32 to vector<8x8xf32>
    %15 = arith.mulf %13, %14 : vector<8x8xf32>
    %c0_11 = arith.constant 0 : index
    %c0_12 = arith.constant 0 : index
    %16 = vector.load %arg6[%c0_11, %c0_12] : memref<5x128xf32, #tpu.memory_space<vmem>>, vector<5x128xf32>
    %17 = vector.extract_strided_slice %16 {offsets = [3, 0], sizes = [1, 32], strides = [1, 1]} : vector<5x128xf32> to vector<1x32xf32>
    %18 = vector.extract_strided_slice %16 {offsets = [3, 32], sizes = [1, 32], strides = [1, 1]} : vector<5x128xf32> to vector<1x32xf32>
    %19 = vector.extract_strided_slice %16 {offsets = [3, 64], sizes = [1, 32], strides = [1, 1]} : vector<5x128xf32> to vector<1x32xf32>
    %20 = vector.extract_strided_slice %16 {offsets = [3, 96], sizes = [1, 32], strides = [1, 1]} : vector<5x128xf32> to vector<1x32xf32>
    %21 = vector.extract_strided_slice %16 {offsets = [4, 0], sizes = [1, 32], strides = [1, 1]} : vector<5x128xf32> to vector<1x32xf32>
    %22 = vector.extract_strided_slice %16 {offsets = [4, 32], sizes = [1, 32], strides = [1, 1]} : vector<5x128xf32> to vector<1x32xf32>
    %23 = vector.extract_strided_slice %16 {offsets = [2, 0], sizes = [1, 64], strides = [1, 1]} : vector<5x128xf32> to vector<1x64xf32>
    %24 = vector.extract_strided_slice %16 {offsets = [2, 64], sizes = [1, 32], strides = [1, 1]} : vector<5x128xf32> to vector<1x32xf32>
    %c0_13 = arith.constant 0 : index
    %c0_14 = arith.constant 0 : index
    %c0_15 = arith.constant 0 : index
    %25 = vector.load %arg4[%c0_13, %c0_14, %c0_15] : memref<2x32x128xf32, #tpu.memory_space<vmem>>, vector<1x32x128xf32>
    %26 = vector.shape_cast %25 : vector<1x32x128xf32> to vector<32x128xf32>
    %27 = vector.extract_strided_slice %16 {offsets = [0, 0], sizes = [1, 96], strides = [1, 1]} : vector<5x128xf32> to vector<1x96xf32>
    %28 = vector.extract_strided_slice %16 {offsets = [0, 96], sizes = [1, 32], strides = [1, 1]} : vector<5x128xf32> to vector<1x32xf32>
    %29 = vector.extract_strided_slice %26 {offsets = [0, 0], sizes = [32, 96], strides = [1, 1]} : vector<32x128xf32> to vector<32x96xf32>
    %cst_16 = arith.constant dense<0.000000e+00> : vector<8x96xf32>
    %30 = tpu.matmul %1, %29, %cst_16 {dimension_numbers = #tpu.dot_dimension_numbers<[1], [0], [0], [1], [0, 0, 1, 1], [], []>} : vector<8x32xf32>, vector<32x96xf32>, vector<8x96xf32> -> vector<8x96xf32>
    %31 = vector.broadcast %27 : vector<1x96xf32> to vector<8x96xf32>
    %32 = arith.addf %30, %31 : vector<8x96xf32>
    %33 = vector.extract_strided_slice %32 {offsets = [0, 0], sizes = [8, 32], strides = [1, 1]} : vector<8x96xf32> to vector<8x32xf32>
    %34 = vector.extract_strided_slice %32 {offsets = [0, 32], sizes = [8, 32], strides = [1, 1]} : vector<8x96xf32> to vector<8x32xf32>
    %35 = vector.extract_strided_slice %32 {offsets = [0, 64], sizes = [8, 32], strides = [1, 1]} : vector<8x96xf32> to vector<8x32xf32>
    %36 = vector.shape_cast %33 : vector<8x32xf32> to vector<8x4x8xf32>
    %37 = tpu.transpose %36, [1, 0, 2] : vector<8x4x8xf32> -> vector<4x8x8xf32>
    %38 = vector.shape_cast %34 : vector<8x32xf32> to vector<8x4x8xf32>
    %39 = tpu.transpose %38, [1, 0, 2] : vector<8x4x8xf32> -> vector<4x8x8xf32>
    %40 = vector.shape_cast %35 : vector<8x32xf32> to vector<8x4x8xf32>
    %41 = tpu.transpose %40, [1, 0, 2] : vector<8x4x8xf32> -> vector<4x8x8xf32>
    "tpu.trace_start"() <{level = 10 : i32, message = "hqd,hkd->hqk"}> : () -> ()
    %cst_17 = arith.constant dense<0.000000e+00> : vector<4x8x8xf32>
    %42 = tpu.matmul %37, %39, %cst_17 {dimension_numbers = #tpu.dot_dimension_numbers<[2], [2], [1], [1], [0, 0, 0, 1, 1, 1], [0], [0]>} : vector<4x8x8xf32>, vector<4x8x8xf32>, vector<4x8x8xf32> -> vector<4x8x8xf32>
    "tpu.trace_stop"() : () -> ()
    %cst_18 = arith.constant 0.353553385 : f32
    %43 = vector.broadcast %cst_18 : f32 to vector<4x8x8xf32>
    %44 = arith.mulf %42, %43 : vector<4x8x8xf32>
    %45 = vector.shape_cast %10 : vector<8x8xf32> to vector<1x8x8xf32>
    %46 = vector.broadcast %45 : vector<1x8x8xf32> to vector<4x8x8xf32>
    %47 = arith.addf %44, %46 : vector<4x8x8xf32>
    %cst_19 = arith.constant dense<0xFF800000> : vector<4x8xf32>
    %48 = vector.multi_reduction <maximumf>, %47, %cst_19 [2] : vector<4x8x8xf32> to vector<4x8xf32>
    %49 = vector.shape_cast %48 : vector<4x8xf32> to vector<4x8x1xf32>
    %50 = vector.broadcast %49 : vector<4x8x1xf32> to vector<4x8x8xf32>
    %51 = arith.subf %47, %50 : vector<4x8x8xf32>
    %52 = math.exp %51 : vector<4x8x8xf32>
    %cst_20 = arith.constant dense<0.000000e+00> : vector<4x8xf32>
    %53 = vector.multi_reduction <add>, %52, %cst_20 [2] : vector<4x8x8xf32> to vector<4x8xf32>
    %54 = vector.shape_cast %53 : vector<4x8xf32> to vector<4x8x1xf32>
    %55 = tpu.reciprocal %54 {approx = true} : vector<4x8x1xf32> -> vector<4x8x1xf32>
    %56 = vector.broadcast %55 : vector<4x8x1xf32> to vector<4x8x8xf32>
    %57 = arith.mulf %52, %56 : vector<4x8x8xf32>
    "tpu.trace_start"() <{level = 10 : i32, message = "hqk,hkd->hqd"}> : () -> ()
    %cst_21 = arith.constant dense<0.000000e+00> : vector<4x8x8xf32>
    %58 = tpu.matmul %57, %41, %cst_21 {dimension_numbers = #tpu.dot_dimension_numbers<[2], [1], [1], [2], [0, 0, 0, 1, 1, 2], [0], [0]>} : vector<4x8x8xf32>, vector<4x8x8xf32>, vector<4x8x8xf32> -> vector<4x8x8xf32>
    "tpu.trace_stop"() : () -> ()
    %59 = tpu.transpose %58, [1, 0, 2] : vector<4x8x8xf32> -> vector<8x4x8xf32>
    %60 = vector.shape_cast %59 : vector<8x4x8xf32> to vector<8x32xf32>
    %61 = vector.extract_strided_slice %26 {offsets = [0, 96], sizes = [32, 32], strides = [1, 1]} : vector<32x128xf32> to vector<32x32xf32>
    %cst_22 = arith.constant dense<0.000000e+00> : vector<8x32xf32>
    %62 = tpu.matmul %60, %61, %cst_22 {dimension_numbers = #tpu.dot_dimension_numbers<[1], [0], [0], [1], [0, 0, 1, 1], [], []>} : vector<8x32xf32>, vector<32x32xf32>, vector<8x32xf32> -> vector<8x32xf32>
    %63 = vector.broadcast %28 : vector<1x32xf32> to vector<8x32xf32>
    %64 = arith.addf %62, %63 : vector<8x32xf32>
    %65 = arith.addf %1, %64 : vector<8x32xf32>
    %cst_23 = arith.constant dense<0.000000e+00> : vector<8xf32>
    %66 = vector.multi_reduction <add>, %65, %cst_23 [1] : vector<8x32xf32> to vector<8xf32>
    %67 = vector.shape_cast %66 : vector<8xf32> to vector<8x1xf32>
    %cst_24 = arith.constant 3.200000e+01 : f32
    %68 = vector.broadcast %cst_24 : f32 to vector<8x1xf32>
    %69 = arith.divf %67, %68 : vector<8x1xf32>
    %70 = vector.broadcast %69 : vector<8x1xf32> to vector<8x32xf32>
    %71 = arith.subf %65, %70 : vector<8x32xf32>
    %72 = arith.mulf %71, %71 : vector<8x32xf32>
    %cst_25 = arith.constant dense<0.000000e+00> : vector<8xf32>
    %73 = vector.multi_reduction <add>, %72, %cst_25 [1] : vector<8x32xf32> to vector<8xf32>
    %74 = vector.shape_cast %73 : vector<8xf32> to vector<8x1xf32>
    %cst_26 = arith.constant 0.0322580636 : f32
    %75 = vector.broadcast %cst_26 : f32 to vector<8x1xf32>
    %76 = arith.mulf %74, %75 : vector<8x1xf32>
    %77 = math.sqrt %76 : vector<8x1xf32>
    %cst_27 = arith.constant 9.99999997E-7 : f32
    %78 = vector.broadcast %cst_27 : f32 to vector<8x1xf32>
    %79 = arith.addf %77, %78 : vector<8x1xf32>
    %80 = tpu.reciprocal %79 : vector<8x1xf32> -> vector<8x1xf32>
    %81 = vector.broadcast %80 : vector<8x1xf32> to vector<8x32xf32>
    %82 = arith.mulf %71, %81 : vector<8x32xf32>
    %83 = vector.broadcast %17 : vector<1x32xf32> to vector<8x32xf32>
    %84 = arith.mulf %83, %82 : vector<8x32xf32>
    %85 = vector.broadcast %18 : vector<1x32xf32> to vector<8x32xf32>
    %86 = arith.addf %84, %85 : vector<8x32xf32>
    %c1 = arith.constant 1 : index
    %c0_28 = arith.constant 0 : index
    %c0_29 = arith.constant 0 : index
    %87 = vector.load %arg4[%c1, %c0_28, %c0_29] : memref<2x32x128xf32, #tpu.memory_space<vmem>>, vector<1x32x128xf32>
    %88 = vector.shape_cast %87 : vector<1x32x128xf32> to vector<32x128xf32>
    %89 = vector.extract_strided_slice %16 {offsets = [1, 0], sizes = [1, 96], strides = [1, 1]} : vector<5x128xf32> to vector<1x96xf32>
    %90 = vector.extract_strided_slice %16 {offsets = [1, 96], sizes = [1, 32], strides = [1, 1]} : vector<5x128xf32> to vector<1x32xf32>
    %91 = vector.extract_strided_slice %88 {offsets = [0, 0], sizes = [32, 32], strides = [1, 1]} : vector<32x128xf32> to vector<32x32xf32>
    %cst_30 = arith.constant dense<0.000000e+00> : vector<8x32xf32>
    %92 = tpu.matmul %86, %91, %cst_30 {dimension_numbers = #tpu.dot_dimension_numbers<[1], [0], [0], [1], [0, 0, 1, 1], [], []>} : vector<8x32xf32>, vector<32x32xf32>, vector<8x32xf32> -> vector<8x32xf32>
    %93 = vector.extract_strided_slice %89 {offsets = [0, 0], sizes = [1, 32], strides = [1, 1]} : vector<1x96xf32> to vector<1x32xf32>
    %94 = vector.broadcast %93 : vector<1x32xf32> to vector<8x32xf32>
    %95 = arith.addf %92, %94 : vector<8x32xf32>
    %96 = vector.extract_strided_slice %88 {offsets = [0, 32], sizes = [32, 64], strides = [1, 1]} : vector<32x128xf32> to vector<32x64xf32>
    %cst_31 = arith.constant dense<0.000000e+00> : vector<8x64xf32>
    %97 = tpu.matmul %3, %96, %cst_31 {dimension_numbers = #tpu.dot_dimension_numbers<[1], [0], [0], [1], [0, 0, 1, 1], [], []>} : vector<8x32xf32>, vector<32x64xf32>, vector<8x64xf32> -> vector<8x64xf32>
    %98 = vector.extract_strided_slice %89 {offsets = [0, 32], sizes = [1, 64], strides = [1, 1]} : vector<1x96xf32> to vector<1x64xf32>
    %99 = vector.broadcast %98 : vector<1x64xf32> to vector<8x64xf32>
    %100 = arith.addf %97, %99 : vector<8x64xf32>
    %101 = vector.extract_strided_slice %100 {offsets = [0, 0], sizes = [8, 32], strides = [1, 1]} : vector<8x64xf32> to vector<8x32xf32>
    %102 = vector.extract_strided_slice %100 {offsets = [0, 32], sizes = [8, 32], strides = [1, 1]} : vector<8x64xf32> to vector<8x32xf32>
    %103 = vector.shape_cast %95 : vector<8x32xf32> to vector<8x4x8xf32>
    %104 = tpu.transpose %103, [1, 0, 2] : vector<8x4x8xf32> -> vector<4x8x8xf32>
    %105 = vector.shape_cast %101 : vector<8x32xf32> to vector<8x4x8xf32>
    %106 = tpu.transpose %105, [1, 0, 2] : vector<8x4x8xf32> -> vector<4x8x8xf32>
    %107 = vector.shape_cast %102 : vector<8x32xf32> to vector<8x4x8xf32>
    %108 = tpu.transpose %107, [1, 0, 2] : vector<8x4x8xf32> -> vector<4x8x8xf32>
    "tpu.trace_start"() <{level = 10 : i32, message = "hqd,hkd->hqk"}> : () -> ()
    %cst_32 = arith.constant dense<0.000000e+00> : vector<4x8x8xf32>
    %109 = tpu.matmul %104, %106, %cst_32 {dimension_numbers = #tpu.dot_dimension_numbers<[2], [2], [1], [1], [0, 0, 0, 1, 1, 1], [0], [0]>} : vector<4x8x8xf32>, vector<4x8x8xf32>, vector<4x8x8xf32> -> vector<4x8x8xf32>
    "tpu.trace_stop"() : () -> ()
    %cst_33 = arith.constant 0.353553385 : f32
    %110 = vector.broadcast %cst_33 : f32 to vector<4x8x8xf32>
    %111 = arith.mulf %109, %110 : vector<4x8x8xf32>
    %112 = vector.shape_cast %15 : vector<8x8xf32> to vector<1x8x8xf32>
    %113 = vector.broadcast %112 : vector<1x8x8xf32> to vector<4x8x8xf32>
    %114 = arith.addf %111, %113 : vector<4x8x8xf32>
    %cst_34 = arith.constant dense<0xFF800000> : vector<4x8xf32>
    %115 = vector.multi_reduction <maximumf>, %114, %cst_34 [2] : vector<4x8x8xf32> to vector<4x8xf32>
    %116 = vector.shape_cast %115 : vector<4x8xf32> to vector<4x8x1xf32>
    %117 = vector.broadcast %116 : vector<4x8x1xf32> to vector<4x8x8xf32>
    %118 = arith.subf %114, %117 : vector<4x8x8xf32>
    %119 = math.exp %118 : vector<4x8x8xf32>
    %cst_35 = arith.constant dense<0.000000e+00> : vector<4x8xf32>
    %120 = vector.multi_reduction <add>, %119, %cst_35 [2] : vector<4x8x8xf32> to vector<4x8xf32>
    %121 = vector.shape_cast %120 : vector<4x8xf32> to vector<4x8x1xf32>
    %122 = tpu.reciprocal %121 {approx = true} : vector<4x8x1xf32> -> vector<4x8x1xf32>
    %123 = vector.broadcast %122 : vector<4x8x1xf32> to vector<4x8x8xf32>
    %124 = arith.mulf %119, %123 : vector<4x8x8xf32>
    "tpu.trace_start"() <{level = 10 : i32, message = "hqk,hkd->hqd"}> : () -> ()
    %cst_36 = arith.constant dense<0.000000e+00> : vector<4x8x8xf32>
    %125 = tpu.matmul %124, %108, %cst_36 {dimension_numbers = #tpu.dot_dimension_numbers<[2], [1], [1], [2], [0, 0, 0, 1, 1, 2], [0], [0]>} : vector<4x8x8xf32>, vector<4x8x8xf32>, vector<4x8x8xf32> -> vector<4x8x8xf32>
    "tpu.trace_stop"() : () -> ()
    %126 = tpu.transpose %125, [1, 0, 2] : vector<4x8x8xf32> -> vector<8x4x8xf32>
    %127 = vector.shape_cast %126 : vector<8x4x8xf32> to vector<8x32xf32>
    %128 = vector.extract_strided_slice %88 {offsets = [0, 96], sizes = [32, 32], strides = [1, 1]} : vector<32x128xf32> to vector<32x32xf32>
    %cst_37 = arith.constant dense<0.000000e+00> : vector<8x32xf32>
    %129 = tpu.matmul %127, %128, %cst_37 {dimension_numbers = #tpu.dot_dimension_numbers<[1], [0], [0], [1], [0, 0, 1, 1], [], []>} : vector<8x32xf32>, vector<32x32xf32>, vector<8x32xf32> -> vector<8x32xf32>
    %130 = vector.broadcast %90 : vector<1x32xf32> to vector<8x32xf32>
    %131 = arith.addf %129, %130 : vector<8x32xf32>
    %132 = arith.addf %86, %131 : vector<8x32xf32>
    %cst_38 = arith.constant dense<0.000000e+00> : vector<8xf32>
    %133 = vector.multi_reduction <add>, %132, %cst_38 [1] : vector<8x32xf32> to vector<8xf32>
    %134 = vector.shape_cast %133 : vector<8xf32> to vector<8x1xf32>
    %cst_39 = arith.constant 3.200000e+01 : f32
    %135 = vector.broadcast %cst_39 : f32 to vector<8x1xf32>
    %136 = arith.divf %134, %135 : vector<8x1xf32>
    %137 = vector.broadcast %136 : vector<8x1xf32> to vector<8x32xf32>
    %138 = arith.subf %132, %137 : vector<8x32xf32>
    %139 = arith.mulf %138, %138 : vector<8x32xf32>
    %cst_40 = arith.constant dense<0.000000e+00> : vector<8xf32>
    %140 = vector.multi_reduction <add>, %139, %cst_40 [1] : vector<8x32xf32> to vector<8xf32>
    %141 = vector.shape_cast %140 : vector<8xf32> to vector<8x1xf32>
    %cst_41 = arith.constant 0.0322580636 : f32
    %142 = vector.broadcast %cst_41 : f32 to vector<8x1xf32>
    %143 = arith.mulf %141, %142 : vector<8x1xf32>
    %144 = math.sqrt %143 : vector<8x1xf32>
    %cst_42 = arith.constant 9.99999997E-7 : f32
    %145 = vector.broadcast %cst_42 : f32 to vector<8x1xf32>
    %146 = arith.addf %144, %145 : vector<8x1xf32>
    %147 = tpu.reciprocal %146 : vector<8x1xf32> -> vector<8x1xf32>
    %148 = vector.broadcast %147 : vector<8x1xf32> to vector<8x32xf32>
    %149 = arith.mulf %138, %148 : vector<8x32xf32>
    %150 = vector.broadcast %19 : vector<1x32xf32> to vector<8x32xf32>
    %151 = arith.mulf %150, %149 : vector<8x32xf32>
    %152 = vector.broadcast %20 : vector<1x32xf32> to vector<8x32xf32>
    %153 = arith.addf %151, %152 : vector<8x32xf32>
    %c0_43 = arith.constant 0 : index
    %c0_44 = arith.constant 0 : index
    %154 = vector.load %arg5[%c0_43, %c0_44] : memref<96x64xf32, #tpu.memory_space<vmem>>, vector<32x64xf32>
    %c32 = arith.constant 32 : index
    %c0_45 = arith.constant 0 : index
    %155 = vector.load %arg5[%c32, %c0_45] : memref<96x64xf32, #tpu.memory_space<vmem>>, vector<64x32xf32>
    %cst_46 = arith.constant dense<0.000000e+00> : vector<8x64xf32>
    %156 = tpu.matmul %153, %154, %cst_46 {dimension_numbers = #tpu.dot_dimension_numbers<[1], [0], [0], [1], [0, 0, 1, 1], [], []>} : vector<8x32xf32>, vector<32x64xf32>, vector<8x64xf32> -> vector<8x64xf32>
    %157 = vector.broadcast %23 : vector<1x64xf32> to vector<8x64xf32>
    %158 = arith.addf %156, %157 : vector<8x64xf32>
    %cst_47 = arith.constant 0.000000e+00 : f32
    %159 = vector.broadcast %cst_47 : f32 to vector<8x64xf32>
    %160 = arith.maximumf %158, %159 : vector<8x64xf32>
    %cst_48 = arith.constant dense<0.000000e+00> : vector<8x32xf32>
    %161 = tpu.matmul %160, %155, %cst_48 {dimension_numbers = #tpu.dot_dimension_numbers<[1], [0], [0], [1], [0, 0, 1, 1], [], []>} : vector<8x64xf32>, vector<64x32xf32>, vector<8x32xf32> -> vector<8x32xf32>
    %162 = vector.broadcast %24 : vector<1x32xf32> to vector<8x32xf32>
    %163 = arith.addf %161, %162 : vector<8x32xf32>
    %164 = arith.addf %153, %163 : vector<8x32xf32>
    %cst_49 = arith.constant dense<0.000000e+00> : vector<8xf32>
    %165 = vector.multi_reduction <add>, %164, %cst_49 [1] : vector<8x32xf32> to vector<8xf32>
    %166 = vector.shape_cast %165 : vector<8xf32> to vector<8x1xf32>
    %cst_50 = arith.constant 3.200000e+01 : f32
    %167 = vector.broadcast %cst_50 : f32 to vector<8x1xf32>
    %168 = arith.divf %166, %167 : vector<8x1xf32>
    %169 = vector.broadcast %168 : vector<8x1xf32> to vector<8x32xf32>
    %170 = arith.subf %164, %169 : vector<8x32xf32>
    %171 = arith.mulf %170, %170 : vector<8x32xf32>
    %cst_51 = arith.constant dense<0.000000e+00> : vector<8xf32>
    %172 = vector.multi_reduction <add>, %171, %cst_51 [1] : vector<8x32xf32> to vector<8xf32>
    %173 = vector.shape_cast %172 : vector<8xf32> to vector<8x1xf32>
    %cst_52 = arith.constant 0.0322580636 : f32
    %174 = vector.broadcast %cst_52 : f32 to vector<8x1xf32>
    %175 = arith.mulf %173, %174 : vector<8x1xf32>
    %176 = math.sqrt %175 : vector<8x1xf32>
    %cst_53 = arith.constant 9.99999997E-7 : f32
    %177 = vector.broadcast %cst_53 : f32 to vector<8x1xf32>
    %178 = arith.addf %176, %177 : vector<8x1xf32>
    %179 = tpu.reciprocal %178 : vector<8x1xf32> -> vector<8x1xf32>
    %180 = vector.broadcast %179 : vector<8x1xf32> to vector<8x32xf32>
    %181 = arith.mulf %170, %180 : vector<8x32xf32>
    %182 = vector.broadcast %21 : vector<1x32xf32> to vector<8x32xf32>
    %183 = arith.mulf %182, %181 : vector<8x32xf32>
    %184 = vector.broadcast %22 : vector<1x32xf32> to vector<8x32xf32>
    %185 = arith.addf %183, %184 : vector<8x32xf32>
    %c0_54 = arith.constant 0 : index
    %c0_55 = arith.constant 0 : index
    %c0_56 = arith.constant 0 : index
    %186 = vector.load %arg7[%c0_54, %c0_55, %c0_56] : memref<1x8x32xf32, #tpu.memory_space<vmem>>, vector<1x8x32xf32>
    %187 = vector.shape_cast %186 : vector<1x8x32xf32> to vector<8x32xf32>
    %188 = vector.shape_cast %185 : vector<8x32xf32> to vector<1x8x32xf32>
    tpu.vector_store %arg7[%c0_54, %c0_55, %c0_56], %188 {strides = array<i32>} : memref<1x8x32xf32, #tpu.memory_space<vmem>>, vector<1x8x32xf32>,
    return
  }
  func.func @transform_0(%arg0: i32) -> (i32, i32, i32) {
    %c0_i32 = arith.constant 0 : i32
    %c0_i32_0 = arith.constant 0 : i32
    %c0_i32_1 = arith.constant 0 : i32
    return %arg0, %c0_i32, %c0_i32_0 : i32, i32, i32
  }
  func.func @transform_1(%arg0: i32) -> (i32, i32, i32) {
    %c0_i32 = arith.constant 0 : i32
    %c0_i32_0 = arith.constant 0 : i32
    %c0_i32_1 = arith.constant 0 : i32
    return %arg0, %c0_i32, %c0_i32_0 : i32, i32, i32
  }
  func.func @transform_2(%arg0: i32) -> (i32, i32, i32) {
    %c0_i32 = arith.constant 0 : i32
    %c0_i32_0 = arith.constant 0 : i32
    %c0_i32_1 = arith.constant 0 : i32
    return %arg0, %c0_i32, %c0_i32_0 : i32, i32, i32
  }
  func.func @transform_3(%arg0: i32) -> (i32, i32, i32) {
    %c0_i32 = arith.constant 0 : i32
    %c0_i32_0 = arith.constant 0 : i32
    %c0_i32_1 = arith.constant 0 : i32
    %c0_i32_2 = arith.constant 0 : i32
    return %c0_i32, %c0_i32_0, %c0_i32_1 : i32, i32, i32
  }
  func.func @transform_4(%arg0: i32) -> (i32, i32) {
    %c0_i32 = arith.constant 0 : i32
    %c0_i32_0 = arith.constant 0 : i32
    %c0_i32_1 = arith.constant 0 : i32
    return %c0_i32, %c0_i32_0 : i32, i32
  }
  func.func @transform_5(%arg0: i32) -> (i32, i32) {
    %c0_i32 = arith.constant 0 : i32
    %c0_i32_0 = arith.constant 0 : i32
    %c0_i32_1 = arith.constant 0 : i32
    return %c0_i32, %c0_i32_0 : i32, i32
  }
  func.func @transform_6(%arg0: i32) -> (i32, i32, i32) {
    %c0_i32 = arith.constant 0 : i32
    %c0_i32_0 = arith.constant 0 : i32
    %c0_i32_1 = arith.constant 0 : i32
    return %arg0, %c0_i32, %c0_i32_0 : i32, i32, i32
  }
}

</mosaic_0001>

<llo_original>
// kernel: decoder_layer.1
$region0: #{decoder_layer.1}
  #allocation0 [shape = 'u32[]', space=smem, size = 0x4, offset = 0x4, fixed_abs, tag = 'smem constant byte address 0x4 - core index']
  #allocation1 [shape = 'u32[144,128]{1,0:T(1,128)}', space=vmem, size = 0x12000, scoped, tag = 'internal scratch']
  %s0 = inlined_call_operand.vmem [shape: f32[2,8,32], index: 0, kind: input, shape index: {}]
  %s1 = inlined_call_operand.vmem [shape: f32[2,8,32], index: 1, kind: input, shape index: {}]
  %s2 = inlined_call_operand.vmem [shape: f32[2,8,16], index: 2, kind: input, shape index: {}]
  %s3 = inlined_call_operand.vmem [shape: f32[2,32,128], index: 3, kind: input, shape index: {}]
  %s4 = inlined_call_operand.vmem [shape: f32[96,64], index: 4, kind: input, shape index: {}]
  %s5 = inlined_call_operand.vmem [shape: f32[5,128], index: 5, kind: input, shape index: {}]
  %s6 = inlined_call_operand.hbm [shape: f32[2,8,32], index: 6, kind: output, shape index: {}]
  %s7 = sld [smem:[#allocation0]]
  $region57: #{decoder_layer.1} parent=0
    _
  %s9 = ssub.s32 1, %s7
  %s10 = scalar_select 0, %s9, %s7
  $region1: #{decoder_layer.1} parent=0
    #allocation2 [shape = 'u8[8192]{0}', space=vmem, size = 0x2000, scoped, tag = 'output window, operand 0']
    #allocation3 [shape = 's32[2]{0}', space=sflag, size = 0x8, scoped, tag = 'scoped memory for decoder_layer.1']
    %11 = vsyncpa [#allocation3], 0
    %s12 = scalar_lea.sflag [#allocation3], 1
    %13 = vsyncpa %s12, 0
    loop: start=0, step=1, limit=4
    $region2: #{decoder_layer.1} parent=1 // loop_pre_header
      _
    $region3: #{decoder_layer.1} parent=1 // loop_header
      %s15 = sphi 0, %s19
      %p16 = scmp.ge.s32.totalorder %s15, 4
      %s25 = sphi 0, %s27
      %s28 = sphi 0, %s25
      %s29 = sphi 0, %s28
      %s45 = sphi 0, %s29
      %s51 = sphi 0, %s53
      %s54 = sphi 0, %s51
      %s55 = sphi 0, %s54
      %s71 = sphi 0, %s55
      %s77 = sphi 0, %s79
      %s80 = sphi 0, %s77
      %s81 = sphi 0, %s80
      %s97 = sphi 0, %s81
      %s101 = sphi 0, %s101
      %s103 = sphi 0, %s101
      %s104 = sphi 0, %s103
      %s118 = sphi 0, %s104
      %s122 = sphi 0, %s122
      %s124 = sphi 0, %s122
      %s125 = sphi 0, %s124
      %s139 = sphi 0, %s125
      %s143 = sphi 0, %s143
      %s145 = sphi 0, %s143
      %s146 = sphi 0, %s145
      %s160 = sphi 0, %s146
      %s166 = sphi 0, %s168
      %s169 = sphi 0, %s166
      %s170 = sphi 0, %s169
      %s186 = sphi 0, %s170
    $region4: #{decoder_layer.1} parent=1 // loop_header_branch
      %18 = sbr.rel (%p16) target = $region8
    $region5: #{decoder_layer.1} parent=1 // loop_body
      %s20 = ssub.s32 %s15, 1
      %s21 = ssub.s32 %s15, 2
      %s22 = sadd.s32 %s15, 1
      %s23 = ssub.s32 %s15, %s22
      %p24 = scmp.eq.s32.totalorder %s23, 0
      %s26 = sadd.s32 %s25, 1
      %s27 = scalar_select %p24, %s25, %s26
      %p30 = pneg %p24
      %p31 = scmp.eq.s32.totalorder %s15, 1
      %p32 = por %p30, %p31
      %p33 = scmp.ne.s32.totalorder %s25, %s28
      %p34 = scmp.eq.s32.totalorder %s15, 0
      %p35 = por %p33, %p34
      %p36 = scmp.ne.s32.totalorder %s25, %s28
      %p37 = scmp.eq.s32.totalorder %s20, 1
      %p38 = por %p36, %p37
      %p39 = scmp.ne.s32.totalorder %s28, %s29
      %p40 = scmp.eq.s32.totalorder %s20, 0
      %p41 = por %p39, %p40
      %p42 = scmp.ne.s32.totalorder %s28, %s29
      %p43 = scmp.eq.s32.totalorder %s21, 1
      %p44 = por %p42, %p43
      %p46 = scmp.ne.s32.totalorder %s29, %s45
      %p47 = scmp.eq.s32.totalorder %s21, 0
      %p48 = por %p46, %p47
      %s49 = ssub.s32 %s15, %s22
      %p50 = scmp.eq.s32.totalorder %s49, 0
      %s52 = sadd.s32 %s51, 1
      %s53 = scalar_select %p50, %s51, %s52
      %p56 = pneg %p50
      %p57 = scmp.eq.s32.totalorder %s15, 1
      %p58 = por %p56, %p57
      %p59 = scmp.ne.s32.totalorder %s51, %s54
      %p60 = scmp.eq.s32.totalorder %s15, 0
      %p61 = por %p59, %p60
      %p62 = scmp.ne.s32.totalorder %s51, %s54
      %p63 = scmp.eq.s32.totalorder %s20, 1
      %p64 = por %p62, %p63
      %p65 = scmp.ne.s32.totalorder %s54, %s55
      %p66 = scmp.eq.s32.totalorder %s20, 0
      %p67 = por %p65, %p66
      %p68 = scmp.ne.s32.totalorder %s54, %s55
      %p69 = scmp.eq.s32.totalorder %s21, 1
      %p70 = por %p68, %p69
      %p72 = scmp.ne.s32.totalorder %s55, %s71
      %p73 = scmp.eq.s32.totalorder %s21, 0
      %p74 = por %p72, %p73
      %s75 = ssub.s32 %s15, %s22
      %p76 = scmp.eq.s32.totalorder %s75, 0
      %s78 = sadd.s32 %s77, 1
      %s79 = scalar_select %p76, %s77, %s78
      %p82 = pneg %p76
      %p83 = scmp.eq.s32.totalorder %s15, 1
      %p84 = por %p82, %p83
      %p85 = scmp.ne.s32.totalorder %s77, %s80
      %p86 = scmp.eq.s32.totalorder %s15, 0
      %p87 = por %p85, %p86
      %p88 = scmp.ne.s32.totalorder %s77, %s80
      %p89 = scmp.eq.s32.totalorder %s20, 1
      %p90 = por %p88, %p89
      %p91 = scmp.ne.s32.totalorder %s80, %s81
      %p92 = scmp.eq.s32.totalorder %s20, 0
      %p93 = por %p91, %p92
      %p94 = scmp.ne.s32.totalorder %s80, %s81
      %p95 = scmp.eq.s32.totalorder %s21, 1
      %p96 = por %p94, %p95
      %p98 = scmp.ne.s32.totalorder %s81, %s97
      %p99 = scmp.eq.s32.totalorder %s21, 0
      %p100 = por %p98, %p99
      %s102 = sadd.s32 %s101, 1
      %p105 = scmp.eq.s32.totalorder %s15, 1
      %p106 = scmp.ne.s32.totalorder %s101, %s103
      %p107 = scmp.eq.s32.totalorder %s15, 0
      %p108 = por %p106, %p107
      %p109 = scmp.ne.s32.totalorder %s101, %s103
      %p110 = scmp.eq.s32.totalorder %s20, 1
      %p111 = por %p109, %p110
      %p112 = scmp.ne.s32.totalorder %s103, %s104
      %p113 = scmp.eq.s32.totalorder %s20, 0
      %p114 = por %p112, %p113
      %p115 = scmp.ne.s32.totalorder %s103, %s104
      %p116 = scmp.eq.s32.totalorder %s21, 1
      %p117 = por %p115, %p116
      %p119 = scmp.ne.s32.totalorder %s104, %s118
      %p120 = scmp.eq.s32.totalorder %s21, 0
      %p121 = por %p119, %p120
      %s123 = sadd.s32 %s122, 1
      %p126 = scmp.eq.s32.totalorder %s15, 1
      %p127 = scmp.ne.s32.totalorder %s122, %s124
      %p128 = scmp.eq.s32.totalorder %s15, 0
      %p129 = por %p127, %p128
      %p130 = scmp.ne.s32.totalorder %s122, %s124
      %p131 = scmp.eq.s32.totalorder %s20, 1
      %p132 = por %p130, %p131
      %p133 = scmp.ne.s32.totalorder %s124, %s125
      %p134 = scmp.eq.s32.totalorder %s20, 0
      %p135 = por %p133, %p134
      %p136 = scmp.ne.s32.totalorder %s124, %s125
      %p137 = scmp.eq.s32.totalorder %s21, 1
      %p138 = por %p136, %p137
      %p140 = scmp.ne.s32.totalorder %s125, %s139
      %p141 = scmp.eq.s32.totalorder %s21, 0
      %p142 = por %p140, %p141
      %s144 = sadd.s32 %s143, 1
      %p147 = scmp.eq.s32.totalorder %s15, 1
      %p148 = scmp.ne.s32.totalorder %s143, %s145
      %p149 = scmp.eq.s32.totalorder %s15, 0
      %p150 = por %p148, %p149
      %p151 = scmp.ne.s32.totalorder %s143, %s145
      %p152 = scmp.eq.s32.totalorder %s20, 1
      %p153 = por %p151, %p152
      %p154 = scmp.ne.s32.totalorder %s145, %s146
      %p155 = scmp.eq.s32.totalorder %s20, 0
      %p156 = por %p154, %p155
      %p157 = scmp.ne.s32.totalorder %s145, %s146
      %p158 = scmp.eq.s32.totalorder %s21, 1
      %p159 = por %p157, %p158
      %p161 = scmp.ne.s32.totalorder %s146, %s160
      %p162 = scmp.eq.s32.totalorder %s21, 0
      %p163 = por %p161, %p162
      %s164 = ssub.s32 %s15, %s22
      %p165 = scmp.eq.s32.totalorder %s164, 0
      %s167 = sadd.s32 %s166, 1
      %s168 = scalar_select %p165, %s166, %s167
      %p171 = pneg %p165
      %p172 = scmp.eq.s32.totalorder %s15, 1
      %p173 = por %p171, %p172
      %p174 = scmp.ne.s32.totalorder %s166, %s169
      %p175 = scmp.eq.s32.totalorder %s15, 0
      %p176 = por %p174, %p175
      %p177 = scmp.ne.s32.totalorder %s166, %s169
      %p178 = scmp.eq.s32.totalorder %s20, 1
      %p179 = por %p177, %p178
      %p180 = scmp.ne.s32.totalorder %s169, %s170
      %p181 = scmp.eq.s32.totalorder %s20, 0
      %p182 = por %p180, %p181
      %p183 = scmp.ne.s32.totalorder %s169, %s170
      %p184 = scmp.eq.s32.totalorder %s21, 1
      %p185 = por %p183, %p184
      %p187 = scmp.ne.s32.totalorder %s170, %s186
      %p188 = scmp.eq.s32.totalorder %s21, 0
      %p189 = por %p187, %p188
      %p190 = scmp.le.s32.totalorder 1, %s15
      %p191 = scmp.lt.s32.totalorder %s15, 3
      %p192 = pnand %p190, %p191
      %p193 = pneg %p192
      // Predicated region
      $region9: #{decoder_layer.1} parent=5 // pred_check
        _
      $region10: #{decoder_layer.1} parent=5 // pred_check_branch
        %195 = sbr.rel (%p192) target = $region12
      $region11: #{decoder_layer.1} parent=5 // pred_region
        %s196 = ssub.s32 %s15, 1
        // Predicated region
        $region13: #{decoder_layer.1} parent=11 // pred_check
          %p197 = pneg %p114
        $region14: #{decoder_layer.1} parent=11 // pred_check_branch
          %199 = sbr.rel (%p197) target = $region16
        $region15: #{decoder_layer.1} parent=11 // pred_region
          _
        $region16: #{decoder_layer.1} parent=11 // pred_fallthru
          _
        // Predicated region
        $region17: #{decoder_layer.1} parent=11 // pred_check
          %p200 = pneg %p135
        $region18: #{decoder_layer.1} parent=11 // pred_check_branch
          %202 = sbr.rel (%p200) target = $region20
        $region19: #{decoder_layer.1} parent=11 // pred_region
          _
        $region20: #{decoder_layer.1} parent=11 // pred_fallthru
          _
        // Predicated region
        $region21: #{decoder_layer.1} parent=11 // pred_check
          %p203 = pneg %p156
        $region22: #{decoder_layer.1} parent=11 // pred_check_branch
          %205 = sbr.rel (%p203) target = $region24
        $region23: #{decoder_layer.1} parent=11 // pred_region
          _
        $region24: #{decoder_layer.1} parent=11 // pred_fallthru
          _
      $region12: #{decoder_layer.1} parent=5 // pred_fallthru
        _
      %p206 = scmp.lt.s32.totalorder %s15, 2
      // Predicated region
      $region25: #{decoder_layer.1} parent=5 // pred_check
        %p207 = pneg %p206
      $region26: #{decoder_layer.1} parent=5 // pred_check_branch
        %209 = sbr.rel (%p207) target = $region28
      $region27: #{decoder_layer.1} parent=5 // pred_region
        // Predicated region
        $region29: #{decoder_layer.1} parent=27 // pred_check
          %p210 = pneg %p35
        $region30: #{decoder_layer.1} parent=27 // pred_check_branch
          %212 = sbr.rel (%p210) target = $region32
        $region31: #{decoder_layer.1} parent=27 // pred_region
          %p213 = scmp.lt.s32.totalorder %s15, 1
          %s214 = scalar_select %p213, %s15, 1
          %s215 = smul.addr %s214, 8
          %s216 = scalar_lea.vmem %s0, %s215
        $region32: #{decoder_layer.1} parent=27 // pred_fallthru
          _
        // Predicated region
        $region33: #{decoder_layer.1} parent=27 // pred_check
          %p217 = pneg %p61
        $region34: #{decoder_layer.1} parent=27 // pred_check_branch
          %219 = sbr.rel (%p217) target = $region36
        $region35: #{decoder_layer.1} parent=27 // pred_region
          %p220 = scmp.lt.s32.totalorder %s15, 1
          %s221 = scalar_select %p220, %s15, 1
          %s222 = smul.addr %s221, 8
          %s223 = scalar_lea.vmem %s1, %s222
        $region36: #{decoder_layer.1} parent=27 // pred_fallthru
          _
        // Predicated region
        $region37: #{decoder_layer.1} parent=27 // pred_check
          %p224 = pneg %p87
        $region38: #{decoder_layer.1} parent=27 // pred_check_branch
          %226 = sbr.rel (%p224) target = $region40
        $region39: #{decoder_layer.1} parent=27 // pred_region
          %p227 = scmp.lt.s32.totalorder %s15, 1
          %s228 = scalar_select %p227, %s15, 1
          %s229 = smul.addr %s228, 8
          %s230 = scalar_lea.vmem %s2, %s229
        $region40: #{decoder_layer.1} parent=27 // pred_fallthru
          _
      $region28: #{decoder_layer.1} parent=5 // pred_fallthru
        _
      %p231 = scmp.le.s32.totalorder 1, %s15
      %p232 = scmp.lt.s32.totalorder %s15, 3
      %p233 = pnand %p231, %p232
      %p234 = pneg %p233
      // Predicated region
      $region41: #{decoder_layer.1} parent=5 // pred_check
        _
      $region42: #{decoder_layer.1} parent=5 // pred_check_branch
        %236 = sbr.rel (%p233) target = $region44
      $region43: #{decoder_layer.1} parent=5 // pred_region
        %s237 = ssub.s32 %s15, 1
        %p238 = scmp.lt.s32.totalorder %s20, 1
        %s239 = scalar_select %p238, %s20, 1
        %s240 = smul.addr %s239, 8
        %s241 = scalar_lea.vmem %s0, %s240
        %p242 = pneg %p41
        %p243 = pneg %p38
        %p244 = scmp.lt.s32.totalorder %s20, 1
        %s245 = scalar_select %p244, %s20, 1
        %s246 = smul.addr %s245, 8
        %s247 = scalar_lea.vmem %s1, %s246
        %p248 = pneg %p67
        %p249 = pneg %p64
        %p250 = scmp.lt.s32.totalorder %s20, 1
        %s251 = scalar_select %p250, %s20, 1
        %s252 = smul.addr %s251, 8
        %s253 = scalar_lea.vmem %s2, %s252
        %p254 = pneg %p93
        %p255 = pneg %p90
        %p256 = pneg %p114
        %p257 = pneg %p111
        %p258 = pneg %p135
        %p259 = pneg %p132
        %p260 = pneg %p156
        %p261 = pneg %p153
        %p262 = pneg %p182
        %p263 = pneg %p179
        %s264 = sand.u32 %s169, 1
        %s265 = scalar_lea.sflag [#allocation3], %s264
        %s266 = sand.u32 %s169, 1
        %s267 = smul.addr %s266, 8
        %s268 = scalar_lea.vmem [#allocation2], %s267
        %p269 = scmp.lt.s32.totalorder %s20, 1
        %s270 = scalar_select %p269, %s20, 1
        %s271 = smul.addr %s270, 8
        %s272 = scalar_lea.vmem %s0, %s271
        %p273 = scmp.lt.s32.totalorder %s20, 1
        %s274 = scalar_select %p273, %s20, 1
        %s275 = smul.addr %s274, 8
        %s276 = scalar_lea.vmem %s1, %s275
        %p277 = scmp.lt.s32.totalorder %s20, 1
        %s278 = scalar_select %p277, %s20, 1
        %s279 = smul.addr %s278, 8
        %s280 = scalar_lea.vmem %s2, %s279
        %v281 = vld [vmem:[%s272] sm:$0xff]
        %v282 = vld [vmem:[%s276] sm:$0xff]
        %v283 = vld [vmem:[%s280] sm:$0xff]
        %v284 = vsub.f32 %v283, 1.0
        %v285 = vmul.f32 %v284, 1e+09
        %v286 = vld [vmem:[%s5] sm:$0x1f]
        %v287 = vld [vmem:[%s3] sm:$0xff]
        %v288 = vld [vmem:[%s3 + $0x8] sm:$0xff]
        %v289 = vld [vmem:[%s3 + $0x10] sm:$0xff]
        %v290 = vld [vmem:[%s3 + $0x18] sm:$0xff]
        %v291 = vlaneseq
        %v292 = vshrl.u32 %v291, 7
        %v293 = vsub.s32 0, %v292
        %v294 = vrot.slane %v286, %v293
        %vm295 = vcmask 261120
        %v297 = vsel %vm295, %v281, 0
        %299 = vmatprep.subr.mxu0 0.0
        %300 = vmatpush1.msra.mxu0 %v287
        %301 = vmatprep.subr.mxu0 0.0
        %302 = vmatpush1.msra.mxu0 %v288
        %303 = vmatprep.subr.mxu0 0.0
        %304 = vmatpush1.msra.mxu0 %v289
        %305 = vmatprep.subr.mxu0 0.0
        %306 = vmatpush1.msra.mxu0 %v290
        %307 = vmatprep.subr.mxu0 0.0
        %308 = vmatpush1.msra.mxu0 0.0
        %309 = vmatprep.subr.mxu0 0.0
        %310 = vmatpush1.msra.mxu0 0.0
        %311 = vmatprep.subr.mxu0 0.0
        %312 = vmatpush1.msra.mxu0 0.0
        %313 = vmatprep.subr.mxu0 0.0
        %314 = vmatpush1.msra.mxu0 0.0
        %315 = vmatprep.subr.mxu0 0.0
        %316 = vmatpush1.msra.mxu0 0.0
        %317 = vmatprep.subr.mxu0 0.0
        %318 = vmatpush1.msra.mxu0 0.0
        %319 = vmatprep.subr.mxu0 0.0
        %320 = vmatpush1.msra.mxu0 0.0
        %321 = vmatprep.subr.mxu0 0.0
        %322 = vmatpush1.msra.mxu0 0.0
        %323 = vmatprep.subr.mxu0 0.0
        %324 = vmatpush1.msra.mxu0 0.0
        %325 = vmatprep.subr.mxu0 0.0
        %326 = vmatpush1.msra.mxu0 0.0
        %327 = vmatprep.subr.mxu0 0.0
        %328 = vmatpush1.msra.mxu0 0.0
        %329 = vmatprep.subr.mxu0 0.0
        %330 = vmatpush1.msra.mxu0 0.0
        %331 = vmatprep.subr.mxu0 0.0
        %332 = vmatpush1.msra.mxu0 0.0
        %333 = vmatprep.subr.mxu0 0.0
        %334 = vmatpush1.msra.mxu0 0.0
        %335 = vmatprep.subr.mxu0 0.0
        %336 = vmatpush1.msra.mxu0 0.0
        %337 = vmatprep.subr.mxu0 0.0
        %338 = vmatpush1.msra.mxu0 0.0
        %339 = vmatprep.subr.mxu0 0.0
        %340 = vmatpush1.msra.mxu0 0.0
        %341 = vmatprep.subr.mxu0 0.0
        %342 = vmatpush1.msra.mxu0 0.0
        %343 = vmatprep.subr.mxu0 0.0
        %344 = vmatpush1.msra.mxu0 0.0
        %345 = vmatprep.subr.mxu0 0.0
        %346 = vmatpush1.msra.mxu0 0.0
        %347 = vmatprep.subr.mxu0 0.0
        %348 = vmatpush1.msra.mxu0 0.0
        %349 = vmatprep.subr.mxu0 0.0
        %350 = vmatpush1.msra.mxu0 0.0
        %351 = vmatprep.subr.mxu0 0.0
        %352 = vmatpush1.msra.mxu0 0.0
        %353 = vmatprep.subr.mxu0 0.0
        %354 = vmatpush1.msra.mxu0 0.0
        %355 = vmatprep.subr.mxu0 0.0
        %356 = vmatpush1.msra.mxu0 0.0
        %357 = vmatprep.subr.mxu0 0.0
        %358 = vmatpush1.msra.mxu0 0.0
        %359 = vmatprep.subr.mxu0 0.0
        %360 = vmatpush1.msra.mxu0 0.0
        %361 = vmatprep.subr.mxu0 0.0
        %362 = vmatpush1.msra.mxu0 0.0
        %363 = vmatprep.mubr.f32.mxu0 0.0
        %364 = vmatmul.mubr.f32.gmra.mrb[0].mxu0 %v297
        %v365 = vpop.f32.mrb[0].mxu0
        %v366 = vadd.f32 %v294, %v365
        %v367 = vpop.f32.mrb[0].mxu0
        %368 = vdwg.mxu0
        %370 = vrot.lane.b32.xlu0 %v366, 120
        %v371 = vpop.permute.xlu0 %370
        %373 = vrot.lane.b32.xlu0 %v366, 112
        %v374 = vpop.permute.xlu0 %373
        %376 = vrot.lane.b32.xlu0 %v366, 104
        %v377 = vpop.permute.xlu0 %376
        %v379 = vcombine.low %v366, %v374
        %v380 = vcombine.high %v366, %v374
        %v382 = vunpack.c.l.s4 1983009808
        %v383 = vunpack.c.0.s8 %v382
        %v384 = vlaneseq
        %v385 = vshrl.u32 %v384, 7
        %v386 = vsub.s32 %v383, %v385
        %v387 = vrot.slane %v379, %v386
        %v389 = vunpack.c.l.s4 1983009808
        %v390 = vunpack.c.0.s8 %v389
        %v391 = vlaneseq
        %v392 = vshrl.u32 %v391, 7
        %v393 = vsub.s32 %v390, %v392
        %v394 = vrot.slane %v380, %v393
        %v395 = vcombine.low %v371, %v377
        %v396 = vcombine.high %v371, %v377
        %v398 = vunpack.c.l.s4 1983009808
        %v399 = vunpack.c.0.s8 %v398
        %v400 = vlaneseq
        %v401 = vshrl.u32 %v400, 7
        %v402 = vsub.s32 %v399, %v401
        %v403 = vrot.slane %v395, %v402
        %v405 = vunpack.c.l.s4 1983009808
        %v406 = vunpack.c.0.s8 %v405
        %v407 = vlaneseq
        %v408 = vshrl.u32 %v407, 7
        %v409 = vsub.s32 %v406, %v408
        %v410 = vrot.slane %v396, %v409
        %v411 = vcombine.low %v387, %v403
        %v412 = vcombine.high %v387, %v403
        %v414 = vunpack.c.l.s4 1934713408
        %v415 = vunpack.c.0.s8 %v414
        %v416 = vlaneseq
        %v417 = vshrl.u32 %v416, 7
        %v418 = vsub.s32 %v415, %v417
        %v419 = vrot.slane %v411, %v418
        %v421 = vunpack.c.l.s4 1934713408
        %v422 = vunpack.c.0.s8 %v421
        %v423 = vlaneseq
        %v424 = vshrl.u32 %v423, 7
        %v425 = vsub.s32 %v422, %v424
        %v426 = vrot.slane %v412, %v425
        %v427 = vcombine.low %v394, %v410
        %v428 = vcombine.high %v394, %v410
        %v430 = vunpack.c.l.s4 1934713408
        %v431 = vunpack.c.0.s8 %v430
        %v432 = vlaneseq
        %v433 = vshrl.u32 %v432, 7
        %v434 = vsub.s32 %v431, %v433
        %v435 = vrot.slane %v427, %v434
        %v437 = vunpack.c.l.s4 1934713408
        %v438 = vunpack.c.0.s8 %v437
        %v439 = vlaneseq
        %v440 = vshrl.u32 %v439, 7
        %v441 = vsub.s32 %v438, %v440
        %v442 = vrot.slane %v428, %v441
        %v443 = vcombine.high %v419, 0.0
        %v444 = vcombine.high %v426, 0.0
        %v445 = vcombine.high %v435, 0.0
        %v446 = vcombine.high %v442, 0.0
        %v447 = vcombine.low %v419, %v426
        %v449 = vunpack.c.l.s4 1983009808
        %v450 = vunpack.c.0.s8 %v449
        %v451 = vlaneseq
        %v452 = vshrl.u32 %v451, 7
        %v453 = vsub.s32 %v450, %v452
        %v454 = vrot.slane %v447, %v453
        %v455 = vcombine.low %v443, %v444
        %v457 = vunpack.c.l.s4 1983009808
        %v458 = vunpack.c.0.s8 %v457
        %v459 = vlaneseq
        %v460 = vshrl.u32 %v459, 7
        %v461 = vsub.s32 %v458, %v460
        %v462 = vrot.slane %v455, %v461
        %v463 = vcombine.low %v435, %v442
        %v465 = vunpack.c.l.s4 1983009808
        %v466 = vunpack.c.0.s8 %v465
        %v467 = vlaneseq
        %v468 = vshrl.u32 %v467, 7
        %v469 = vsub.s32 %v466, %v468
        %v470 = vrot.slane %v463, %v469
        %v471 = vcombine.low %v445, %v446
        %v473 = vunpack.c.l.s4 1983009808
        %v474 = vunpack.c.0.s8 %v473
        %v475 = vlaneseq
        %v476 = vshrl.u32 %v475, 7
        %v477 = vsub.s32 %v474, %v476
        %v478 = vrot.slane %v471, %v477
        %v479 = vcombine.low %v454, %v462
        %v480 = vcombine.high %v454, %v462
        %v482 = vunpack.c.l.s4 1934713408
        %v483 = vunpack.c.0.s8 %v482
        %v484 = vlaneseq
        %v485 = vshrl.u32 %v484, 7
        %v486 = vsub.s32 %v483, %v485
        %v487 = vrot.slane %v479, %v486
        %v489 = vunpack.c.l.s4 1934713408
        %v490 = vunpack.c.0.s8 %v489
        %v491 = vlaneseq
        %v492 = vshrl.u32 %v491, 7
        %v493 = vsub.s32 %v490, %v492
        %v494 = vrot.slane %v480, %v493
        %v495 = vcombine.low %v470, %v478
        %v496 = vcombine.high %v470, %v478
        %v498 = vunpack.c.l.s4 1934713408
        %v499 = vunpack.c.0.s8 %v498
        %v500 = vlaneseq
        %v501 = vshrl.u32 %v500, 7
        %v502 = vsub.s32 %v499, %v501
        %v503 = vrot.slane %v495, %v502
        %v505 = vunpack.c.l.s4 1934713408
        %v506 = vunpack.c.0.s8 %v505
        %v507 = vlaneseq
        %v508 = vshrl.u32 %v507, 7
        %v509 = vsub.s32 %v506, %v508
        %v510 = vrot.slane %v496, %v509
        %v511 = vcombine.low %v487, %v503
        %v512 = vcombine.high %v487, %v503
        %v513 = vcombine.low %v494, %v510
        %v514 = vcombine.high %v494, %v510
        %515 = vrot.lane.b32.xlu0 %v366, 96
        %v516 = vpop.permute.xlu0 %515
        %517 = vrot.lane.b32.xlu0 %v371, 96
        %v518 = vpop.permute.xlu0 %517
        %519 = vrot.lane.b32.xlu0 %v374, 96
        %v520 = vpop.permute.xlu0 %519
        %521 = vrot.lane.b32.xlu0 %v377, 96
        %v522 = vpop.permute.xlu0 %521
        %v527 = vcombine.low %v516, %v520
        %v528 = vcombine.high %v516, %v520
        %v530 = vunpack.c.l.s4 1983009808
        %v531 = vunpack.c.0.s8 %v530
        %v532 = vlaneseq
        %v533 = vshrl.u32 %v532, 7
        %v534 = vsub.s32 %v531, %v533
        %v535 = vrot.slane %v527, %v534
        %v537 = vunpack.c.l.s4 1983009808
        %v538 = vunpack.c.0.s8 %v537
        %v539 = vlaneseq
        %v540 = vshrl.u32 %v539, 7
        %v541 = vsub.s32 %v538, %v540
        %v542 = vrot.slane %v528, %v541
        %v543 = vcombine.low %v518, %v522
        %v544 = vcombine.high %v518, %v522
        %v546 = vunpack.c.l.s4 1983009808
        %v547 = vunpack.c.0.s8 %v546
        %v548 = vlaneseq
        %v549 = vshrl.u32 %v548, 7
        %v550 = vsub.s32 %v547, %v549
        %v551 = vrot.slane %v543, %v550
        %v553 = vunpack.c.l.s4 1983009808
        %v554 = vunpack.c.0.s8 %v553
        %v555 = vlaneseq
        %v556 = vshrl.u32 %v555, 7
        %v557 = vsub.s32 %v554, %v556
        %v558 = vrot.slane %v544, %v557
        %v559 = vcombine.low %v535, %v551
        %v560 = vcombine.high %v535, %v551
        %v562 = vunpack.c.l.s4 1934713408
        %v563 = vunpack.c.0.s8 %v562
        %v564 = vlaneseq
        %v565 = vshrl.u32 %v564, 7
        %v566 = vsub.s32 %v563, %v565
        %v567 = vrot.slane %v559, %v566
        %v569 = vunpack.c.l.s4 1934713408
        %v570 = vunpack.c.0.s8 %v569
        %v571 = vlaneseq
        %v572 = vshrl.u32 %v571, 7
        %v573 = vsub.s32 %v570, %v572
        %v574 = vrot.slane %v560, %v573
        %v575 = vcombine.low %v542, %v558
        %v576 = vcombine.high %v542, %v558
        %v578 = vunpack.c.l.s4 1934713408
        %v579 = vunpack.c.0.s8 %v578
        %v580 = vlaneseq
        %v581 = vshrl.u32 %v580, 7
        %v582 = vsub.s32 %v579, %v581
        %v583 = vrot.slane %v575, %v582
        %v585 = vunpack.c.l.s4 1934713408
        %v586 = vunpack.c.0.s8 %v585
        %v587 = vlaneseq
        %v588 = vshrl.u32 %v587, 7
        %v589 = vsub.s32 %v586, %v588
        %v590 = vrot.slane %v576, %v589
        %v591 = vcombine.high %v567, 0.0
        %v592 = vcombine.high %v574, 0.0
        %v593 = vcombine.high %v583, 0.0
        %v594 = vcombine.high %v590, 0.0
        %v595 = vcombine.low %v567, %v574
        %v597 = vunpack.c.l.s4 1983009808
        %v598 = vunpack.c.0.s8 %v597
        %v599 = vlaneseq
        %v600 = vshrl.u32 %v599, 7
        %v601 = vsub.s32 %v598, %v600
        %v602 = vrot.slane %v595, %v601
        %v603 = vcombine.low %v591, %v592
        %v605 = vunpack.c.l.s4 1983009808
        %v606 = vunpack.c.0.s8 %v605
        %v607 = vlaneseq
        %v608 = vshrl.u32 %v607, 7
        %v609 = vsub.s32 %v606, %v608
        %v610 = vrot.slane %v603, %v609
        %v611 = vcombine.low %v583, %v590
        %v613 = vunpack.c.l.s4 1983009808
        %v614 = vunpack.c.0.s8 %v613
        %v615 = vlaneseq
        %v616 = vshrl.u32 %v615, 7
        %v617 = vsub.s32 %v614, %v616
        %v618 = vrot.slane %v611, %v617
        %v619 = vcombine.low %v593, %v594
        %v621 = vunpack.c.l.s4 1983009808
        %v622 = vunpack.c.0.s8 %v621
        %v623 = vlaneseq
        %v624 = vshrl.u32 %v623, 7
        %v625 = vsub.s32 %v622, %v624
        %v626 = vrot.slane %v619, %v625
        %v627 = vcombine.low %v602, %v610
        %v628 = vcombine.high %v602, %v610
        %v630 = vunpack.c.l.s4 1934713408
        %v631 = vunpack.c.0.s8 %v630
        %v632 = vlaneseq
        %v633 = vshrl.u32 %v632, 7
        %v634 = vsub.s32 %v631, %v633
        %v635 = vrot.slane %v627, %v634
        %v637 = vunpack.c.l.s4 1934713408
        %v638 = vunpack.c.0.s8 %v637
        %v639 = vlaneseq
        %v640 = vshrl.u32 %v639, 7
        %v641 = vsub.s32 %v638, %v640
        %v642 = vrot.slane %v628, %v641
        %v643 = vcombine.low %v618, %v626
        %v644 = vcombine.high %v618, %v626
        %v646 = vunpack.c.l.s4 1934713408
        %v647 = vunpack.c.0.s8 %v646
        %v648 = vlaneseq
        %v649 = vshrl.u32 %v648, 7
        %v650 = vsub.s32 %v647, %v649
        %v651 = vrot.slane %v643, %v650
        %v653 = vunpack.c.l.s4 1934713408
        %v654 = vunpack.c.0.s8 %v653
        %v655 = vlaneseq
        %v656 = vshrl.u32 %v655, 7
        %v657 = vsub.s32 %v654, %v656
        %v658 = vrot.slane %v644, %v657
        %v659 = vcombine.low %v635, %v651
        %v660 = vcombine.high %v635, %v651
        %v661 = vcombine.low %v642, %v658
        %v662 = vcombine.high %v642, %v658
        %663 = vrot.lane.b32.xlu0 %v366, 64
        %v664 = vpop.permute.xlu0 %663
        %665 = vrot.lane.b32.xlu0 %v371, 64
        %v666 = vpop.permute.xlu0 %665
        %667 = vrot.lane.b32.xlu0 %v374, 64
        %v668 = vpop.permute.xlu0 %667
        %669 = vrot.lane.b32.xlu0 %v377, 64
        %v670 = vpop.permute.xlu0 %669
        %v675 = vcombine.low %v664, %v668
        %v676 = vcombine.high %v664, %v668
        %v678 = vunpack.c.l.s4 1983009808
        %v679 = vunpack.c.0.s8 %v678
        %v680 = vlaneseq
        %v681 = vshrl.u32 %v680, 7
        %v682 = vsub.s32 %v679, %v681
        %v683 = vrot.slane %v675, %v682
        %v685 = vunpack.c.l.s4 1983009808
        %v686 = vunpack.c.0.s8 %v685
        %v687 = vlaneseq
        %v688 = vshrl.u32 %v687, 7
        %v689 = vsub.s32 %v686, %v688
        %v690 = vrot.slane %v676, %v689
        %v691 = vcombine.low %v666, %v670
        %v692 = vcombine.high %v666, %v670
        %v694 = vunpack.c.l.s4 1983009808
        %v695 = vunpack.c.0.s8 %v694
        %v696 = vlaneseq
        %v697 = vshrl.u32 %v696, 7
        %v698 = vsub.s32 %v695, %v697
        %v699 = vrot.slane %v691, %v698
        %v701 = vunpack.c.l.s4 1983009808
        %v702 = vunpack.c.0.s8 %v701
        %v703 = vlaneseq
        %v704 = vshrl.u32 %v703, 7
        %v705 = vsub.s32 %v702, %v704
        %v706 = vrot.slane %v692, %v705
        %v707 = vcombine.low %v683, %v699
        %v708 = vcombine.high %v683, %v699
        %v710 = vunpack.c.l.s4 1934713408
        %v711 = vunpack.c.0.s8 %v710
        %v712 = vlaneseq
        %v713 = vshrl.u32 %v712, 7
        %v714 = vsub.s32 %v711, %v713
        %v715 = vrot.slane %v707, %v714
        %v717 = vunpack.c.l.s4 1934713408
        %v718 = vunpack.c.0.s8 %v717
        %v719 = vlaneseq
        %v720 = vshrl.u32 %v719, 7
        %v721 = vsub.s32 %v718, %v720
        %v722 = vrot.slane %v708, %v721
        %v723 = vcombine.low %v690, %v706
        %v724 = vcombine.high %v690, %v706
        %v726 = vunpack.c.l.s4 1934713408
        %v727 = vunpack.c.0.s8 %v726
        %v728 = vlaneseq
        %v729 = vshrl.u32 %v728, 7
        %v730 = vsub.s32 %v727, %v729
        %v731 = vrot.slane %v723, %v730
        %v733 = vunpack.c.l.s4 1934713408
        %v734 = vunpack.c.0.s8 %v733
        %v735 = vlaneseq
        %v736 = vshrl.u32 %v735, 7
        %v737 = vsub.s32 %v734, %v736
        %v738 = vrot.slane %v724, %v737
        %v739 = vcombine.high %v715, 0.0
        %v740 = vcombine.high %v722, 0.0
        %v741 = vcombine.high %v731, 0.0
        %v742 = vcombine.high %v738, 0.0
        %v743 = vcombine.low %v715, %v722
        %v745 = vunpack.c.l.s4 1983009808
        %v746 = vunpack.c.0.s8 %v745
        %v747 = vlaneseq
        %v748 = vshrl.u32 %v747, 7
        %v749 = vsub.s32 %v746, %v748
        %v750 = vrot.slane %v743, %v749
        %v751 = vcombine.low %v739, %v740
        %v753 = vunpack.c.l.s4 1983009808
        %v754 = vunpack.c.0.s8 %v753
        %v755 = vlaneseq
        %v756 = vshrl.u32 %v755, 7
        %v757 = vsub.s32 %v754, %v756
        %v758 = vrot.slane %v751, %v757
        %v759 = vcombine.low %v731, %v738
        %v761 = vunpack.c.l.s4 1983009808
        %v762 = vunpack.c.0.s8 %v761
        %v763 = vlaneseq
        %v764 = vshrl.u32 %v763, 7
        %v765 = vsub.s32 %v762, %v764
        %v766 = vrot.slane %v759, %v765
        %v767 = vcombine.low %v741, %v742
        %v769 = vunpack.c.l.s4 1983009808
        %v770 = vunpack.c.0.s8 %v769
        %v771 = vlaneseq
        %v772 = vshrl.u32 %v771, 7
        %v773 = vsub.s32 %v770, %v772
        %v774 = vrot.slane %v767, %v773
        %v775 = vcombine.low %v750, %v758
        %v776 = vcombine.high %v750, %v758
        %v778 = vunpack.c.l.s4 1934713408
        %v779 = vunpack.c.0.s8 %v778
        %v780 = vlaneseq
        %v781 = vshrl.u32 %v780, 7
        %v782 = vsub.s32 %v779, %v781
        %v783 = vrot.slane %v775, %v782
        %v785 = vunpack.c.l.s4 1934713408
        %v786 = vunpack.c.0.s8 %v785
        %v787 = vlaneseq
        %v788 = vshrl.u32 %v787, 7
        %v789 = vsub.s32 %v786, %v788
        %v790 = vrot.slane %v776, %v789
        %v791 = vcombine.low %v766, %v774
        %v792 = vcombine.high %v766, %v774
        %v794 = vunpack.c.l.s4 1934713408
        %v795 = vunpack.c.0.s8 %v794
        %v796 = vlaneseq
        %v797 = vshrl.u32 %v796, 7
        %v798 = vsub.s32 %v795, %v797
        %v799 = vrot.slane %v791, %v798
        %v801 = vunpack.c.l.s4 1934713408
        %v802 = vunpack.c.0.s8 %v801
        %v803 = vlaneseq
        %v804 = vshrl.u32 %v803, 7
        %v805 = vsub.s32 %v802, %v804
        %v806 = vrot.slane %v792, %v805
        %v807 = vcombine.low %v783, %v799
        %v808 = vcombine.high %v783, %v799
        %v809 = vcombine.low %v790, %v806
        %v810 = vcombine.high %v790, %v806
        %vm811 = vcmask 64512
        %v813 = vsel %vm811, %v511, 0
        %v816 = vsel %vm811, %v659, 0
        %818 = vmatprep.subr.mxu0 0.0
        %819 = vmatpush1.xpose.msra.mxu0 %v816
        %820 = vmatprep.subr.mxu0 0.0
        %821 = vmatpush1.xpose.msra.mxu0 0.0
        %822 = vmatprep.subr.mxu0 0.0
        %823 = vmatpush1.xpose.msra.mxu0 0.0
        %824 = vmatprep.subr.mxu0 0.0
        %825 = vmatpush1.xpose.msra.mxu0 0.0
        %826 = vmatprep.subr.mxu0 0.0
        %827 = vmatpush1.xpose.msra.mxu0 0.0
        %828 = vmatprep.subr.mxu0 0.0
        %829 = vmatpush1.xpose.msra.mxu0 0.0
        %830 = vmatprep.subr.mxu0 0.0
        %831 = vmatpush1.xpose.msra.mxu0 0.0
        %832 = vmatprep.subr.mxu0 0.0
        %833 = vmatpush1.xpose.msra.mxu0 0.0
        %834 = vmatprep.subr.mxu0 0.0
        %835 = vmatpush1.xpose.msra.mxu0 0.0
        %836 = vmatprep.subr.mxu0 0.0
        %837 = vmatpush1.xpose.msra.mxu0 0.0
        %838 = vmatprep.subr.mxu0 0.0
        %839 = vmatpush1.xpose.msra.mxu0 0.0
        %840 = vmatprep.subr.mxu0 0.0
        %841 = vmatpush1.xpose.msra.mxu0 0.0
        %842 = vmatprep.subr.mxu0 0.0
        %843 = vmatpush1.xpose.msra.mxu0 0.0
        %844 = vmatprep.subr.mxu0 0.0
        %845 = vmatpush1.xpose.msra.mxu0 0.0
        %846 = vmatprep.subr.mxu0 0.0
        %847 = vmatpush1.xpose.msra.mxu0 0.0
        %848 = vmatprep.subr.mxu0 0.0
        %849 = vmatpush1.xpose.msra.mxu0 0.0
        %850 = vmatprep.subr.mxu0 0.0
        %851 = vmatpush1.xpose.msra.mxu0 0.0
        %852 = vmatprep.subr.mxu0 0.0
        %853 = vmatpush1.xpose.msra.mxu0 0.0
        %854 = vmatprep.subr.mxu0 0.0
        %855 = vmatpush1.xpose.msra.mxu0 0.0
        %856 = vmatprep.subr.mxu0 0.0
        %857 = vmatpush1.xpose.msra.mxu0 0.0
        %858 = vmatprep.subr.mxu0 0.0
        %859 = vmatpush1.xpose.msra.mxu0 0.0
        %860 = vmatprep.subr.mxu0 0.0
        %861 = vmatpush1.xpose.msra.mxu0 0.0
        %862 = vmatprep.subr.mxu0 0.0
        %863 = vmatpush1.xpose.msra.mxu0 0.0
        %864 = vmatprep.subr.mxu0 0.0
        %865 = vmatpush1.xpose.msra.mxu0 0.0
        %866 = vmatprep.subr.mxu0 0.0
        %867 = vmatpush1.xpose.msra.mxu0 0.0
        %868 = vmatprep.subr.mxu0 0.0
        %869 = vmatpush1.xpose.msra.mxu0 0.0
        %870 = vmatprep.subr.mxu0 0.0
        %871 = vmatpush1.xpose.msra.mxu0 0.0
        %872 = vmatprep.subr.mxu0 0.0
        %873 = vmatpush1.xpose.msra.mxu0 0.0
        %874 = vmatprep.subr.mxu0 0.0
        %875 = vmatpush1.xpose.msra.mxu0 0.0
        %876 = vmatprep.subr.mxu0 0.0
        %877 = vmatpush1.xpose.msra.mxu0 0.0
        %878 = vmatprep.subr.mxu0 0.0
        %879 = vmatpush1.xpose.msra.mxu0 0.0
        %880 = vmatprep.subr.mxu0 0.0
        %881 = vmatpush1.xpose.msra.mxu0 0.0
        %882 = vmatprep.mubr.f32.mxu0 0.0
        %883 = vmatmul.mubr.f32.gmra.mrb[0].mxu0 %v813
        %v884 = vpop.f32.mrb[0].mxu0
        %v885 = vadd.f32 0.0, %v884
        %v886 = vpop.f32.mrb[0].mxu0
        %887 = vdwg.mxu0
        %v889 = vsel %vm811, %v512, 0
        %v892 = vsel %vm811, %v660, 0
        %894 = vmatprep.subr.mxu0 0.0
        %895 = vmatpush1.xpose.msra.mxu0 %v892
        %896 = vmatprep.subr.mxu0 0.0
        %897 = vmatpush1.xpose.msra.mxu0 0.0
        %898 = vmatprep.subr.mxu0 0.0
        %899 = vmatpush1.xpose.msra.mxu0 0.0
        %900 = vmatprep.subr.mxu0 0.0
        %901 = vmatpush1.xpose.msra.mxu0 0.0
        %902 = vmatprep.subr.mxu0 0.0
        %903 = vmatpush1.xpose.msra.mxu0 0.0
        %904 = vmatprep.subr.mxu0 0.0
        %905 = vmatpush1.xpose.msra.mxu0 0.0
        %906 = vmatprep.subr.mxu0 0.0
        %907 = vmatpush1.xpose.msra.mxu0 0.0
        %908 = vmatprep.subr.mxu0 0.0
        %909 = vmatpush1.xpose.msra.mxu0 0.0
        %910 = vmatprep.subr.mxu0 0.0
        %911 = vmatpush1.xpose.msra.mxu0 0.0
        %912 = vmatprep.subr.mxu0 0.0
        %913 = vmatpush1.xpose.msra.mxu0 0.0
        %914 = vmatprep.subr.mxu0 0.0
        %915 = vmatpush1.xpose.msra.mxu0 0.0
        %916 = vmatprep.subr.mxu0 0.0
        %917 = vmatpush1.xpose.msra.mxu0 0.0
        %918 = vmatprep.subr.mxu0 0.0
        %919 = vmatpush1.xpose.msra.mxu0 0.0
        %920 = vmatprep.subr.mxu0 0.0
        %921 = vmatpush1.xpose.msra.mxu0 0.0
        %922 = vmatprep.subr.mxu0 0.0
        %923 = vmatpush1.xpose.msra.mxu0 0.0
        %924 = vmatprep.subr.mxu0 0.0
        %925 = vmatpush1.xpose.msra.mxu0 0.0
        %926 = vmatprep.subr.mxu0 0.0
        %927 = vmatpush1.xpose.msra.mxu0 0.0
        %928 = vmatprep.subr.mxu0 0.0
        %929 = vmatpush1.xpose.msra.mxu0 0.0
        %930 = vmatprep.subr.mxu0 0.0
        %931 = vmatpush1.xpose.msra.mxu0 0.0
        %932 = vmatprep.subr.mxu0 0.0
        %933 = vmatpush1.xpose.msra.mxu0 0.0
        %934 = vmatprep.subr.mxu0 0.0
        %935 = vmatpush1.xpose.msra.mxu0 0.0
        %936 = vmatprep.subr.mxu0 0.0
        %937 = vmatpush1.xpose.msra.mxu0 0.0
        %938 = vmatprep.subr.mxu0 0.0
        %939 = vmatpush1.xpose.msra.mxu0 0.0
        %940 = vmatprep.subr.mxu0 0.0
        %941 = vmatpush1.xpose.msra.mxu0 0.0
        %942 = vmatprep.subr.mxu0 0.0
        %943 = vmatpush1.xpose.msra.mxu0 0.0
        %944 = vmatprep.subr.mxu0 0.0
        %945 = vmatpush1.xpose.msra.mxu0 0.0
        %946 = vmatprep.subr.mxu0 0.0
        %947 = vmatpush1.xpose.msra.mxu0 0.0
        %948 = vmatprep.subr.mxu0 0.0
        %949 = vmatpush1.xpose.msra.mxu0 0.0
        %950 = vmatprep.subr.mxu0 0.0
        %951 = vmatpush1.xpose.msra.mxu0 0.0
        %952 = vmatprep.subr.mxu0 0.0
        %953 = vmatpush1.xpose.msra.mxu0 0.0
        %954 = vmatprep.subr.mxu0 0.0
        %955 = vmatpush1.xpose.msra.mxu0 0.0
        %956 = vmatprep.subr.mxu0 0.0
        %957 = vmatpush1.xpose.msra.mxu0 0.0
        %958 = vmatprep.mubr.f32.mxu0 0.0
        %959 = vmatmul.mubr.f32.gmra.mrb[0].mxu0 %v889
        %v960 = vpop.f32.mrb[0].mxu0
        %v961 = vadd.f32 0.0, %v960
        %v962 = vpop.f32.mrb[0].mxu0
        %963 = vdwg.mxu0
        %v965 = vsel %vm811, %v513, 0
        %v968 = vsel %vm811, %v661, 0
        %970 = vmatprep.subr.mxu0 0.0
        %971 = vmatpush1.xpose.msra.mxu0 %v968
        %972 = vmatprep.subr.mxu0 0.0
        %973 = vmatpush1.xpose.msra.mxu0 0.0
        %974 = vmatprep.subr.mxu0 0.0
        %975 = vmatpush1.xpose.msra.mxu0 0.0
        %976 = vmatprep.subr.mxu0 0.0
        %977 = vmatpush1.xpose.msra.mxu0 0.0
        %978 = vmatprep.subr.mxu0 0.0
        %979 = vmatpush1.xpose.msra.mxu0 0.0
        %980 = vmatprep.subr.mxu0 0.0
        %981 = vmatpush1.xpose.msra.mxu0 0.0
        %982 = vmatprep.subr.mxu0 0.0
        %983 = vmatpush1.xpose.msra.mxu0 0.0
        %984 = vmatprep.subr.mxu0 0.0
        %985 = vmatpush1.xpose.msra.mxu0 0.0
        %986 = vmatprep.subr.mxu0 0.0
        %987 = vmatpush1.xpose.msra.mxu0 0.0
        %988 = vmatprep.subr.mxu0 0.0
        %989 = vmatpush1.xpose.msra.mxu0 0.0
        %990 = vmatprep.subr.mxu0 0.0
        %991 = vmatpush1.xpose.msra.mxu0 0.0
        %992 = vmatprep.subr.mxu0 0.0
        %993 = vmatpush1.xpose.msra.mxu0 0.0
        %994 = vmatprep.subr.mxu0 0.0
        %995 = vmatpush1.xpose.msra.mxu0 0.0
        %996 = vmatprep.subr.mxu0 0.0
        %997 = vmatpush1.xpose.msra.mxu0 0.0
        %998 = vmatprep.subr.mxu0 0.0
        %999 = vmatpush1.xpose.msra.mxu0 0.0
        %1000 = vmatprep.subr.mxu0 0.0
        %1001 = vmatpush1.xpose.msra.mxu0 0.0
        %1002 = vmatprep.subr.mxu0 0.0
        %1003 = vmatpush1.xpose.msra.mxu0 0.0
        %1004 = vmatprep.subr.mxu0 0.0
        %1005 = vmatpush1.xpose.msra.mxu0 0.0
        %1006 = vmatprep.subr.mxu0 0.0
        %1007 = vmatpush1.xpose.msra.mxu0 0.0
        %1008 = vmatprep.subr.mxu0 0.0
        %1009 = vmatpush1.xpose.msra.mxu0 0.0
        %1010 = vmatprep.subr.mxu0 0.0
        %1011 = vmatpush1.xpose.msra.mxu0 0.0
        %1012 = vmatprep.subr.mxu0 0.0
        %1013 = vmatpush1.xpose.msra.mxu0 0.0
        %1014 = vmatprep.subr.mxu0 0.0
        %1015 = vmatpush1.xpose.msra.mxu0 0.0
        %1016 = vmatprep.subr.mxu0 0.0
        %1017 = vmatpush1.xpose.msra.mxu0 0.0
        %1018 = vmatprep.subr.mxu0 0.0
        %1019 = vmatpush1.xpose.msra.mxu0 0.0
        %1020 = vmatprep.subr.mxu0 0.0
        %1021 = vmatpush1.xpose.msra.mxu0 0.0
        %1022 = vmatprep.subr.mxu0 0.0
        %1023 = vmatpush1.xpose.msra.mxu0 0.0
        %1024 = vmatprep.subr.mxu0 0.0
        %1025 = vmatpush1.xpose.msra.mxu0 0.0
        %1026 = vmatprep.subr.mxu0 0.0
        %1027 = vmatpush1.xpose.msra.mxu0 0.0
        %1028 = vmatprep.subr.mxu0 0.0
        %1029 = vmatpush1.xpose.msra.mxu0 0.0
        %1030 = vmatprep.subr.mxu0 0.0
        %1031 = vmatpush1.xpose.msra.mxu0 0.0
        %1032 = vmatprep.subr.mxu0 0.0
        %1033 = vmatpush1.xpose.msra.mxu0 0.0
        %1034 = vmatprep.mubr.f32.mxu0 0.0
        %1035 = vmatmul.mubr.f32.gmra.mrb[0].mxu0 %v965
        %v1036 = vpop.f32.mrb[0].mxu0
        %v1037 = vadd.f32 0.0, %v1036
        %v1038 = vpop.f32.mrb[0].mxu0
        %1039 = vdwg.mxu0
        %v1041 = vsel %vm811, %v514, 0
        %v1044 = vsel %vm811, %v662, 0
        %1046 = vmatprep.subr.mxu0 0.0
        %1047 = vmatpush1.xpose.msra.mxu0 %v1044
        %1048 = vmatprep.subr.mxu0 0.0
        %1049 = vmatpush1.xpose.msra.mxu0 0.0
        %1050 = vmatprep.subr.mxu0 0.0
        %1051 = vmatpush1.xpose.msra.mxu0 0.0
        %1052 = vmatprep.subr.mxu0 0.0
        %1053 = vmatpush1.xpose.msra.mxu0 0.0
        %1054 = vmatprep.subr.mxu0 0.0
        %1055 = vmatpush1.xpose.msra.mxu0 0.0
        %1056 = vmatprep.subr.mxu0 0.0
        %1057 = vmatpush1.xpose.msra.mxu0 0.0
        %1058 = vmatprep.subr.mxu0 0.0
        %1059 = vmatpush1.xpose.msra.mxu0 0.0
        %1060 = vmatprep.subr.mxu0 0.0
        %1061 = vmatpush1.xpose.msra.mxu0 0.0
        %1062 = vmatprep.subr.mxu0 0.0
        %1063 = vmatpush1.xpose.msra.mxu0 0.0
        %1064 = vmatprep.subr.mxu0 0.0
        %1065 = vmatpush1.xpose.msra.mxu0 0.0
        %1066 = vmatprep.subr.mxu0 0.0
        %1067 = vmatpush1.xpose.msra.mxu0 0.0
        %1068 = vmatprep.subr.mxu0 0.0
        %1069 = vmatpush1.xpose.msra.mxu0 0.0
        %1070 = vmatprep.subr.mxu0 0.0
        %1071 = vmatpush1.xpose.msra.mxu0 0.0
        %1072 = vmatprep.subr.mxu0 0.0
        %1073 = vmatpush1.xpose.msra.mxu0 0.0
        %1074 = vmatprep.subr.mxu0 0.0
        %1075 = vmatpush1.xpose.msra.mxu0 0.0
        %1076 = vmatprep.subr.mxu0 0.0
        %1077 = vmatpush1.xpose.msra.mxu0 0.0
        %1078 = vmatprep.subr.mxu0 0.0
        %1079 = vmatpush1.xpose.msra.mxu0 0.0
        %1080 = vmatprep.subr.mxu0 0.0
        %1081 = vmatpush1.xpose.msra.mxu0 0.0
        %1082 = vmatprep.subr.mxu0 0.0
        %1083 = vmatpush1.xpose.msra.mxu0 0.0
        %1084 = vmatprep.subr.mxu0 0.0
        %1085 = vmatpush1.xpose.msra.mxu0 0.0
        %1086 = vmatprep.subr.mxu0 0.0
        %1087 = vmatpush1.xpose.msra.mxu0 0.0
        %1088 = vmatprep.subr.mxu0 0.0
        %1089 = vmatpush1.xpose.msra.mxu0 0.0
        %1090 = vmatprep.subr.mxu0 0.0
        %1091 = vmatpush1.xpose.msra.mxu0 0.0
        %1092 = vmatprep.subr.mxu0 0.0
        %1093 = vmatpush1.xpose.msra.mxu0 0.0
        %1094 = vmatprep.subr.mxu0 0.0
        %1095 = vmatpush1.xpose.msra.mxu0 0.0
        %1096 = vmatprep.subr.mxu0 0.0
        %1097 = vmatpush1.xpose.msra.mxu0 0.0
        %1098 = vmatprep.subr.mxu0 0.0
        %1099 = vmatpush1.xpose.msra.mxu0 0.0
        %1100 = vmatprep.subr.mxu0 0.0
        %1101 = vmatpush1.xpose.msra.mxu0 0.0
        %1102 = vmatprep.subr.mxu0 0.0
        %1103 = vmatpush1.xpose.msra.mxu0 0.0
        %1104 = vmatprep.subr.mxu0 0.0
        %1105 = vmatpush1.xpose.msra.mxu0 0.0
        %1106 = vmatprep.subr.mxu0 0.0
        %1107 = vmatpush1.xpose.msra.mxu0 0.0
        %1108 = vmatprep.subr.mxu0 0.0
        %1109 = vmatpush1.xpose.msra.mxu0 0.0
        %1110 = vmatprep.mubr.f32.mxu0 0.0
        %1111 = vmatmul.mubr.f32.gmra.mrb[0].mxu0 %v1041
        %v1112 = vpop.f32.mrb[0].mxu0
        %v1113 = vadd.f32 0.0, %v1112
        %v1114 = vpop.f32.mrb[0].mxu0
        %1115 = vdwg.mxu0
        %v1116 = vmul.f32 %v885, 0.35355338
        %v1117 = vmul.f32 %v961, 0.35355338
        %v1118 = vmul.f32 %v1037, 0.35355338
        %v1119 = vmul.f32 %v1113, 0.35355338
        %v1120 = vadd.f32 %v1116, %v285
        %v1121 = vadd.f32 %v1117, %v285
        %v1122 = vadd.f32 %v1118, %v285
        %v1123 = vadd.f32 %v1119, %v285
        %v1124 = vsel %vm811, %v1120, -inf
        %1125 = vmax.xlane.f32.xlu0 %v1124
        %v1126 = vpop.xlane.xlu0 %1125
        %v1127 = vsel %vm811, %v1121, -inf
        %1128 = vmax.xlane.f32.xlu0 %v1127
        %v1129 = vpop.xlane.xlu0 %1128
        %v1130 = vsel %vm811, %v1122, -inf
        %1131 = vmax.xlane.f32.xlu0 %v1130
        %v1132 = vpop.xlane.xlu0 %1131
        %v1133 = vsel %vm811, %v1123, -inf
        %1134 = vmax.xlane.f32.xlu0 %v1133
        %v1135 = vpop.xlane.xlu0 %1134
        %v1136 = vsub.f32 %v1120, %v1126
        %v1137 = vsub.f32 %v1121, %v1129
        %v1138 = vsub.f32 %v1122, %v1132
        %v1139 = vsub.f32 %v1123, %v1135
        %v1140 = vmul.f32 %v1136, 1.442695
        %v1141 = vpow.pop %v1140
        %v1142 = vmul.f32 %v1137, 1.442695
        %v1143 = vpow.pop %v1142
        %v1144 = vmul.f32 %v1138, 1.442695
        %v1145 = vpow.pop %v1144
        %v1146 = vmul.f32 %v1139, 1.442695
        %v1147 = vpow.pop %v1146
        %v1148 = vsel %vm811, %v1141, 0.0
        %1149 = vadd.xlane.f32.xlu0 %v1148
        %v1150 = vpop.xlane.xlu0 %1149
        %v1151 = vsel %vm811, %v1143, 0.0
        %1152 = vadd.xlane.f32.xlu0 %v1151
        %v1153 = vpop.xlane.xlu0 %1152
        %v1154 = vsel %vm811, %v1145, 0.0
        %1155 = vadd.xlane.f32.xlu0 %v1154
        %v1156 = vpop.xlane.xlu0 %1155
        %v1157 = vsel %vm811, %v1147, 0.0
        %1158 = vadd.xlane.f32.xlu0 %v1157
        %v1159 = vpop.xlane.xlu0 %1158
        %v1160 = vrcp.pop %v1150
        %v1161 = vrcp.pop %v1153
        %v1162 = vrcp.pop %v1156
        %v1163 = vrcp.pop %v1159
        %v1164 = vmul.f32 %v1141, %v1160
        %v1165 = vmul.f32 %v1143, %v1161
        %v1166 = vmul.f32 %v1145, %v1162
        %v1167 = vmul.f32 %v1147, %v1163
        %v1169 = vsel %vm811, %v1164, 0
        %1171 = vmatprep.subr.mxu0 0.0
        %1172 = vmatpush1.msra.mxu0 %v807
        %1173 = vmatprep.subr.mxu0 0.0
        %1174 = vmatpush1.msra.mxu0 0.0
        %1175 = vmatprep.subr.mxu0 0.0
        %1176 = vmatpush1.msra.mxu0 0.0
        %1177 = vmatprep.subr.mxu0 0.0
        %1178 = vmatpush1.msra.mxu0 0.0
        %1179 = vmatprep.subr.mxu0 0.0
        %1180 = vmatpush1.msra.mxu0 0.0
        %1181 = vmatprep.subr.mxu0 0.0
        %1182 = vmatpush1.msra.mxu0 0.0
        %1183 = vmatprep.subr.mxu0 0.0
        %1184 = vmatpush1.msra.mxu0 0.0
        %1185 = vmatprep.subr.mxu0 0.0
        %1186 = vmatpush1.msra.mxu0 0.0
        %1187 = vmatprep.subr.mxu0 0.0
        %1188 = vmatpush1.msra.mxu0 0.0
        %1189 = vmatprep.subr.mxu0 0.0
        %1190 = vmatpush1.msra.mxu0 0.0
        %1191 = vmatprep.subr.mxu0 0.0
        %1192 = vmatpush1.msra.mxu0 0.0
        %1193 = vmatprep.subr.mxu0 0.0
        %1194 = vmatpush1.msra.mxu0 0.0
        %1195 = vmatprep.subr.mxu0 0.0
        %1196 = vmatpush1.msra.mxu0 0.0
        %1197 = vmatprep.subr.mxu0 0.0
        %1198 = vmatpush1.msra.mxu0 0.0
        %1199 = vmatprep.subr.mxu0 0.0
        %1200 = vmatpush1.msra.mxu0 0.0
        %1201 = vmatprep.subr.mxu0 0.0
        %1202 = vmatpush1.msra.mxu0 0.0
        %1203 = vmatprep.subr.mxu0 0.0
        %1204 = vmatpush1.msra.mxu0 0.0
        %1205 = vmatprep.subr.mxu0 0.0
        %1206 = vmatpush1.msra.mxu0 0.0
        %1207 = vmatprep.subr.mxu0 0.0
        %1208 = vmatpush1.msra.mxu0 0.0
        %1209 = vmatprep.subr.mxu0 0.0
        %1210 = vmatpush1.msra.mxu0 0.0
        %1211 = vmatprep.subr.mxu0 0.0
        %1212 = vmatpush1.msra.mxu0 0.0
        %1213 = vmatprep.subr.mxu0 0.0
        %1214 = vmatpush1.msra.mxu0 0.0
        %1215 = vmatprep.subr.mxu0 0.0
        %1216 = vmatpush1.msra.mxu0 0.0
        %1217 = vmatprep.subr.mxu0 0.0
        %1218 = vmatpush1.msra.mxu0 0.0
        %1219 = vmatprep.subr.mxu0 0.0
        %1220 = vmatpush1.msra.mxu0 0.0
        %1221 = vmatprep.subr.mxu0 0.0
        %1222 = vmatpush1.msra.mxu0 0.0
        %1223 = vmatprep.subr.mxu0 0.0
        %1224 = vmatpush1.msra.mxu0 0.0
        %1225 = vmatprep.subr.mxu0 0.0
        %1226 = vmatpush1.msra.mxu0 0.0
        %1227 = vmatprep.subr.mxu0 0.0
        %1228 = vmatpush1.msra.mxu0 0.0
        %1229 = vmatprep.subr.mxu0 0.0
        %1230 = vmatpush1.msra.mxu0 0.0
        %1231 = vmatprep.subr.mxu0 0.0
        %1232 = vmatpush1.msra.mxu0 0.0
        %1233 = vmatprep.subr.mxu0 0.0
        %1234 = vmatpush1.msra.mxu0 0.0
        %1235 = vmatprep.mubr.f32.mxu0 0.0
        %1236 = vmatmul.mubr.f32.gmra.mrb[0].mxu0 %v1169
        %v1237 = vpop.f32.mrb[0].mxu0
        %v1238 = vadd.f32 0.0, %v1237
        %v1239 = vpop.f32.mrb[0].mxu0
        %1240 = vdwg.mxu0
        %v1242 = vsel %vm811, %v1165, 0
        %1244 = vmatprep.subr.mxu0 0.0
        %1245 = vmatpush1.msra.mxu0 %v808
        %1246 = vmatprep.subr.mxu0 0.0
        %1247 = vmatpush1.msra.mxu0 0.0
        %1248 = vmatprep.subr.mxu0 0.0
        %1249 = vmatpush1.msra.mxu0 0.0
        %1250 = vmatprep.subr.mxu0 0.0
        %1251 = vmatpush1.msra.mxu0 0.0
        %1252 = vmatprep.subr.mxu0 0.0
        %1253 = vmatpush1.msra.mxu0 0.0
        %1254 = vmatprep.subr.mxu0 0.0
        %1255 = vmatpush1.msra.mxu0 0.0
        %1256 = vmatprep.subr.mxu0 0.0
        %1257 = vmatpush1.msra.mxu0 0.0
        %1258 = vmatprep.subr.mxu0 0.0
        %1259 = vmatpush1.msra.mxu0 0.0
        %1260 = vmatprep.subr.mxu0 0.0
        %1261 = vmatpush1.msra.mxu0 0.0
        %1262 = vmatprep.subr.mxu0 0.0
        %1263 = vmatpush1.msra.mxu0 0.0
        %1264 = vmatprep.subr.mxu0 0.0
        %1265 = vmatpush1.msra.mxu0 0.0
        %1266 = vmatprep.subr.mxu0 0.0
        %1267 = vmatpush1.msra.mxu0 0.0
        %1268 = vmatprep.subr.mxu0 0.0
        %1269 = vmatpush1.msra.mxu0 0.0
        %1270 = vmatprep.subr.mxu0 0.0
        %1271 = vmatpush1.msra.mxu0 0.0
        %1272 = vmatprep.subr.mxu0 0.0
        %1273 = vmatpush1.msra.mxu0 0.0
        %1274 = vmatprep.subr.mxu0 0.0
        %1275 = vmatpush1.msra.mxu0 0.0
        %1276 = vmatprep.subr.mxu0 0.0
        %1277 = vmatpush1.msra.mxu0 0.0
        %1278 = vmatprep.subr.mxu0 0.0
        %1279 = vmatpush1.msra.mxu0 0.0
        %1280 = vmatprep.subr.mxu0 0.0
        %1281 = vmatpush1.msra.mxu0 0.0
        %1282 = vmatprep.subr.mxu0 0.0
        %1283 = vmatpush1.msra.mxu0 0.0
        %1284 = vmatprep.subr.mxu0 0.0
        %1285 = vmatpush1.msra.mxu0 0.0
        %1286 = vmatprep.subr.mxu0 0.0
        %1287 = vmatpush1.msra.mxu0 0.0
        %1288 = vmatprep.subr.mxu0 0.0
        %1289 = vmatpush1.msra.mxu0 0.0
        %1290 = vmatprep.subr.mxu0 0.0
        %1291 = vmatpush1.msra.mxu0 0.0
        %1292 = vmatprep.subr.mxu0 0.0
        %1293 = vmatpush1.msra.mxu0 0.0
        %1294 = vmatprep.subr.mxu0 0.0
        %1295 = vmatpush1.msra.mxu0 0.0
        %1296 = vmatprep.subr.mxu0 0.0
        %1297 = vmatpush1.msra.mxu0 0.0
        %1298 = vmatprep.subr.mxu0 0.0
        %1299 = vmatpush1.msra.mxu0 0.0
        %1300 = vmatprep.subr.mxu0 0.0
        %1301 = vmatpush1.msra.mxu0 0.0
        %1302 = vmatprep.subr.mxu0 0.0
        %1303 = vmatpush1.msra.mxu0 0.0
        %1304 = vmatprep.subr.mxu0 0.0
        %1305 = vmatpush1.msra.mxu0 0.0
        %1306 = vmatprep.subr.mxu0 0.0
        %1307 = vmatpush1.msra.mxu0 0.0
        %1308 = vmatprep.mubr.f32.mxu0 0.0
        %1309 = vmatmul.mubr.f32.gmra.mrb[0].mxu0 %v1242
        %v1310 = vpop.f32.mrb[0].mxu0
        %v1311 = vadd.f32 0.0, %v1310
        %v1312 = vpop.f32.mrb[0].mxu0
        %1313 = vdwg.mxu0
        %v1315 = vsel %vm811, %v1166, 0
        %1317 = vmatprep.subr.mxu0 0.0
        %1318 = vmatpush1.msra.mxu0 %v809
        %1319 = vmatprep.subr.mxu0 0.0
        %1320 = vmatpush1.msra.mxu0 0.0
        %1321 = vmatprep.subr.mxu0 0.0
        %1322 = vmatpush1.msra.mxu0 0.0
        %1323 = vmatprep.subr.mxu0 0.0
        %1324 = vmatpush1.msra.mxu0 0.0
        %1325 = vmatprep.subr.mxu0 0.0
        %1326 = vmatpush1.msra.mxu0 0.0
        %1327 = vmatprep.subr.mxu0 0.0
        %1328 = vmatpush1.msra.mxu0 0.0
        %1329 = vmatprep.subr.mxu0 0.0
        %1330 = vmatpush1.msra.mxu0 0.0
        %1331 = vmatprep.subr.mxu0 0.0
        %1332 = vmatpush1.msra.mxu0 0.0
        %1333 = vmatprep.subr.mxu0 0.0
        %1334 = vmatpush1.msra.mxu0 0.0
        %1335 = vmatprep.subr.mxu0 0.0
        %1336 = vmatpush1.msra.mxu0 0.0
        %1337 = vmatprep.subr.mxu0 0.0
        %1338 = vmatpush1.msra.mxu0 0.0
        %1339 = vmatprep.subr.mxu0 0.0
        %1340 = vmatpush1.msra.mxu0 0.0
        %1341 = vmatprep.subr.mxu0 0.0
        %1342 = vmatpush1.msra.mxu0 0.0
        %1343 = vmatprep.subr.mxu0 0.0
        %1344 = vmatpush1.msra.mxu0 0.0
        %1345 = vmatprep.subr.mxu0 0.0
        %1346 = vmatpush1.msra.mxu0 0.0
        %1347 = vmatprep.subr.mxu0 0.0
        %1348 = vmatpush1.msra.mxu0 0.0
        %1349 = vmatprep.subr.mxu0 0.0
        %1350 = vmatpush1.msra.mxu0 0.0
        %1351 = vmatprep.subr.mxu0 0.0
        %1352 = vmatpush1.msra.mxu0 0.0
        %1353 = vmatprep.subr.mxu0 0.0
        %1354 = vmatpush1.msra.mxu0 0.0
        %1355 = vmatprep.subr.mxu0 0.0
        %1356 = vmatpush1.msra.mxu0 0.0
        %1357 = vmatprep.subr.mxu0 0.0
        %1358 = vmatpush1.msra.mxu0 0.0
        %1359 = vmatprep.subr.mxu0 0.0
        %1360 = vmatpush1.msra.mxu0 0.0
        %1361 = vmatprep.subr.mxu0 0.0
        %1362 = vmatpush1.msra.mxu0 0.0
        %1363 = vmatprep.subr.mxu0 0.0
        %1364 = vmatpush1.msra.mxu0 0.0
        %1365 = vmatprep.subr.mxu0 0.0
        %1366 = vmatpush1.msra.mxu0 0.0
        %1367 = vmatprep.subr.mxu0 0.0
        %1368 = vmatpush1.msra.mxu0 0.0
        %1369 = vmatprep.subr.mxu0 0.0
        %1370 = vmatpush1.msra.mxu0 0.0
        %1371 = vmatprep.subr.mxu0 0.0
        %1372 = vmatpush1.msra.mxu0 0.0
        %1373 = vmatprep.subr.mxu0 0.0
        %1374 = vmatpush1.msra.mxu0 0.0
        %1375 = vmatprep.subr.mxu0 0.0
        %1376 = vmatpush1.msra.mxu0 0.0
        %1377 = vmatprep.subr.mxu0 0.0
        %1378 = vmatpush1.msra.mxu0 0.0
        %1379 = vmatprep.subr.mxu0 0.0
        %1380 = vmatpush1.msra.mxu0 0.0
        %1381 = vmatprep.mubr.f32.mxu0 0.0
        %1382 = vmatmul.mubr.f32.gmra.mrb[0].mxu0 %v1315
        %v1383 = vpop.f32.mrb[0].mxu0
        %v1384 = vadd.f32 0.0, %v1383
        %v1385 = vpop.f32.mrb[0].mxu0
        %1386 = vdwg.mxu0
        %v1388 = vsel %vm811, %v1167, 0
        %1390 = vmatprep.subr.mxu0 0.0
        %1391 = vmatpush1.msra.mxu0 %v810
        %1392 = vmatprep.subr.mxu0 0.0
        %1393 = vmatpush1.msra.mxu0 0.0
        %1394 = vmatprep.subr.mxu0 0.0
        %1395 = vmatpush1.msra.mxu0 0.0
        %1396 = vmatprep.subr.mxu0 0.0
        %1397 = vmatpush1.msra.mxu0 0.0
        %1398 = vmatprep.subr.mxu0 0.0
        %1399 = vmatpush1.msra.mxu0 0.0
        %1400 = vmatprep.subr.mxu0 0.0
        %1401 = vmatpush1.msra.mxu0 0.0
        %1402 = vmatprep.subr.mxu0 0.0
        %1403 = vmatpush1.msra.mxu0 0.0
        %1404 = vmatprep.subr.mxu0 0.0
        %1405 = vmatpush1.msra.mxu0 0.0
        %1406 = vmatprep.subr.mxu0 0.0
        %1407 = vmatpush1.msra.mxu0 0.0
        %1408 = vmatprep.subr.mxu0 0.0
        %1409 = vmatpush1.msra.mxu0 0.0
        %1410 = vmatprep.subr.mxu0 0.0
        %1411 = vmatpush1.msra.mxu0 0.0
        %1412 = vmatprep.subr.mxu0 0.0
        %1413 = vmatpush1.msra.mxu0 0.0
        %1414 = vmatprep.subr.mxu0 0.0
        %1415 = vmatpush1.msra.mxu0 0.0
        %1416 = vmatprep.subr.mxu0 0.0
        %1417 = vmatpush1.msra.mxu0 0.0
        %1418 = vmatprep.subr.mxu0 0.0
        %1419 = vmatpush1.msra.mxu0 0.0
        %1420 = vmatprep.subr.mxu0 0.0
        %1421 = vmatpush1.msra.mxu0 0.0
        %1422 = vmatprep.subr.mxu0 0.0
        %1423 = vmatpush1.msra.mxu0 0.0
        %1424 = vmatprep.subr.mxu0 0.0
        %1425 = vmatpush1.msra.mxu0 0.0
        %1426 = vmatprep.subr.mxu0 0.0
        %1427 = vmatpush1.msra.mxu0 0.0
        %1428 = vmatprep.subr.mxu0 0.0
        %1429 = vmatpush1.msra.mxu0 0.0
        %1430 = vmatprep.subr.mxu0 0.0
        %1431 = vmatpush1.msra.mxu0 0.0
        %1432 = vmatprep.subr.mxu0 0.0
        %1433 = vmatpush1.msra.mxu0 0.0
        %1434 = vmatprep.subr.mxu0 0.0
        %1435 = vmatpush1.msra.mxu0 0.0
        %1436 = vmatprep.subr.mxu0 0.0
        %1437 = vmatpush1.msra.mxu0 0.0
        %1438 = vmatprep.subr.mxu0 0.0
        %1439 = vmatpush1.msra.mxu0 0.0
        %1440 = vmatprep.subr.mxu0 0.0
        %1441 = vmatpush1.msra.mxu0 0.0
        %1442 = vmatprep.subr.mxu0 0.0
        %1443 = vmatpush1.msra.mxu0 0.0
        %1444 = vmatprep.subr.mxu0 0.0
        %1445 = vmatpush1.msra.mxu0 0.0
        %1446 = vmatprep.subr.mxu0 0.0
        %1447 = vmatpush1.msra.mxu0 0.0
        %1448 = vmatprep.subr.mxu0 0.0
        %1449 = vmatpush1.msra.mxu0 0.0
        %1450 = vmatprep.subr.mxu0 0.0
        %1451 = vmatpush1.msra.mxu0 0.0
        %1452 = vmatprep.subr.mxu0 0.0
        %1453 = vmatpush1.msra.mxu0 0.0
        %1454 = vmatprep.mubr.f32.mxu0 0.0
        %1455 = vmatmul.mubr.f32.gmra.mrb[0].mxu0 %v1388
        %v1456 = vpop.f32.mrb[0].mxu0
        %v1457 = vadd.f32 0.0, %v1456
        %v1458 = vpop.f32.mrb[0].mxu0
        %1459 = vdwg.mxu0
        %v1460 = vcombine.low %v1238, %v1384
        %v1461 = vcombine.high %v1238, %v1384
        %v1463 = vunpack.c.l.s4 1983009808
        %v1464 = vunpack.c.0.s8 %v1463
        %v1465 = vlaneseq
        %v1466 = vshrl.u32 %v1465, 7
        %v1467 = vsub.s32 %v1464, %v1466
        %v1468 = vrot.slane %v1460, %v1467
        %v1470 = vunpack.c.l.s4 1983009808
        %v1471 = vunpack.c.0.s8 %v1470
        %v1472 = vlaneseq
        %v1473 = vshrl.u32 %v1472, 7
        %v1474 = vsub.s32 %v1471, %v1473
        %v1475 = vrot.slane %v1461, %v1474
        %v1476 = vcombine.low %v1311, %v1457
        %v1477 = vcombine.high %v1311, %v1457
        %v1479 = vunpack.c.l.s4 1983009808
        %v1480 = vunpack.c.0.s8 %v1479
        %v1481 = vlaneseq
        %v1482 = vshrl.u32 %v1481, 7
        %v1483 = vsub.s32 %v1480, %v1482
        %v1484 = vrot.slane %v1476, %v1483
        %v1486 = vunpack.c.l.s4 1983009808
        %v1487 = vunpack.c.0.s8 %v1486
        %v1488 = vlaneseq
        %v1489 = vshrl.u32 %v1488, 7
        %v1490 = vsub.s32 %v1487, %v1489
        %v1491 = vrot.slane %v1477, %v1490
        %v1492 = vcombine.low %v1468, %v1484
        %v1493 = vcombine.high %v1468, %v1484
        %v1495 = vunpack.c.l.s4 1934713408
        %v1496 = vunpack.c.0.s8 %v1495
        %v1497 = vlaneseq
        %v1498 = vshrl.u32 %v1497, 7
        %v1499 = vsub.s32 %v1496, %v1498
        %v1500 = vrot.slane %v1492, %v1499
        %v1502 = vunpack.c.l.s4 1934713408
        %v1503 = vunpack.c.0.s8 %v1502
        %v1504 = vlaneseq
        %v1505 = vshrl.u32 %v1504, 7
        %v1506 = vsub.s32 %v1503, %v1505
        %v1507 = vrot.slane %v1493, %v1506
        %v1508 = vcombine.low %v1475, %v1491
        %v1509 = vcombine.high %v1475, %v1491
        %v1511 = vunpack.c.l.s4 1934713408
        %v1512 = vunpack.c.0.s8 %v1511
        %v1513 = vlaneseq
        %v1514 = vshrl.u32 %v1513, 7
        %v1515 = vsub.s32 %v1512, %v1514
        %v1516 = vrot.slane %v1508, %v1515
        %v1518 = vunpack.c.l.s4 1934713408
        %v1519 = vunpack.c.0.s8 %v1518
        %v1520 = vlaneseq
        %v1521 = vshrl.u32 %v1520, 7
        %v1522 = vsub.s32 %v1519, %v1521
        %v1523 = vrot.slane %v1509, %v1522
        %v1524 = vcombine.high %v1500, 0.0
        %v1525 = vcombine.high %v1507, 0.0
        %v1526 = vcombine.high %v1516, 0.0
        %v1527 = vcombine.high %v1523, 0.0
        %v1528 = vcombine.low %v1500, %v1507
        %v1530 = vunpack.c.l.s4 1983009808
        %v1531 = vunpack.c.0.s8 %v1530
        %v1532 = vlaneseq
        %v1533 = vshrl.u32 %v1532, 7
        %v1534 = vsub.s32 %v1531, %v1533
        %v1535 = vrot.slane %v1528, %v1534
        %v1536 = vcombine.low %v1524, %v1525
        %v1538 = vunpack.c.l.s4 1983009808
        %v1539 = vunpack.c.0.s8 %v1538
        %v1540 = vlaneseq
        %v1541 = vshrl.u32 %v1540, 7
        %v1542 = vsub.s32 %v1539, %v1541
        %v1543 = vrot.slane %v1536, %v1542
        %v1544 = vcombine.low %v1516, %v1523
        %v1546 = vunpack.c.l.s4 1983009808
        %v1547 = vunpack.c.0.s8 %v1546
        %v1548 = vlaneseq
        %v1549 = vshrl.u32 %v1548, 7
        %v1550 = vsub.s32 %v1547, %v1549
        %v1551 = vrot.slane %v1544, %v1550
        %v1552 = vcombine.low %v1526, %v1527
        %v1554 = vunpack.c.l.s4 1983009808
        %v1555 = vunpack.c.0.s8 %v1554
        %v1556 = vlaneseq
        %v1557 = vshrl.u32 %v1556, 7
        %v1558 = vsub.s32 %v1555, %v1557
        %v1559 = vrot.slane %v1552, %v1558
        %v1560 = vcombine.low %v1535, %v1543
        %v1561 = vcombine.high %v1535, %v1543
        %v1563 = vunpack.c.l.s4 1934713408
        %v1564 = vunpack.c.0.s8 %v1563
        %v1565 = vlaneseq
        %v1566 = vshrl.u32 %v1565, 7
        %v1567 = vsub.s32 %v1564, %v1566
        %v1568 = vrot.slane %v1560, %v1567
        %v1570 = vunpack.c.l.s4 1934713408
        %v1571 = vunpack.c.0.s8 %v1570
        %v1572 = vlaneseq
        %v1573 = vshrl.u32 %v1572, 7
        %v1574 = vsub.s32 %v1571, %v1573
        %v1575 = vrot.slane %v1561, %v1574
        %v1576 = vcombine.low %v1551, %v1559
        %v1577 = vcombine.high %v1551, %v1559
        %v1579 = vunpack.c.l.s4 1934713408
        %v1580 = vunpack.c.0.s8 %v1579
        %v1581 = vlaneseq
        %v1582 = vshrl.u32 %v1581, 7
        %v1583 = vsub.s32 %v1580, %v1582
        %v1584 = vrot.slane %v1576, %v1583
        %v1586 = vunpack.c.l.s4 1934713408
        %v1587 = vunpack.c.0.s8 %v1586
        %v1588 = vlaneseq
        %v1589 = vshrl.u32 %v1588, 7
        %v1590 = vsub.s32 %v1587, %v1589
        %v1591 = vrot.slane %v1577, %v1590
        %v1592 = vcombine.low %v1568, %v1584
        %v1593 = vcombine.high %v1568, %v1584
        %v1594 = vcombine.low %v1575, %v1591
        %v1595 = vcombine.high %v1575, %v1591
        %1597 = vrot.lane.b32.xlu0 %v1593, 8
        %v1598 = vpop.permute.xlu0 %1597
        %1601 = vrot.lane.b32.xlu0 %v1594, 16
        %v1602 = vpop.permute.xlu0 %1601
        %1605 = vrot.lane.b32.xlu0 %v1595, 24
        %v1606 = vpop.permute.xlu0 %1605
        %v1608 = vsel %vm811, %v1592, %v1598
        %vm1609 = vcmask 130048
        %v1610 = vsel %vm1609, %v1608, %v1602
        %vm1611 = vcmask 195584
        %v1612 = vsel %vm1611, %v1610, %v1606
        %1617 = vrot.lane.b32.xlu0 %v287, 32
        %v1618 = vpop.permute.xlu0 %1617
        %1619 = vrot.lane.b32.xlu0 %v288, 32
        %v1620 = vpop.permute.xlu0 %1619
        %1621 = vrot.lane.b32.xlu0 %v289, 32
        %v1622 = vpop.permute.xlu0 %1621
        %1623 = vrot.lane.b32.xlu0 %v290, 32
        %v1624 = vpop.permute.xlu0 %1623
        %1630 = vrot.lane.b32.xlu0 %v294, 32
        %v1631 = vpop.permute.xlu0 %1630
        %v1634 = vsel %vm295, %v1612, 0
        %1636 = vmatprep.subr.mxu0 0.0
        %1637 = vmatpush1.msra.mxu0 %v1618
        %1638 = vmatprep.subr.mxu0 0.0
        %1639 = vmatpush1.msra.mxu0 %v1620
        %1640 = vmatprep.subr.mxu0 0.0
        %1641 = vmatpush1.msra.mxu0 %v1622
        %1642 = vmatprep.subr.mxu0 0.0
        %1643 = vmatpush1.msra.mxu0 %v1624
        %1644 = vmatprep.subr.mxu0 0.0
        %1645 = vmatpush1.msra.mxu0 0.0
        %1646 = vmatprep.subr.mxu0 0.0
        %1647 = vmatpush1.msra.mxu0 0.0
        %1648 = vmatprep.subr.mxu0 0.0
        %1649 = vmatpush1.msra.mxu0 0.0
        %1650 = vmatprep.subr.mxu0 0.0
        %1651 = vmatpush1.msra.mxu0 0.0
        %1652 = vmatprep.subr.mxu0 0.0
        %1653 = vmatpush1.msra.mxu0 0.0
        %1654 = vmatprep.subr.mxu0 0.0
        %1655 = vmatpush1.msra.mxu0 0.0
        %1656 = vmatprep.subr.mxu0 0.0
        %1657 = vmatpush1.msra.mxu0 0.0
        %1658 = vmatprep.subr.mxu0 0.0
        %1659 = vmatpush1.msra.mxu0 0.0
        %1660 = vmatprep.subr.mxu0 0.0
        %1661 = vmatpush1.msra.mxu0 0.0
        %1662 = vmatprep.subr.mxu0 0.0
        %1663 = vmatpush1.msra.mxu0 0.0
        %1664 = vmatprep.subr.mxu0 0.0
        %1665 = vmatpush1.msra.mxu0 0.0
        %1666 = vmatprep.subr.mxu0 0.0
        %1667 = vmatpush1.msra.mxu0 0.0
        %1668 = vmatprep.subr.mxu0 0.0
        %1669 = vmatpush1.msra.mxu0 0.0
        %1670 = vmatprep.subr.mxu0 0.0
        %1671 = vmatpush1.msra.mxu0 0.0
        %1672 = vmatprep.subr.mxu0 0.0
        %1673 = vmatpush1.msra.mxu0 0.0
        %1674 = vmatprep.subr.mxu0 0.0
        %1675 = vmatpush1.msra.mxu0 0.0
        %1676 = vmatprep.subr.mxu0 0.0
        %1677 = vmatpush1.msra.mxu0 0.0
        %1678 = vmatprep.subr.mxu0 0.0
        %1679 = vmatpush1.msra.mxu0 0.0
        %1680 = vmatprep.subr.mxu0 0.0
        %1681 = vmatpush1.msra.mxu0 0.0
        %1682 = vmatprep.subr.mxu0 0.0
        %1683 = vmatpush1.msra.mxu0 0.0
        %1684 = vmatprep.subr.mxu0 0.0
        %1685 = vmatpush1.msra.mxu0 0.0
        %1686 = vmatprep.subr.mxu0 0.0
        %1687 = vmatpush1.msra.mxu0 0.0
        %1688 = vmatprep.subr.mxu0 0.0
        %1689 = vmatpush1.msra.mxu0 0.0
        %1690 = vmatprep.subr.mxu0 0.0
        %1691 = vmatpush1.msra.mxu0 0.0
        %1692 = vmatprep.subr.mxu0 0.0
        %1693 = vmatpush1.msra.mxu0 0.0
        %1694 = vmatprep.subr.mxu0 0.0
        %1695 = vmatpush1.msra.mxu0 0.0
        %1696 = vmatprep.subr.mxu0 0.0
        %1697 = vmatpush1.msra.mxu0 0.0
        %1698 = vmatprep.subr.mxu0 0.0
        %1699 = vmatpush1.msra.mxu0 0.0
        %1700 = vmatprep.mubr.f32.mxu0 0.0
        %1701 = vmatmul.mubr.f32.gmra.mrb[0].mxu0 %v1634
        %v1702 = vpop.f32.mrb[0].mxu0
        %v1703 = vadd.f32 %v1631, %v1702
        %v1704 = vpop.f32.mrb[0].mxu0
        %1705 = vdwg.mxu0
        %v1706 = vadd.f32 %v281, %v1703
        %v1707 = vsel %vm295, %v1706, 0.0
        %1708 = vadd.xlane.f32.xlu0 %v1707
        %v1709 = vpop.xlane.xlu0 %1708
        %v1710 = vrcp.pop 32.0
        %v1711 = vmul.f32 %v1709, %v1710
        %v1712 = vsub.f32 %v1706, %v1711
        %v1713 = vmul.f32 %v1712, %v1712
        %v1714 = vsel %vm295, %v1713, 0.0
        %1715 = vadd.xlane.f32.xlu0 %v1714
        %v1716 = vpop.xlane.xlu0 %1715
        %v1717 = vmul.f32 %v1716, 0.032258064
        %v1718 = vrsqrt.pop %v1717
        %v1719 = vmul.f32 %v1717, %v1718
        %vm1720 = vcmp.eq.f32.partialorder %v1717, inf
        %v1721 = vsel %vm1720, %v1717, %v1719
        %vm1722 = vcmp.eq.f32.partialorder %v1717, 0.0
        %v1723 = vand.u32 %v1717, 2147483648
        %v1724 = vsel %vm1722, %v1723, %v1721
        %v1725 = vadd.f32 %v1724, 1e-06
        %v1726 = vrcp.pop %v1725
        %v1727 = vmul.f32 %v1712, %v1726
        %v1728 = vlaneseq
        %v1729 = vshrl.u32 %v1728, 7
        %v1730 = vsub.s32 3, %v1729
        %v1731 = vrot.slane %v286, %v1730
        %v1732 = vmul.f32 %v1731, %v1727
        %1734 = vrot.lane.b32.xlu0 %v1731, 96
        %v1735 = vpop.permute.xlu0 %1734
        %v1737 = vadd.f32 %v1732, %v1735
        %s1738 = scalar_lea.vmem %s3, 32
        %v1739 = vld [vmem:[%s1738] sm:$0xff]
        %v1740 = vld [vmem:[%s1738 + $0x8] sm:$0xff]
        %v1741 = vld [vmem:[%s1738 + $0x10] sm:$0xff]
        %v1742 = vld [vmem:[%s1738 + $0x18] sm:$0xff]
        %v1743 = vlaneseq
        %v1744 = vshrl.u32 %v1743, 7
        %v1745 = vsub.s32 1, %v1744
        %v1746 = vrot.slane %v286, %v1745
        %v1748 = vsel %vm295, %v1737, 0
        %1750 = vmatprep.subr.mxu0 0.0
        %1751 = vmatpush1.msra.mxu0 %v1739
        %1752 = vmatprep.subr.mxu0 0.0
        %1753 = vmatpush1.msra.mxu0 %v1740
        %1754 = vmatprep.subr.mxu0 0.0
        %1755 = vmatpush1.msra.mxu0 %v1741
        %1756 = vmatprep.subr.mxu0 0.0
        %1757 = vmatpush1.msra.mxu0 %v1742
        %1758 = vmatprep.subr.mxu0 0.0
        %1759 = vmatpush1.msra.mxu0 0.0
        %1760 = vmatprep.subr.mxu0 0.0
        %1761 = vmatpush1.msra.mxu0 0.0
        %1762 = vmatprep.subr.mxu0 0.0
        %1763 = vmatpush1.msra.mxu0 0.0
        %1764 = vmatprep.subr.mxu0 0.0
        %1765 = vmatpush1.msra.mxu0 0.0
        %1766 = vmatprep.subr.mxu0 0.0
        %1767 = vmatpush1.msra.mxu0 0.0
        %1768 = vmatprep.subr.mxu0 0.0
        %1769 = vmatpush1.msra.mxu0 0.0
        %1770 = vmatprep.subr.mxu0 0.0
        %1771 = vmatpush1.msra.mxu0 0.0
        %1772 = vmatprep.subr.mxu0 0.0
        %1773 = vmatpush1.msra.mxu0 0.0
        %1774 = vmatprep.subr.mxu0 0.0
        %1775 = vmatpush1.msra.mxu0 0.0
        %1776 = vmatprep.subr.mxu0 0.0
        %1777 = vmatpush1.msra.mxu0 0.0
        %1778 = vmatprep.subr.mxu0 0.0
        %1779 = vmatpush1.msra.mxu0 0.0
        %1780 = vmatprep.subr.mxu0 0.0
        %1781 = vmatpush1.msra.mxu0 0.0
        %1782 = vmatprep.subr.mxu0 0.0
        %1783 = vmatpush1.msra.mxu0 0.0
        %1784 = vmatprep.subr.mxu0 0.0
        %1785 = vmatpush1.msra.mxu0 0.0
        %1786 = vmatprep.subr.mxu0 0.0
        %1787 = vmatpush1.msra.mxu0 0.0
        %1788 = vmatprep.subr.mxu0 0.0
        %1789 = vmatpush1.msra.mxu0 0.0
        %1790 = vmatprep.subr.mxu0 0.0
        %1791 = vmatpush1.msra.mxu0 0.0
        %1792 = vmatprep.subr.mxu0 0.0
        %1793 = vmatpush1.msra.mxu0 0.0
        %1794 = vmatprep.subr.mxu0 0.0
        %1795 = vmatpush1.msra.mxu0 0.0
        %1796 = vmatprep.subr.mxu0 0.0
        %1797 = vmatpush1.msra.mxu0 0.0
        %1798 = vmatprep.subr.mxu0 0.0
        %1799 = vmatpush1.msra.mxu0 0.0
        %1800 = vmatprep.subr.mxu0 0.0
        %1801 = vmatpush1.msra.mxu0 0.0
        %1802 = vmatprep.subr.mxu0 0.0
        %1803 = vmatpush1.msra.mxu0 0.0
        %1804 = vmatprep.subr.mxu0 0.0
        %1805 = vmatpush1.msra.mxu0 0.0
        %1806 = vmatprep.subr.mxu0 0.0
        %1807 = vmatpush1.msra.mxu0 0.0
        %1808 = vmatprep.subr.mxu0 0.0
        %1809 = vmatpush1.msra.mxu0 0.0
        %1810 = vmatprep.subr.mxu0 0.0
        %1811 = vmatpush1.msra.mxu0 0.0
        %1812 = vmatprep.subr.mxu0 0.0
        %1813 = vmatpush1.msra.mxu0 0.0
        %1814 = vmatprep.mubr.f32.mxu0 0.0
        %1815 = vmatmul.mubr.f32.gmra.mrb[0].mxu0 %v1748
        %v1816 = vpop.f32.mrb[0].mxu0
        %v1817 = vadd.f32 %v1746, %v1816
        %v1818 = vpop.f32.mrb[0].mxu0
        %1819 = vdwg.mxu0
        %1824 = vrot.lane.b32.xlu0 %v1739, 96
        %v1825 = vpop.permute.xlu0 %1824
        %1826 = vrot.lane.b32.xlu0 %v1740, 96
        %v1827 = vpop.permute.xlu0 %1826
        %1828 = vrot.lane.b32.xlu0 %v1741, 96
        %v1829 = vpop.permute.xlu0 %1828
        %1830 = vrot.lane.b32.xlu0 %v1742, 96
        %v1831 = vpop.permute.xlu0 %1830
        %1837 = vrot.lane.b32.xlu0 %v1746, 96
        %v1838 = vpop.permute.xlu0 %1837
        %v1841 = vsel %vm295, %v282, 0
        %1843 = vmatprep.subr.mxu0 0.0
        %1844 = vmatpush1.msra.mxu0 %v1825
        %1845 = vmatprep.subr.mxu0 0.0
        %1846 = vmatpush1.msra.mxu0 %v1827
        %1847 = vmatprep.subr.mxu0 0.0
        %1848 = vmatpush1.msra.mxu0 %v1829
        %1849 = vmatprep.subr.mxu0 0.0
        %1850 = vmatpush1.msra.mxu0 %v1831
        %1851 = vmatprep.subr.mxu0 0.0
        %1852 = vmatpush1.msra.mxu0 0.0
        %1853 = vmatprep.subr.mxu0 0.0
        %1854 = vmatpush1.msra.mxu0 0.0
        %1855 = vmatprep.subr.mxu0 0.0
        %1856 = vmatpush1.msra.mxu0 0.0
        %1857 = vmatprep.subr.mxu0 0.0
        %1858 = vmatpush1.msra.mxu0 0.0
        %1859 = vmatprep.subr.mxu0 0.0
        %1860 = vmatpush1.msra.mxu0 0.0
        %1861 = vmatprep.subr.mxu0 0.0
        %1862 = vmatpush1.msra.mxu0 0.0
        %1863 = vmatprep.subr.mxu0 0.0
        %1864 = vmatpush1.msra.mxu0 0.0
        %1865 = vmatprep.subr.mxu0 0.0
        %1866 = vmatpush1.msra.mxu0 0.0
        %1867 = vmatprep.subr.mxu0 0.0
        %1868 = vmatpush1.msra.mxu0 0.0
        %1869 = vmatprep.subr.mxu0 0.0
        %1870 = vmatpush1.msra.mxu0 0.0
        %1871 = vmatprep.subr.mxu0 0.0
        %1872 = vmatpush1.msra.mxu0 0.0
        %1873 = vmatprep.subr.mxu0 0.0
        %1874 = vmatpush1.msra.mxu0 0.0
        %1875 = vmatprep.subr.mxu0 0.0
        %1876 = vmatpush1.msra.mxu0 0.0
        %1877 = vmatprep.subr.mxu0 0.0
        %1878 = vmatpush1.msra.mxu0 0.0
        %1879 = vmatprep.subr.mxu0 0.0
        %1880 = vmatpush1.msra.mxu0 0.0
        %1881 = vmatprep.subr.mxu0 0.0
        %1882 = vmatpush1.msra.mxu0 0.0
        %1883 = vmatprep.subr.mxu0 0.0
        %1884 = vmatpush1.msra.mxu0 0.0
        %1885 = vmatprep.subr.mxu0 0.0
        %1886 = vmatpush1.msra.mxu0 0.0
        %1887 = vmatprep.subr.mxu0 0.0
        %1888 = vmatpush1.msra.mxu0 0.0
        %1889 = vmatprep.subr.mxu0 0.0
        %1890 = vmatpush1.msra.mxu0 0.0
        %1891 = vmatprep.subr.mxu0 0.0
        %1892 = vmatpush1.msra.mxu0 0.0
        %1893 = vmatprep.subr.mxu0 0.0
        %1894 = vmatpush1.msra.mxu0 0.0
        %1895 = vmatprep.subr.mxu0 0.0
        %1896 = vmatpush1.msra.mxu0 0.0
        %1897 = vmatprep.subr.mxu0 0.0
        %1898 = vmatpush1.msra.mxu0 0.0
        %1899 = vmatprep.subr.mxu0 0.0
        %1900 = vmatpush1.msra.mxu0 0.0
        %1901 = vmatprep.subr.mxu0 0.0
        %1902 = vmatpush1.msra.mxu0 0.0
        %1903 = vmatprep.subr.mxu0 0.0
        %1904 = vmatpush1.msra.mxu0 0.0
        %1905 = vmatprep.subr.mxu0 0.0
        %1906 = vmatpush1.msra.mxu0 0.0
        %1907 = vmatprep.mubr.f32.mxu0 0.0
        %1908 = vmatmul.mubr.f32.gmra.mrb[0].mxu0 %v1841
        %v1909 = vpop.f32.mrb[0].mxu0
        %v1910 = vadd.f32 %v1838, %v1909
        %v1911 = vpop.f32.mrb[0].mxu0
        %1912 = vdwg.mxu0
        %1914 = vrot.lane.b32.xlu0 %v1817, 120
        %v1915 = vpop.permute.xlu0 %1914
        %1917 = vrot.lane.b32.xlu0 %v1817, 112
        %v1918 = vpop.permute.xlu0 %1917
        %1920 = vrot.lane.b32.xlu0 %v1817, 104
        %v1921 = vpop.permute.xlu0 %1920
        %v1923 = vcombine.low %v1817, %v1918
        %v1924 = vcombine.high %v1817, %v1918
        %v1926 = vunpack.c.l.s4 1983009808
        %v1927 = vunpack.c.0.s8 %v1926
        %v1928 = vlaneseq
        %v1929 = vshrl.u32 %v1928, 7
        %v1930 = vsub.s32 %v1927, %v1929
        %v1931 = vrot.slane %v1923, %v1930
        %v1933 = vunpack.c.l.s4 1983009808
        %v1934 = vunpack.c.0.s8 %v1933
        %v1935 = vlaneseq
        %v1936 = vshrl.u32 %v1935, 7
        %v1937 = vsub.s32 %v1934, %v1936
        %v1938 = vrot.slane %v1924, %v1937
        %v1939 = vcombine.low %v1915, %v1921
        %v1940 = vcombine.high %v1915, %v1921
        %v1942 = vunpack.c.l.s4 1983009808
        %v1943 = vunpack.c.0.s8 %v1942
        %v1944 = vlaneseq
        %v1945 = vshrl.u32 %v1944, 7
        %v1946 = vsub.s32 %v1943, %v1945
        %v1947 = vrot.slane %v1939, %v1946
        %v1949 = vunpack.c.l.s4 1983009808
        %v1950 = vunpack.c.0.s8 %v1949
        %v1951 = vlaneseq
        %v1952 = vshrl.u32 %v1951, 7
        %v1953 = vsub.s32 %v1950, %v1952
        %v1954 = vrot.slane %v1940, %v1953
        %v1955 = vcombine.low %v1931, %v1947
        %v1956 = vcombine.high %v1931, %v1947
        %v1958 = vunpack.c.l.s4 1934713408
        %v1959 = vunpack.c.0.s8 %v1958
        %v1960 = vlaneseq
        %v1961 = vshrl.u32 %v1960, 7
        %v1962 = vsub.s32 %v1959, %v1961
        %v1963 = vrot.slane %v1955, %v1962
        %v1965 = vunpack.c.l.s4 1934713408
        %v1966 = vunpack.c.0.s8 %v1965
        %v1967 = vlaneseq
        %v1968 = vshrl.u32 %v1967, 7
        %v1969 = vsub.s32 %v1966, %v1968
        %v1970 = vrot.slane %v1956, %v1969
        %v1971 = vcombine.low %v1938, %v1954
        %v1972 = vcombine.high %v1938, %v1954
        %v1974 = vunpack.c.l.s4 1934713408
        %v1975 = vunpack.c.0.s8 %v1974
        %v1976 = vlaneseq
        %v1977 = vshrl.u32 %v1976, 7
        %v1978 = vsub.s32 %v1975, %v1977
        %v1979 = vrot.slane %v1971, %v1978
        %v1981 = vunpack.c.l.s4 1934713408
        %v1982 = vunpack.c.0.s8 %v1981
        %v1983 = vlaneseq
        %v1984 = vshrl.u32 %v1983, 7
        %v1985 = vsub.s32 %v1982, %v1984
        %v1986 = vrot.slane %v1972, %v1985
        %v1987 = vcombine.high %v1963, 0.0
        %v1988 = vcombine.high %v1970, 0.0
        %v1989 = vcombine.high %v1979, 0.0
        %v1990 = vcombine.high %v1986, 0.0
        %v1991 = vcombine.low %v1963, %v1970
        %v1993 = vunpack.c.l.s4 1983009808
        %v1994 = vunpack.c.0.s8 %v1993
        %v1995 = vlaneseq
        %v1996 = vshrl.u32 %v1995, 7
        %v1997 = vsub.s32 %v1994, %v1996
        %v1998 = vrot.slane %v1991, %v1997
        %v1999 = vcombine.low %v1987, %v1988
        %v2001 = vunpack.c.l.s4 1983009808
        %v2002 = vunpack.c.0.s8 %v2001
        %v2003 = vlaneseq
        %v2004 = vshrl.u32 %v2003, 7
        %v2005 = vsub.s32 %v2002, %v2004
        %v2006 = vrot.slane %v1999, %v2005
        %v2007 = vcombine.low %v1979, %v1986
        %v2009 = vunpack.c.l.s4 1983009808
        %v2010 = vunpack.c.0.s8 %v2009
        %v2011 = vlaneseq
        %v2012 = vshrl.u32 %v2011, 7
        %v2013 = vsub.s32 %v2010, %v2012
        %v2014 = vrot.slane %v2007, %v2013
        %v2015 = vcombine.low %v1989, %v1990
        %v2017 = vunpack.c.l.s4 1983009808
        %v2018 = vunpack.c.0.s8 %v2017
        %v2019 = vlaneseq
        %v2020 = vshrl.u32 %v2019, 7
        %v2021 = vsub.s32 %v2018, %v2020
        %v2022 = vrot.slane %v2015, %v2021
        %v2023 = vcombine.low %v1998, %v2006
        %v2024 = vcombine.high %v1998, %v2006
        %v2026 = vunpack.c.l.s4 1934713408
        %v2027 = vunpack.c.0.s8 %v2026
        %v2028 = vlaneseq
        %v2029 = vshrl.u32 %v2028, 7
        %v2030 = vsub.s32 %v2027, %v2029
        %v2031 = vrot.slane %v2023, %v2030
        %v2033 = vunpack.c.l.s4 1934713408
        %v2034 = vunpack.c.0.s8 %v2033
        %v2035 = vlaneseq
        %v2036 = vshrl.u32 %v2035, 7
        %v2037 = vsub.s32 %v2034, %v2036
        %v2038 = vrot.slane %v2024, %v2037
        %v2039 = vcombine.low %v2014, %v2022
        %v2040 = vcombine.high %v2014, %v2022
        %v2042 = vunpack.c.l.s4 1934713408
        %v2043 = vunpack.c.0.s8 %v2042
        %v2044 = vlaneseq
        %v2045 = vshrl.u32 %v2044, 7
        %v2046 = vsub.s32 %v2043, %v2045
        %v2047 = vrot.slane %v2039, %v2046
        %v2049 = vunpack.c.l.s4 1934713408
        %v2050 = vunpack.c.0.s8 %v2049
        %v2051 = vlaneseq
        %v2052 = vshrl.u32 %v2051, 7
        %v2053 = vsub.s32 %v2050, %v2052
        %v2054 = vrot.slane %v2040, %v2053
        %v2055 = vcombine.low %v2031, %v2047
        %v2056 = vcombine.high %v2031, %v2047
        %v2057 = vcombine.low %v2038, %v2054
        %v2058 = vcombine.high %v2038, %v2054
        %2060 = vrot.lane.b32.xlu0 %v1910, 120
        %v2061 = vpop.permute.xlu0 %2060
        %2063 = vrot.lane.b32.xlu0 %v1910, 112
        %v2064 = vpop.permute.xlu0 %2063
        %2066 = vrot.lane.b32.xlu0 %v1910, 104
        %v2067 = vpop.permute.xlu0 %2066
        %v2069 = vcombine.low %v1910, %v2064
        %v2070 = vcombine.high %v1910, %v2064
        %v2072 = vunpack.c.l.s4 1983009808
        %v2073 = vunpack.c.0.s8 %v2072
        %v2074 = vlaneseq
        %v2075 = vshrl.u32 %v2074, 7
        %v2076 = vsub.s32 %v2073, %v2075
        %v2077 = vrot.slane %v2069, %v2076
        %v2079 = vunpack.c.l.s4 1983009808
        %v2080 = vunpack.c.0.s8 %v2079
        %v2081 = vlaneseq
        %v2082 = vshrl.u32 %v2081, 7
        %v2083 = vsub.s32 %v2080, %v2082
        %v2084 = vrot.slane %v2070, %v2083
        %v2085 = vcombine.low %v2061, %v2067
        %v2086 = vcombine.high %v2061, %v2067
        %v2088 = vunpack.c.l.s4 1983009808
        %v2089 = vunpack.c.0.s8 %v2088
        %v2090 = vlaneseq
        %v2091 = vshrl.u32 %v2090, 7
        %v2092 = vsub.s32 %v2089, %v2091
        %v2093 = vrot.slane %v2085, %v2092
        %v2095 = vunpack.c.l.s4 1983009808
        %v2096 = vunpack.c.0.s8 %v2095
        %v2097 = vlaneseq
        %v2098 = vshrl.u32 %v2097, 7
        %v2099 = vsub.s32 %v2096, %v2098
        %v2100 = vrot.slane %v2086, %v2099
        %v2101 = vcombine.low %v2077, %v2093
        %v2102 = vcombine.high %v2077, %v2093
        %v2104 = vunpack.c.l.s4 1934713408
        %v2105 = vunpack.c.0.s8 %v2104
        %v2106 = vlaneseq
        %v2107 = vshrl.u32 %v2106, 7
        %v2108 = vsub.s32 %v2105, %v2107
        %v2109 = vrot.slane %v2101, %v2108
        %v2111 = vunpack.c.l.s4 1934713408
        %v2112 = vunpack.c.0.s8 %v2111
        %v2113 = vlaneseq
        %v2114 = vshrl.u32 %v2113, 7
        %v2115 = vsub.s32 %v2112, %v2114
        %v2116 = vrot.slane %v2102, %v2115
        %v2117 = vcombine.low %v2084, %v2100
        %v2118 = vcombine.high %v2084, %v2100
        %v2120 = vunpack.c.l.s4 1934713408
        %v2121 = vunpack.c.0.s8 %v2120
        %v2122 = vlaneseq
        %v2123 = vshrl.u32 %v2122, 7
        %v2124 = vsub.s32 %v2121, %v2123
        %v2125 = vrot.slane %v2117, %v2124
        %v2127 = vunpack.c.l.s4 1934713408
        %v2128 = vunpack.c.0.s8 %v2127
        %v2129 = vlaneseq
        %v2130 = vshrl.u32 %v2129, 7
        %v2131 = vsub.s32 %v2128, %v2130
        %v2132 = vrot.slane %v2118, %v2131
        %v2133 = vcombine.high %v2109, 0.0
        %v2134 = vcombine.high %v2116, 0.0
        %v2135 = vcombine.high %v2125, 0.0
        %v2136 = vcombine.high %v2132, 0.0
        %v2137 = vcombine.low %v2109, %v2116
        %v2139 = vunpack.c.l.s4 1983009808
        %v2140 = vunpack.c.0.s8 %v2139
        %v2141 = vlaneseq
        %v2142 = vshrl.u32 %v2141, 7
        %v2143 = vsub.s32 %v2140, %v2142
        %v2144 = vrot.slane %v2137, %v2143
        %v2145 = vcombine.low %v2133, %v2134
        %v2147 = vunpack.c.l.s4 1983009808
        %v2148 = vunpack.c.0.s8 %v2147
        %v2149 = vlaneseq
        %v2150 = vshrl.u32 %v2149, 7
        %v2151 = vsub.s32 %v2148, %v2150
        %v2152 = vrot.slane %v2145, %v2151
        %v2153 = vcombine.low %v2125, %v2132
        %v2155 = vunpack.c.l.s4 1983009808
        %v2156 = vunpack.c.0.s8 %v2155
        %v2157 = vlaneseq
        %v2158 = vshrl.u32 %v2157, 7
        %v2159 = vsub.s32 %v2156, %v2158
        %v2160 = vrot.slane %v2153, %v2159
        %v2161 = vcombine.low %v2135, %v2136
        %v2163 = vunpack.c.l.s4 1983009808
        %v2164 = vunpack.c.0.s8 %v2163
        %v2165 = vlaneseq
        %v2166 = vshrl.u32 %v2165, 7
        %v2167 = vsub.s32 %v2164, %v2166
        %v2168 = vrot.slane %v2161, %v2167
        %v2169 = vcombine.low %v2144, %v2152
        %v2170 = vcombine.high %v2144, %v2152
        %v2172 = vunpack.c.l.s4 1934713408
        %v2173 = vunpack.c.0.s8 %v2172
        %v2174 = vlaneseq
        %v2175 = vshrl.u32 %v2174, 7
        %v2176 = vsub.s32 %v2173, %v2175
        %v2177 = vrot.slane %v2169, %v2176
        %v2179 = vunpack.c.l.s4 1934713408
        %v2180 = vunpack.c.0.s8 %v2179
        %v2181 = vlaneseq
        %v2182 = vshrl.u32 %v2181, 7
        %v2183 = vsub.s32 %v2180, %v2182
        %v2184 = vrot.slane %v2170, %v2183
        %v2185 = vcombine.low %v2160, %v2168
        %v2186 = vcombine.high %v2160, %v2168
        %v2188 = vunpack.c.l.s4 1934713408
        %v2189 = vunpack.c.0.s8 %v2188
        %v2190 = vlaneseq
        %v2191 = vshrl.u32 %v2190, 7
        %v2192 = vsub.s32 %v2189, %v2191
        %v2193 = vrot.slane %v2185, %v2192
        %v2195 = vunpack.c.l.s4 1934713408
        %v2196 = vunpack.c.0.s8 %v2195
        %v2197 = vlaneseq
        %v2198 = vshrl.u32 %v2197, 7
        %v2199 = vsub.s32 %v2196, %v2198
        %v2200 = vrot.slane %v2186, %v2199
        %v2201 = vcombine.low %v2177, %v2193
        %v2202 = vcombine.high %v2177, %v2193
        %v2203 = vcombine.low %v2184, %v2200
        %v2204 = vcombine.high %v2184, %v2200
        %2205 = vrot.lane.b32.xlu0 %v1910, 96
        %v2206 = vpop.permute.xlu0 %2205
        %2207 = vrot.lane.b32.xlu0 %v2061, 96
        %v2208 = vpop.permute.xlu0 %2207
        %2209 = vrot.lane.b32.xlu0 %v2064, 96
        %v2210 = vpop.permute.xlu0 %2209
        %2211 = vrot.lane.b32.xlu0 %v2067, 96
        %v2212 = vpop.permute.xlu0 %2211
        %v2217 = vcombine.low %v2206, %v2210
        %v2218 = vcombine.high %v2206, %v2210
        %v2220 = vunpack.c.l.s4 1983009808
        %v2221 = vunpack.c.0.s8 %v2220
        %v2222 = vlaneseq
        %v2223 = vshrl.u32 %v2222, 7
        %v2224 = vsub.s32 %v2221, %v2223
        %v2225 = vrot.slane %v2217, %v2224
        %v2227 = vunpack.c.l.s4 1983009808
        %v2228 = vunpack.c.0.s8 %v2227
        %v2229 = vlaneseq
        %v2230 = vshrl.u32 %v2229, 7
        %v2231 = vsub.s32 %v2228, %v2230
        %v2232 = vrot.slane %v2218, %v2231
        %v2233 = vcombine.low %v2208, %v2212
        %v2234 = vcombine.high %v2208, %v2212
        %v2236 = vunpack.c.l.s4 1983009808
        %v2237 = vunpack.c.0.s8 %v2236
        %v2238 = vlaneseq
        %v2239 = vshrl.u32 %v2238, 7
        %v2240 = vsub.s32 %v2237, %v2239
        %v2241 = vrot.slane %v2233, %v2240
        %v2243 = vunpack.c.l.s4 1983009808
        %v2244 = vunpack.c.0.s8 %v2243
        %v2245 = vlaneseq
        %v2246 = vshrl.u32 %v2245, 7
        %v2247 = vsub.s32 %v2244, %v2246
        %v2248 = vrot.slane %v2234, %v2247
        %v2249 = vcombine.low %v2225, %v2241
        %v2250 = vcombine.high %v2225, %v2241
        %v2252 = vunpack.c.l.s4 1934713408
        %v2253 = vunpack.c.0.s8 %v2252
        %v2254 = vlaneseq
        %v2255 = vshrl.u32 %v2254, 7
        %v2256 = vsub.s32 %v2253, %v2255
        %v2257 = vrot.slane %v2249, %v2256
        %v2259 = vunpack.c.l.s4 1934713408
        %v2260 = vunpack.c.0.s8 %v2259
        %v2261 = vlaneseq
        %v2262 = vshrl.u32 %v2261, 7
        %v2263 = vsub.s32 %v2260, %v2262
        %v2264 = vrot.slane %v2250, %v2263
        %v2265 = vcombine.low %v2232, %v2248
        %v2266 = vcombine.high %v2232, %v2248
        %v2268 = vunpack.c.l.s4 1934713408
        %v2269 = vunpack.c.0.s8 %v2268
        %v2270 = vlaneseq
        %v2271 = vshrl.u32 %v2270, 7
        %v2272 = vsub.s32 %v2269, %v2271
        %v2273 = vrot.slane %v2265, %v2272
        %v2275 = vunpack.c.l.s4 1934713408
        %v2276 = vunpack.c.0.s8 %v2275
        %v2277 = vlaneseq
        %v2278 = vshrl.u32 %v2277, 7
        %v2279 = vsub.s32 %v2276, %v2278
        %v2280 = vrot.slane %v2266, %v2279
        %v2281 = vcombine.high %v2257, 0.0
        %v2282 = vcombine.high %v2264, 0.0
        %v2283 = vcombine.high %v2273, 0.0
        %v2284 = vcombine.high %v2280, 0.0
        %v2285 = vcombine.low %v2257, %v2264
        %v2287 = vunpack.c.l.s4 1983009808
        %v2288 = vunpack.c.0.s8 %v2287
        %v2289 = vlaneseq
        %v2290 = vshrl.u32 %v2289, 7
        %v2291 = vsub.s32 %v2288, %v2290
        %v2292 = vrot.slane %v2285, %v2291
        %v2293 = vcombine.low %v2281, %v2282
        %v2295 = vunpack.c.l.s4 1983009808
        %v2296 = vunpack.c.0.s8 %v2295
        %v2297 = vlaneseq
        %v2298 = vshrl.u32 %v2297, 7
        %v2299 = vsub.s32 %v2296, %v2298
        %v2300 = vrot.slane %v2293, %v2299
        %v2301 = vcombine.low %v2273, %v2280
        %v2303 = vunpack.c.l.s4 1983009808
        %v2304 = vunpack.c.0.s8 %v2303
        %v2305 = vlaneseq
        %v2306 = vshrl.u32 %v2305, 7
        %v2307 = vsub.s32 %v2304, %v2306
        %v2308 = vrot.slane %v2301, %v2307
        %v2309 = vcombine.low %v2283, %v2284
        %v2311 = vunpack.c.l.s4 1983009808
        %v2312 = vunpack.c.0.s8 %v2311
        %v2313 = vlaneseq
        %v2314 = vshrl.u32 %v2313, 7
        %v2315 = vsub.s32 %v2312, %v2314
        %v2316 = vrot.slane %v2309, %v2315
        %v2317 = vcombine.low %v2292, %v2300
        %v2318 = vcombine.high %v2292, %v2300
        %v2320 = vunpack.c.l.s4 1934713408
        %v2321 = vunpack.c.0.s8 %v2320
        %v2322 = vlaneseq
        %v2323 = vshrl.u32 %v2322, 7
        %v2324 = vsub.s32 %v2321, %v2323
        %v2325 = vrot.slane %v2317, %v2324
        %v2327 = vunpack.c.l.s4 1934713408
        %v2328 = vunpack.c.0.s8 %v2327
        %v2329 = vlaneseq
        %v2330 = vshrl.u32 %v2329, 7
        %v2331 = vsub.s32 %v2328, %v2330
        %v2332 = vrot.slane %v2318, %v2331
        %v2333 = vcombine.low %v2308, %v2316
        %v2334 = vcombine.high %v2308, %v2316
        %v2336 = vunpack.c.l.s4 1934713408
        %v2337 = vunpack.c.0.s8 %v2336
        %v2338 = vlaneseq
        %v2339 = vshrl.u32 %v2338, 7
        %v2340 = vsub.s32 %v2337, %v2339
        %v2341 = vrot.slane %v2333, %v2340
        %v2343 = vunpack.c.l.s4 1934713408
        %v2344 = vunpack.c.0.s8 %v2343
        %v2345 = vlaneseq
        %v2346 = vshrl.u32 %v2345, 7
        %v2347 = vsub.s32 %v2344, %v2346
        %v2348 = vrot.slane %v2334, %v2347
        %v2349 = vcombine.low %v2325, %v2341
        %v2350 = vcombine.high %v2325, %v2341
        %v2351 = vcombine.low %v2332, %v2348
        %v2352 = vcombine.high %v2332, %v2348
        %v2354 = vsel %vm811, %v2055, 0
        %v2357 = vsel %vm811, %v2201, 0
        %2359 = vmatprep.subr.mxu0 0.0
        %2360 = vmatpush1.xpose.msra.mxu0 %v2357
        %2361 = vmatprep.subr.mxu0 0.0
        %2362 = vmatpush1.xpose.msra.mxu0 0.0
        %2363 = vmatprep.subr.mxu0 0.0
        %2364 = vmatpush1.xpose.msra.mxu0 0.0
        %2365 = vmatprep.subr.mxu0 0.0
        %2366 = vmatpush1.xpose.msra.mxu0 0.0
        %2367 = vmatprep.subr.mxu0 0.0
        %2368 = vmatpush1.xpose.msra.mxu0 0.0
        %2369 = vmatprep.subr.mxu0 0.0
        %2370 = vmatpush1.xpose.msra.mxu0 0.0
        %2371 = vmatprep.subr.mxu0 0.0
        %2372 = vmatpush1.xpose.msra.mxu0 0.0
        %2373 = vmatprep.subr.mxu0 0.0
        %2374 = vmatpush1.xpose.msra.mxu0 0.0
        %2375 = vmatprep.subr.mxu0 0.0
        %2376 = vmatpush1.xpose.msra.mxu0 0.0
        %2377 = vmatprep.subr.mxu0 0.0
        %2378 = vmatpush1.xpose.msra.mxu0 0.0
        %2379 = vmatprep.subr.mxu0 0.0
        %2380 = vmatpush1.xpose.msra.mxu0 0.0
        %2381 = vmatprep.subr.mxu0 0.0
        %2382 = vmatpush1.xpose.msra.mxu0 0.0
        %2383 = vmatprep.subr.mxu0 0.0
        %2384 = vmatpush1.xpose.msra.mxu0 0.0
        %2385 = vmatprep.subr.mxu0 0.0
        %2386 = vmatpush1.xpose.msra.mxu0 0.0
        %2387 = vmatprep.subr.mxu0 0.0
        %2388 = vmatpush1.xpose.msra.mxu0 0.0
        %2389 = vmatprep.subr.mxu0 0.0
        %2390 = vmatpush1.xpose.msra.mxu0 0.0
        %2391 = vmatprep.subr.mxu0 0.0
        %2392 = vmatpush1.xpose.msra.mxu0 0.0
        %2393 = vmatprep.subr.mxu0 0.0
        %2394 = vmatpush1.xpose.msra.mxu0 0.0
        %2395 = vmatprep.subr.mxu0 0.0
        %2396 = vmatpush1.xpose.msra.mxu0 0.0
        %2397 = vmatprep.subr.mxu0 0.0
        %2398 = vmatpush1.xpose.msra.mxu0 0.0
        %2399 = vmatprep.subr.mxu0 0.0
        %2400 = vmatpush1.xpose.msra.mxu0 0.0
        %2401 = vmatprep.subr.mxu0 0.0
        %2402 = vmatpush1.xpose.msra.mxu0 0.0
        %2403 = vmatprep.subr.mxu0 0.0
        %2404 = vmatpush1.xpose.msra.mxu0 0.0
        %2405 = vmatprep.subr.mxu0 0.0
        %2406 = vmatpush1.xpose.msra.mxu0 0.0
        %2407 = vmatprep.subr.mxu0 0.0
        %2408 = vmatpush1.xpose.msra.mxu0 0.0
        %2409 = vmatprep.subr.mxu0 0.0
        %2410 = vmatpush1.xpose.msra.mxu0 0.0
        %2411 = vmatprep.subr.mxu0 0.0
        %2412 = vmatpush1.xpose.msra.mxu0 0.0
        %2413 = vmatprep.subr.mxu0 0.0
        %2414 = vmatpush1.xpose.msra.mxu0 0.0
        %2415 = vmatprep.subr.mxu0 0.0
        %2416 = vmatpush1.xpose.msra.mxu0 0.0
        %2417 = vmatprep.subr.mxu0 0.0
        %2418 = vmatpush1.xpose.msra.mxu0 0.0
        %2419 = vmatprep.subr.mxu0 0.0
        %2420 = vmatpush1.xpose.msra.mxu0 0.0
        %2421 = vmatprep.subr.mxu0 0.0
        %2422 = vmatpush1.xpose.msra.mxu0 0.0
        %2423 = vmatprep.mubr.f32.mxu0 0.0
        %2424 = vmatmul.mubr.f32.gmra.mrb[0].mxu0 %v2354
        %v2425 = vpop.f32.mrb[0].mxu0
        %v2426 = vadd.f32 0.0, %v2425
        %v2427 = vpop.f32.mrb[0].mxu0
        %2428 = vdwg.mxu0
        %v2430 = vsel %vm811, %v2056, 0
        %v2433 = vsel %vm811, %v2202, 0
        %2435 = vmatprep.subr.mxu0 0.0
        %2436 = vmatpush1.xpose.msra.mxu0 %v2433
        %2437 = vmatprep.subr.mxu0 0.0
        %2438 = vmatpush1.xpose.msra.mxu0 0.0
        %2439 = vmatprep.subr.mxu0 0.0
        %2440 = vmatpush1.xpose.msra.mxu0 0.0
        %2441 = vmatprep.subr.mxu0 0.0
        %2442 = vmatpush1.xpose.msra.mxu0 0.0
        %2443 = vmatprep.subr.mxu0 0.0
        %2444 = vmatpush1.xpose.msra.mxu0 0.0
        %2445 = vmatprep.subr.mxu0 0.0
        %2446 = vmatpush1.xpose.msra.mxu0 0.0
        %2447 = vmatprep.subr.mxu0 0.0
        %2448 = vmatpush1.xpose.msra.mxu0 0.0
        %2449 = vmatprep.subr.mxu0 0.0
        %2450 = vmatpush1.xpose.msra.mxu0 0.0
        %2451 = vmatprep.subr.mxu0 0.0
        %2452 = vmatpush1.xpose.msra.mxu0 0.0
        %2453 = vmatprep.subr.mxu0 0.0
        %2454 = vmatpush1.xpose.msra.mxu0 0.0
        %2455 = vmatprep.subr.mxu0 0.0
        %2456 = vmatpush1.xpose.msra.mxu0 0.0
        %2457 = vmatprep.subr.mxu0 0.0
        %2458 = vmatpush1.xpose.msra.mxu0 0.0
        %2459 = vmatprep.subr.mxu0 0.0
        %2460 = vmatpush1.xpose.msra.mxu0 0.0
        %2461 = vmatprep.subr.mxu0 0.0
        %2462 = vmatpush1.xpose.msra.mxu0 0.0
        %2463 = vmatprep.subr.mxu0 0.0
        %2464 = vmatpush1.xpose.msra.mxu0 0.0
        %2465 = vmatprep.subr.mxu0 0.0
        %2466 = vmatpush1.xpose.msra.mxu0 0.0
        %2467 = vmatprep.subr.mxu0 0.0
        %2468 = vmatpush1.xpose.msra.mxu0 0.0
        %2469 = vmatprep.subr.mxu0 0.0
        %2470 = vmatpush1.xpose.msra.mxu0 0.0
        %2471 = vmatprep.subr.mxu0 0.0
        %2472 = vmatpush1.xpose.msra.mxu0 0.0
        %2473 = vmatprep.subr.mxu0 0.0
        %2474 = vmatpush1.xpose.msra.mxu0 0.0
        %2475 = vmatprep.subr.mxu0 0.0
        %2476 = vmatpush1.xpose.msra.mxu0 0.0
        %2477 = vmatprep.subr.mxu0 0.0
        %2478 = vmatpush1.xpose.msra.mxu0 0.0
        %2479 = vmatprep.subr.mxu0 0.0
        %2480 = vmatpush1.xpose.msra.mxu0 0.0
        %2481 = vmatprep.subr.mxu0 0.0
        %2482 = vmatpush1.xpose.msra.mxu0 0.0
        %2483 = vmatprep.subr.mxu0 0.0
        %2484 = vmatpush1.xpose.msra.mxu0 0.0
        %2485 = vmatprep.subr.mxu0 0.0
        %2486 = vmatpush1.xpose.msra.mxu0 0.0
        %2487 = vmatprep.subr.mxu0 0.0
        %2488 = vmatpush1.xpose.msra.mxu0 0.0
        %2489 = vmatprep.subr.mxu0 0.0
        %2490 = vmatpush1.xpose.msra.mxu0 0.0
        %2491 = vmatprep.subr.mxu0 0.0
        %2492 = vmatpush1.xpose.msra.mxu0 0.0
        %2493 = vmatprep.subr.mxu0 0.0
        %2494 = vmatpush1.xpose.msra.mxu0 0.0
        %2495 = vmatprep.subr.mxu0 0.0
        %2496 = vmatpush1.xpose.msra.mxu0 0.0
        %2497 = vmatprep.subr.mxu0 0.0
        %2498 = vmatpush1.xpose.msra.mxu0 0.0
        %2499 = vmatprep.mubr.f32.mxu0 0.0
        %2500 = vmatmul.mubr.f32.gmra.mrb[0].mxu0 %v2430
        %v2501 = vpop.f32.mrb[0].mxu0
        %v2502 = vadd.f32 0.0, %v2501
        %v2503 = vpop.f32.mrb[0].mxu0
        %2504 = vdwg.mxu0
        %v2506 = vsel %vm811, %v2057, 0
        %v2509 = vsel %vm811, %v2203, 0
        %2511 = vmatprep.subr.mxu0 0.0
        %2512 = vmatpush1.xpose.msra.mxu0 %v2509
        %2513 = vmatprep.subr.mxu0 0.0
        %2514 = vmatpush1.xpose.msra.mxu0 0.0
        %2515 = vmatprep.subr.mxu0 0.0
        %2516 = vmatpush1.xpose.msra.mxu0 0.0
        %2517 = vmatprep.subr.mxu0 0.0
        %2518 = vmatpush1.xpose.msra.mxu0 0.0
        %2519 = vmatprep.subr.mxu0 0.0
        %2520 = vmatpush1.xpose.msra.mxu0 0.0
        %2521 = vmatprep.subr.mxu0 0.0
        %2522 = vmatpush1.xpose.msra.mxu0 0.0
        %2523 = vmatprep.subr.mxu0 0.0
        %2524 = vmatpush1.xpose.msra.mxu0 0.0
        %2525 = vmatprep.subr.mxu0 0.0
        %2526 = vmatpush1.xpose.msra.mxu0 0.0
        %2527 = vmatprep.subr.mxu0 0.0
        %2528 = vmatpush1.xpose.msra.mxu0 0.0
        %2529 = vmatprep.subr.mxu0 0.0
        %2530 = vmatpush1.xpose.msra.mxu0 0.0
        %2531 = vmatprep.subr.mxu0 0.0
        %2532 = vmatpush1.xpose.msra.mxu0 0.0
        %2533 = vmatprep.subr.mxu0 0.0
        %2534 = vmatpush1.xpose.msra.mxu0 0.0
        %2535 = vmatprep.subr.mxu0 0.0
        %2536 = vmatpush1.xpose.msra.mxu0 0.0
        %2537 = vmatprep.subr.mxu0 0.0
        %2538 = vmatpush1.xpose.msra.mxu0 0.0
        %2539 = vmatprep.subr.mxu0 0.0
        %2540 = vmatpush1.xpose.msra.mxu0 0.0
        %2541 = vmatprep.subr.mxu0 0.0
        %2542 = vmatpush1.xpose.msra.mxu0 0.0
        %2543 = vmatprep.subr.mxu0 0.0
        %2544 = vmatpush1.xpose.msra.mxu0 0.0
        %2545 = vmatprep.subr.mxu0 0.0
        %2546 = vmatpush1.xpose.msra.mxu0 0.0
        %2547 = vmatprep.subr.mxu0 0.0
        %2548 = vmatpush1.xpose.msra.mxu0 0.0
        %2549 = vmatprep.subr.mxu0 0.0
        %2550 = vmatpush1.xpose.msra.mxu0 0.0
        %2551 = vmatprep.subr.mxu0 0.0
        %2552 = vmatpush1.xpose.msra.mxu0 0.0
        %2553 = vmatprep.subr.mxu0 0.0
        %2554 = vmatpush1.xpose.msra.mxu0 0.0
        %2555 = vmatprep.subr.mxu0 0.0
        %2556 = vmatpush1.xpose.msra.mxu0 0.0
        %2557 = vmatprep.subr.mxu0 0.0
        %2558 = vmatpush1.xpose.msra.mxu0 0.0
        %2559 = vmatprep.subr.mxu0 0.0
        %2560 = vmatpush1.xpose.msra.mxu0 0.0
        %2561 = vmatprep.subr.mxu0 0.0
        %2562 = vmatpush1.xpose.msra.mxu0 0.0
        %2563 = vmatprep.subr.mxu0 0.0
        %2564 = vmatpush1.xpose.msra.mxu0 0.0
        %2565 = vmatprep.subr.mxu0 0.0
        %2566 = vmatpush1.xpose.msra.mxu0 0.0
        %2567 = vmatprep.subr.mxu0 0.0
        %2568 = vmatpush1.xpose.msra.mxu0 0.0
        %2569 = vmatprep.subr.mxu0 0.0
        %2570 = vmatpush1.xpose.msra.mxu0 0.0
        %2571 = vmatprep.subr.mxu0 0.0
        %2572 = vmatpush1.xpose.msra.mxu0 0.0
        %2573 = vmatprep.subr.mxu0 0.0
        %2574 = vmatpush1.xpose.msra.mxu0 0.0
        %2575 = vmatprep.mubr.f32.mxu0 0.0
        %2576 = vmatmul.mubr.f32.gmra.mrb[0].mxu0 %v2506
        %v2577 = vpop.f32.mrb[0].mxu0
        %v2578 = vadd.f32 0.0, %v2577
        %v2579 = vpop.f32.mrb[0].mxu0
        %2580 = vdwg.mxu0
        %v2582 = vsel %vm811, %v2058, 0
        %v2585 = vsel %vm811, %v2204, 0
        %2587 = vmatprep.subr.mxu0 0.0
        %2588 = vmatpush1.xpose.msra.mxu0 %v2585
        %2589 = vmatprep.subr.mxu0 0.0
        %2590 = vmatpush1.xpose.msra.mxu0 0.0
        %2591 = vmatprep.subr.mxu0 0.0
        %2592 = vmatpush1.xpose.msra.mxu0 0.0
        %2593 = vmatprep.subr.mxu0 0.0
        %2594 = vmatpush1.xpose.msra.mxu0 0.0
        %2595 = vmatprep.subr.mxu0 0.0
        %2596 = vmatpush1.xpose.msra.mxu0 0.0
        %2597 = vmatprep.subr.mxu0 0.0
        %2598 = vmatpush1.xpose.msra.mxu0 0.0
        %2599 = vmatprep.subr.mxu0 0.0
        %2600 = vmatpush1.xpose.msra.mxu0 0.0
        %2601 = vmatprep.subr.mxu0 0.0
        %2602 = vmatpush1.xpose.msra.mxu0 0.0
        %2603 = vmatprep.subr.mxu0 0.0
        %2604 = vmatpush1.xpose.msra.mxu0 0.0
        %2605 = vmatprep.subr.mxu0 0.0
        %2606 = vmatpush1.xpose.msra.mxu0 0.0
        %2607 = vmatprep.subr.mxu0 0.0
        %2608 = vmatpush1.xpose.msra.mxu0 0.0
        %2609 = vmatprep.subr.mxu0 0.0
        %2610 = vmatpush1.xpose.msra.mxu0 0.0
        %2611 = vmatprep.subr.mxu0 0.0
        %2612 = vmatpush1.xpose.msra.mxu0 0.0
        %2613 = vmatprep.subr.mxu0 0.0
        %2614 = vmatpush1.xpose.msra.mxu0 0.0
        %2615 = vmatprep.subr.mxu0 0.0
        %2616 = vmatpush1.xpose.msra.mxu0 0.0
        %2617 = vmatprep.subr.mxu0 0.0
        %2618 = vmatpush1.xpose.msra.mxu0 0.0
        %2619 = vmatprep.subr.mxu0 0.0
        %2620 = vmatpush1.xpose.msra.mxu0 0.0
        %2621 = vmatprep.subr.mxu0 0.0
        %2622 = vmatpush1.xpose.msra.mxu0 0.0
        %2623 = vmatprep.subr.mxu0 0.0
        %2624 = vmatpush1.xpose.msra.mxu0 0.0
        %2625 = vmatprep.subr.mxu0 0.0
        %2626 = vmatpush1.xpose.msra.mxu0 0.0
        %2627 = vmatprep.subr.mxu0 0.0
        %2628 = vmatpush1.xpose.msra.mxu0 0.0
        %2629 = vmatprep.subr.mxu0 0.0
        %2630 = vmatpush1.xpose.msra.mxu0 0.0
        %2631 = vmatprep.subr.mxu0 0.0
        %2632 = vmatpush1.xpose.msra.mxu0 0.0
        %2633 = vmatprep.subr.mxu0 0.0
        %2634 = vmatpush1.xpose.msra.mxu0 0.0
        %2635 = vmatprep.subr.mxu0 0.0
        %2636 = vmatpush1.xpose.msra.mxu0 0.0
        %2637 = vmatprep.subr.mxu0 0.0
        %2638 = vmatpush1.xpose.msra.mxu0 0.0
        %2639 = vmatprep.subr.mxu0 0.0
        %2640 = vmatpush1.xpose.msra.mxu0 0.0
        %2641 = vmatprep.subr.mxu0 0.0
        %2642 = vmatpush1.xpose.msra.mxu0 0.0
        %2643 = vmatprep.subr.mxu0 0.0
        %2644 = vmatpush1.xpose.msra.mxu0 0.0
        %2645 = vmatprep.subr.mxu0 0.0
        %2646 = vmatpush1.xpose.msra.mxu0 0.0
        %2647 = vmatprep.subr.mxu0 0.0
        %2648 = vmatpush1.xpose.msra.mxu0 0.0
        %2649 = vmatprep.subr.mxu0 0.0
        %2650 = vmatpush1.xpose.msra.mxu0 0.0
        %2651 = vmatprep.mubr.f32.mxu0 0.0
        %2652 = vmatmul.mubr.f32.gmra.mrb[0].mxu0 %v2582
        %v2653 = vpop.f32.mrb[0].mxu0
        %v2654 = vadd.f32 0.0, %v2653
        %v2655 = vpop.f32.mrb[0].mxu0
        %2656 = vdwg.mxu0
        %v2657 = vmul.f32 %v2426, 0.35355338
        %v2658 = vmul.f32 %v2502, 0.35355338
        %v2659 = vmul.f32 %v2578, 0.35355338
        %v2660 = vmul.f32 %v2654, 0.35355338
        %2662 = vrot.lane.b32.xlu0 %v285, 120
        %v2663 = vpop.permute.xlu0 %2662
        %v2665 = vadd.f32 %v2657, %v2663
        %v2666 = vadd.f32 %v2658, %v2663
        %v2667 = vadd.f32 %v2659, %v2663
        %v2668 = vadd.f32 %v2660, %v2663
        %v2669 = vsel %vm811, %v2665, -inf
        %2670 = vmax.xlane.f32.xlu0 %v2669
        %v2671 = vpop.xlane.xlu0 %2670
        %v2672 = vsel %vm811, %v2666, -inf
        %2673 = vmax.xlane.f32.xlu0 %v2672
        %v2674 = vpop.xlane.xlu0 %2673
        %v2675 = vsel %vm811, %v2667, -inf
        %2676 = vmax.xlane.f32.xlu0 %v2675
        %v2677 = vpop.xlane.xlu0 %2676
        %v2678 = vsel %vm811, %v2668, -inf
        %2679 = vmax.xlane.f32.xlu0 %v2678
        %v2680 = vpop.xlane.xlu0 %2679
        %v2681 = vsub.f32 %v2665, %v2671
        %v2682 = vsub.f32 %v2666, %v2674
        %v2683 = vsub.f32 %v2667, %v2677
        %v2684 = vsub.f32 %v2668, %v2680
        %v2685 = vmul.f32 %v2681, 1.442695
        %v2686 = vpow.pop %v2685
        %v2687 = vmul.f32 %v2682, 1.442695
        %v2688 = vpow.pop %v2687
        %v2689 = vmul.f32 %v2683, 1.442695
        %v2690 = vpow.pop %v2689
        %v2691 = vmul.f32 %v2684, 1.442695
        %v2692 = vpow.pop %v2691
        %v2693 = vsel %vm811, %v2686, 0.0
        %2694 = vadd.xlane.f32.xlu0 %v2693
        %v2695 = vpop.xlane.xlu0 %2694
        %v2696 = vsel %vm811, %v2688, 0.0
        %2697 = vadd.xlane.f32.xlu0 %v2696
        %v2698 = vpop.xlane.xlu0 %2697
        %v2699 = vsel %vm811, %v2690, 0.0
        %2700 = vadd.xlane.f32.xlu0 %v2699
        %v2701 = vpop.xlane.xlu0 %2700
        %v2702 = vsel %vm811, %v2692, 0.0
        %2703 = vadd.xlane.f32.xlu0 %v2702
        %v2704 = vpop.xlane.xlu0 %2703
        %v2705 = vrcp.pop %v2695
        %v2706 = vrcp.pop %v2698
        %v2707 = vrcp.pop %v2701
        %v2708 = vrcp.pop %v2704
        %v2709 = vmul.f32 %v2686, %v2705
        %v2710 = vmul.f32 %v2688, %v2706
        %v2711 = vmul.f32 %v2690, %v2707
        %v2712 = vmul.f32 %v2692, %v2708
        %v2714 = vsel %vm811, %v2709, 0
        %2716 = vmatprep.subr.mxu0 0.0
        %2717 = vmatpush1.msra.mxu0 %v2349
        %2718 = vmatprep.subr.mxu0 0.0
        %2719 = vmatpush1.msra.mxu0 0.0
        %2720 = vmatprep.subr.mxu0 0.0
        %2721 = vmatpush1.msra.mxu0 0.0
        %2722 = vmatprep.subr.mxu0 0.0
        %2723 = vmatpush1.msra.mxu0 0.0
        %2724 = vmatprep.subr.mxu0 0.0
        %2725 = vmatpush1.msra.mxu0 0.0
        %2726 = vmatprep.subr.mxu0 0.0
        %2727 = vmatpush1.msra.mxu0 0.0
        %2728 = vmatprep.subr.mxu0 0.0
        %2729 = vmatpush1.msra.mxu0 0.0
        %2730 = vmatprep.subr.mxu0 0.0
        %2731 = vmatpush1.msra.mxu0 0.0
        %2732 = vmatprep.subr.mxu0 0.0
        %2733 = vmatpush1.msra.mxu0 0.0
        %2734 = vmatprep.subr.mxu0 0.0
        %2735 = vmatpush1.msra.mxu0 0.0
        %2736 = vmatprep.subr.mxu0 0.0
        %2737 = vmatpush1.msra.mxu0 0.0
        %2738 = vmatprep.subr.mxu0 0.0
        %2739 = vmatpush1.msra.mxu0 0.0
        %2740 = vmatprep.subr.mxu0 0.0
        %2741 = vmatpush1.msra.mxu0 0.0
        %2742 = vmatprep.subr.mxu0 0.0
        %2743 = vmatpush1.msra.mxu0 0.0
        %2744 = vmatprep.subr.mxu0 0.0
        %2745 = vmatpush1.msra.mxu0 0.0
        %2746 = vmatprep.subr.mxu0 0.0
        %2747 = vmatpush1.msra.mxu0 0.0
        %2748 = vmatprep.subr.mxu0 0.0
        %2749 = vmatpush1.msra.mxu0 0.0
        %2750 = vmatprep.subr.mxu0 0.0
        %2751 = vmatpush1.msra.mxu0 0.0
        %2752 = vmatprep.subr.mxu0 0.0
        %2753 = vmatpush1.msra.mxu0 0.0
        %2754 = vmatprep.subr.mxu0 0.0
        %2755 = vmatpush1.msra.mxu0 0.0
        %2756 = vmatprep.subr.mxu0 0.0
        %2757 = vmatpush1.msra.mxu0 0.0
        %2758 = vmatprep.subr.mxu0 0.0
        %2759 = vmatpush1.msra.mxu0 0.0
        %2760 = vmatprep.subr.mxu0 0.0
        %2761 = vmatpush1.msra.mxu0 0.0
        %2762 = vmatprep.subr.mxu0 0.0
        %2763 = vmatpush1.msra.mxu0 0.0
        %2764 = vmatprep.subr.mxu0 0.0
        %2765 = vmatpush1.msra.mxu0 0.0
        %2766 = vmatprep.subr.mxu0 0.0
        %2767 = vmatpush1.msra.mxu0 0.0
        %2768 = vmatprep.subr.mxu0 0.0
        %2769 = vmatpush1.msra.mxu0 0.0
        %2770 = vmatprep.subr.mxu0 0.0
        %2771 = vmatpush1.msra.mxu0 0.0
        %2772 = vmatprep.subr.mxu0 0.0
        %2773 = vmatpush1.msra.mxu0 0.0
        %2774 = vmatprep.subr.mxu0 0.0
        %2775 = vmatpush1.msra.mxu0 0.0
        %2776 = vmatprep.subr.mxu0 0.0
        %2777 = vmatpush1.msra.mxu0 0.0
        %2778 = vmatprep.subr.mxu0 0.0
        %2779 = vmatpush1.msra.mxu0 0.0
        %2780 = vmatprep.mubr.f32.mxu0 0.0
        %2781 = vmatmul.mubr.f32.gmra.mrb[0].mxu0 %v2714
        %v2782 = vpop.f32.mrb[0].mxu0
        %v2783 = vadd.f32 0.0, %v2782
        %v2784 = vpop.f32.mrb[0].mxu0
        %2785 = vdwg.mxu0
        %v2787 = vsel %vm811, %v2710, 0
        %2789 = vmatprep.subr.mxu0 0.0
        %2790 = vmatpush1.msra.mxu0 %v2350
        %2791 = vmatprep.subr.mxu0 0.0
        %2792 = vmatpush1.msra.mxu0 0.0
        %2793 = vmatprep.subr.mxu0 0.0
        %2794 = vmatpush1.msra.mxu0 0.0
        %2795 = vmatprep.subr.mxu0 0.0
        %2796 = vmatpush1.msra.mxu0 0.0
        %2797 = vmatprep.subr.mxu0 0.0
        %2798 = vmatpush1.msra.mxu0 0.0
        %2799 = vmatprep.subr.mxu0 0.0
        %2800 = vmatpush1.msra.mxu0 0.0
        %2801 = vmatprep.subr.mxu0 0.0
        %2802 = vmatpush1.msra.mxu0 0.0
        %2803 = vmatprep.subr.mxu0 0.0
        %2804 = vmatpush1.msra.mxu0 0.0
        %2805 = vmatprep.subr.mxu0 0.0
        %2806 = vmatpush1.msra.mxu0 0.0
        %2807 = vmatprep.subr.mxu0 0.0
        %2808 = vmatpush1.msra.mxu0 0.0
        %2809 = vmatprep.subr.mxu0 0.0
        %2810 = vmatpush1.msra.mxu0 0.0
        %2811 = vmatprep.subr.mxu0 0.0
        %2812 = vmatpush1.msra.mxu0 0.0
        %2813 = vmatprep.subr.mxu0 0.0
        %2814 = vmatpush1.msra.mxu0 0.0
        %2815 = vmatprep.subr.mxu0 0.0
        %2816 = vmatpush1.msra.mxu0 0.0
        %2817 = vmatprep.subr.mxu0 0.0
        %2818 = vmatpush1.msra.mxu0 0.0
        %2819 = vmatprep.subr.mxu0 0.0
        %2820 = vmatpush1.msra.mxu0 0.0
        %2821 = vmatprep.subr.mxu0 0.0
        %2822 = vmatpush1.msra.mxu0 0.0
        %2823 = vmatprep.subr.mxu0 0.0
        %2824 = vmatpush1.msra.mxu0 0.0
        %2825 = vmatprep.subr.mxu0 0.0
        %2826 = vmatpush1.msra.mxu0 0.0
        %2827 = vmatprep.subr.mxu0 0.0
        %2828 = vmatpush1.msra.mxu0 0.0
        %2829 = vmatprep.subr.mxu0 0.0
        %2830 = vmatpush1.msra.mxu0 0.0
        %2831 = vmatprep.subr.mxu0 0.0
        %2832 = vmatpush1.msra.mxu0 0.0
        %2833 = vmatprep.subr.mxu0 0.0
        %2834 = vmatpush1.msra.mxu0 0.0
        %2835 = vmatprep.subr.mxu0 0.0
        %2836 = vmatpush1.msra.mxu0 0.0
        %2837 = vmatprep.subr.mxu0 0.0
        %2838 = vmatpush1.msra.mxu0 0.0
        %2839 = vmatprep.subr.mxu0 0.0
        %2840 = vmatpush1.msra.mxu0 0.0
        %2841 = vmatprep.subr.mxu0 0.0
        %2842 = vmatpush1.msra.mxu0 0.0
        %2843 = vmatprep.subr.mxu0 0.0
        %2844 = vmatpush1.msra.mxu0 0.0
        %2845 = vmatprep.subr.mxu0 0.0
        %2846 = vmatpush1.msra.mxu0 0.0
        %2847 = vmatprep.subr.mxu0 0.0
        %2848 = vmatpush1.msra.mxu0 0.0
        %2849 = vmatprep.subr.mxu0 0.0
        %2850 = vmatpush1.msra.mxu0 0.0
        %2851 = vmatprep.subr.mxu0 0.0
        %2852 = vmatpush1.msra.mxu0 0.0
        %2853 = vmatprep.mubr.f32.mxu0 0.0
        %2854 = vmatmul.mubr.f32.gmra.mrb[0].mxu0 %v2787
        %v2855 = vpop.f32.mrb[0].mxu0
        %v2856 = vadd.f32 0.0, %v2855
        %v2857 = vpop.f32.mrb[0].mxu0
        %2858 = vdwg.mxu0
        %v2860 = vsel %vm811, %v2711, 0
        %2862 = vmatprep.subr.mxu0 0.0
        %2863 = vmatpush1.msra.mxu0 %v2351
        %2864 = vmatprep.subr.mxu0 0.0
        %2865 = vmatpush1.msra.mxu0 0.0
        %2866 = vmatprep.subr.mxu0 0.0
        %2867 = vmatpush1.msra.mxu0 0.0
        %2868 = vmatprep.subr.mxu0 0.0
        %2869 = vmatpush1.msra.mxu0 0.0
        %2870 = vmatprep.subr.mxu0 0.0
        %2871 = vmatpush1.msra.mxu0 0.0
        %2872 = vmatprep.subr.mxu0 0.0
        %2873 = vmatpush1.msra.mxu0 0.0
        %2874 = vmatprep.subr.mxu0 0.0
        %2875 = vmatpush1.msra.mxu0 0.0
        %2876 = vmatprep.subr.mxu0 0.0
        %2877 = vmatpush1.msra.mxu0 0.0
        %2878 = vmatprep.subr.mxu0 0.0
        %2879 = vmatpush1.msra.mxu0 0.0
        %2880 = vmatprep.subr.mxu0 0.0
        %2881 = vmatpush1.msra.mxu0 0.0
        %2882 = vmatprep.subr.mxu0 0.0
        %2883 = vmatpush1.msra.mxu0 0.0
        %2884 = vmatprep.subr.mxu0 0.0
        %2885 = vmatpush1.msra.mxu0 0.0
        %2886 = vmatprep.subr.mxu0 0.0
        %2887 = vmatpush1.msra.mxu0 0.0
        %2888 = vmatprep.subr.mxu0 0.0
        %2889 = vmatpush1.msra.mxu0 0.0
        %2890 = vmatprep.subr.mxu0 0.0
        %2891 = vmatpush1.msra.mxu0 0.0
        %2892 = vmatprep.subr.mxu0 0.0
        %2893 = vmatpush1.msra.mxu0 0.0
        %2894 = vmatprep.subr.mxu0 0.0
        %2895 = vmatpush1.msra.mxu0 0.0
        %2896 = vmatprep.subr.mxu0 0.0
        %2897 = vmatpush1.msra.mxu0 0.0
        %2898 = vmatprep.subr.mxu0 0.0
        %2899 = vmatpush1.msra.mxu0 0.0
        %2900 = vmatprep.subr.mxu0 0.0
        %2901 = vmatpush1.msra.mxu0 0.0
        %2902 = vmatprep.subr.mxu0 0.0
        %2903 = vmatpush1.msra.mxu0 0.0
        %2904 = vmatprep.subr.mxu0 0.0
        %2905 = vmatpush1.msra.mxu0 0.0
        %2906 = vmatprep.subr.mxu0 0.0
        %2907 = vmatpush1.msra.mxu0 0.0
        %2908 = vmatprep.subr.mxu0 0.0
        %2909 = vmatpush1.msra.mxu0 0.0
        %2910 = vmatprep.subr.mxu0 0.0
        %2911 = vmatpush1.msra.mxu0 0.0
        %2912 = vmatprep.subr.mxu0 0.0
        %2913 = vmatpush1.msra.mxu0 0.0
        %2914 = vmatprep.subr.mxu0 0.0
        %2915 = vmatpush1.msra.mxu0 0.0
        %2916 = vmatprep.subr.mxu0 0.0
        %2917 = vmatpush1.msra.mxu0 0.0
        %2918 = vmatprep.subr.mxu0 0.0
        %2919 = vmatpush1.msra.mxu0 0.0
        %2920 = vmatprep.subr.mxu0 0.0
        %2921 = vmatpush1.msra.mxu0 0.0
        %2922 = vmatprep.subr.mxu0 0.0
        %2923 = vmatpush1.msra.mxu0 0.0
        %2924 = vmatprep.subr.mxu0 0.0
        %2925 = vmatpush1.msra.mxu0 0.0
        %2926 = vmatprep.mubr.f32.mxu0 0.0
        %2927 = vmatmul.mubr.f32.gmra.mrb[0].mxu0 %v2860
        %v2928 = vpop.f32.mrb[0].mxu0
        %v2929 = vadd.f32 0.0, %v2928
        %v2930 = vpop.f32.mrb[0].mxu0
        %2931 = vdwg.mxu0
        %v2933 = vsel %vm811, %v2712, 0
        %2935 = vmatprep.subr.mxu0 0.0
        %2936 = vmatpush1.msra.mxu0 %v2352
        %2937 = vmatprep.subr.mxu0 0.0
        %2938 = vmatpush1.msra.mxu0 0.0
        %2939 = vmatprep.subr.mxu0 0.0
        %2940 = vmatpush1.msra.mxu0 0.0
        %2941 = vmatprep.subr.mxu0 0.0
        %2942 = vmatpush1.msra.mxu0 0.0
        %2943 = vmatprep.subr.mxu0 0.0
        %2944 = vmatpush1.msra.mxu0 0.0
        %2945 = vmatprep.subr.mxu0 0.0
        %2946 = vmatpush1.msra.mxu0 0.0
        %2947 = vmatprep.subr.mxu0 0.0
        %2948 = vmatpush1.msra.mxu0 0.0
        %2949 = vmatprep.subr.mxu0 0.0
        %2950 = vmatpush1.msra.mxu0 0.0
        %2951 = vmatprep.subr.mxu0 0.0
        %2952 = vmatpush1.msra.mxu0 0.0
        %2953 = vmatprep.subr.mxu0 0.0
        %2954 = vmatpush1.msra.mxu0 0.0
        %2955 = vmatprep.subr.mxu0 0.0
        %2956 = vmatpush1.msra.mxu0 0.0
        %2957 = vmatprep.subr.mxu0 0.0
        %2958 = vmatpush1.msra.mxu0 0.0
        %2959 = vmatprep.subr.mxu0 0.0
        %2960 = vmatpush1.msra.mxu0 0.0
        %2961 = vmatprep.subr.mxu0 0.0
        %2962 = vmatpush1.msra.mxu0 0.0
        %2963 = vmatprep.subr.mxu0 0.0
        %2964 = vmatpush1.msra.mxu0 0.0
        %2965 = vmatprep.subr.mxu0 0.0
        %2966 = vmatpush1.msra.mxu0 0.0
        %2967 = vmatprep.subr.mxu0 0.0
        %2968 = vmatpush1.msra.mxu0 0.0
        %2969 = vmatprep.subr.mxu0 0.0
        %2970 = vmatpush1.msra.mxu0 0.0
        %2971 = vmatprep.subr.mxu0 0.0
        %2972 = vmatpush1.msra.mxu0 0.0
        %2973 = vmatprep.subr.mxu0 0.0
        %2974 = vmatpush1.msra.mxu0 0.0
        %2975 = vmatprep.subr.mxu0 0.0
        %2976 = vmatpush1.msra.mxu0 0.0
        %2977 = vmatprep.subr.mxu0 0.0
        %2978 = vmatpush1.msra.mxu0 0.0
        %2979 = vmatprep.subr.mxu0 0.0
        %2980 = vmatpush1.msra.mxu0 0.0
        %2981 = vmatprep.subr.mxu0 0.0
        %2982 = vmatpush1.msra.mxu0 0.0
        %2983 = vmatprep.subr.mxu0 0.0
        %2984 = vmatpush1.msra.mxu0 0.0
        %2985 = vmatprep.subr.mxu0 0.0
        %2986 = vmatpush1.msra.mxu0 0.0
        %2987 = vmatprep.subr.mxu0 0.0
        %2988 = vmatpush1.msra.mxu0 0.0
        %2989 = vmatprep.subr.mxu0 0.0
        %2990 = vmatpush1.msra.mxu0 0.0
        %2991 = vmatprep.subr.mxu0 0.0
        %2992 = vmatpush1.msra.mxu0 0.0
        %2993 = vmatprep.subr.mxu0 0.0
        %2994 = vmatpush1.msra.mxu0 0.0
        %2995 = vmatprep.subr.mxu0 0.0
        %2996 = vmatpush1.msra.mxu0 0.0
        %2997 = vmatprep.subr.mxu0 0.0
        %2998 = vmatpush1.msra.mxu0 0.0
        %2999 = vmatprep.mubr.f32.mxu0 0.0
        %3000 = vmatmul.mubr.f32.gmra.mrb[0].mxu0 %v2933
        %v3001 = vpop.f32.mrb[0].mxu0
        %v3002 = vadd.f32 0.0, %v3001
        %v3003 = vpop.f32.mrb[0].mxu0
        %3004 = vdwg.mxu0
        %v3005 = vcombine.low %v2783, %v2929
        %v3006 = vcombine.high %v2783, %v2929
        %v3008 = vunpack.c.l.s4 1983009808
        %v3009 = vunpack.c.0.s8 %v3008
        %v3010 = vlaneseq
        %v3011 = vshrl.u32 %v3010, 7
        %v3012 = vsub.s32 %v3009, %v3011
        %v3013 = vrot.slane %v3005, %v3012
        %v3015 = vunpack.c.l.s4 1983009808
        %v3016 = vunpack.c.0.s8 %v3015
        %v3017 = vlaneseq
        %v3018 = vshrl.u32 %v3017, 7
        %v3019 = vsub.s32 %v3016, %v3018
        %v3020 = vrot.slane %v3006, %v3019
        %v3021 = vcombine.low %v2856, %v3002
        %v3022 = vcombine.high %v2856, %v3002
        %v3024 = vunpack.c.l.s4 1983009808
        %v3025 = vunpack.c.0.s8 %v3024
        %v3026 = vlaneseq
        %v3027 = vshrl.u32 %v3026, 7
        %v3028 = vsub.s32 %v3025, %v3027
        %v3029 = vrot.slane %v3021, %v3028
        %v3031 = vunpack.c.l.s4 1983009808
        %v3032 = vunpack.c.0.s8 %v3031
        %v3033 = vlaneseq
        %v3034 = vshrl.u32 %v3033, 7
        %v3035 = vsub.s32 %v3032, %v3034
        %v3036 = vrot.slane %v3022, %v3035
        %v3037 = vcombine.low %v3013, %v3029
        %v3038 = vcombine.high %v3013, %v3029
        %v3040 = vunpack.c.l.s4 1934713408
        %v3041 = vunpack.c.0.s8 %v3040
        %v3042 = vlaneseq
        %v3043 = vshrl.u32 %v3042, 7
        %v3044 = vsub.s32 %v3041, %v3043
        %v3045 = vrot.slane %v3037, %v3044
        %v3047 = vunpack.c.l.s4 1934713408
        %v3048 = vunpack.c.0.s8 %v3047
        %v3049 = vlaneseq
        %v3050 = vshrl.u32 %v3049, 7
        %v3051 = vsub.s32 %v3048, %v3050
        %v3052 = vrot.slane %v3038, %v3051
        %v3053 = vcombine.low %v3020, %v3036
        %v3054 = vcombine.high %v3020, %v3036
        %v3056 = vunpack.c.l.s4 1934713408
        %v3057 = vunpack.c.0.s8 %v3056
        %v3058 = vlaneseq
        %v3059 = vshrl.u32 %v3058, 7
        %v3060 = vsub.s32 %v3057, %v3059
        %v3061 = vrot.slane %v3053, %v3060
        %v3063 = vunpack.c.l.s4 1934713408
        %v3064 = vunpack.c.0.s8 %v3063
        %v3065 = vlaneseq
        %v3066 = vshrl.u32 %v3065, 7
        %v3067 = vsub.s32 %v3064, %v3066
        %v3068 = vrot.slane %v3054, %v3067
        %v3069 = vcombine.high %v3045, 0.0
        %v3070 = vcombine.high %v3052, 0.0
        %v3071 = vcombine.high %v3061, 0.0
        %v3072 = vcombine.high %v3068, 0.0
        %v3073 = vcombine.low %v3045, %v3052
        %v3075 = vunpack.c.l.s4 1983009808
        %v3076 = vunpack.c.0.s8 %v3075
        %v3077 = vlaneseq
        %v3078 = vshrl.u32 %v3077, 7
        %v3079 = vsub.s32 %v3076, %v3078
        %v3080 = vrot.slane %v3073, %v3079
        %v3081 = vcombine.low %v3069, %v3070
        %v3083 = vunpack.c.l.s4 1983009808
        %v3084 = vunpack.c.0.s8 %v3083
        %v3085 = vlaneseq
        %v3086 = vshrl.u32 %v3085, 7
        %v3087 = vsub.s32 %v3084, %v3086
        %v3088 = vrot.slane %v3081, %v3087
        %v3089 = vcombine.low %v3061, %v3068
        %v3091 = vunpack.c.l.s4 1983009808
        %v3092 = vunpack.c.0.s8 %v3091
        %v3093 = vlaneseq
        %v3094 = vshrl.u32 %v3093, 7
        %v3095 = vsub.s32 %v3092, %v3094
        %v3096 = vrot.slane %v3089, %v3095
        %v3097 = vcombine.low %v3071, %v3072
        %v3099 = vunpack.c.l.s4 1983009808
        %v3100 = vunpack.c.0.s8 %v3099
        %v3101 = vlaneseq
        %v3102 = vshrl.u32 %v3101, 7
        %v3103 = vsub.s32 %v3100, %v3102
        %v3104 = vrot.slane %v3097, %v3103
        %v3105 = vcombine.low %v3080, %v3088
        %v3106 = vcombine.high %v3080, %v3088
        %v3108 = vunpack.c.l.s4 1934713408
        %v3109 = vunpack.c.0.s8 %v3108
        %v3110 = vlaneseq
        %v3111 = vshrl.u32 %v3110, 7
        %v3112 = vsub.s32 %v3109, %v3111
        %v3113 = vrot.slane %v3105, %v3112
        %v3115 = vunpack.c.l.s4 1934713408
        %v3116 = vunpack.c.0.s8 %v3115
        %v3117 = vlaneseq
        %v3118 = vshrl.u32 %v3117, 7
        %v3119 = vsub.s32 %v3116, %v3118
        %v3120 = vrot.slane %v3106, %v3119
        %v3121 = vcombine.low %v3096, %v3104
        %v3122 = vcombine.high %v3096, %v3104
        %v3124 = vunpack.c.l.s4 1934713408
        %v3125 = vunpack.c.0.s8 %v3124
        %v3126 = vlaneseq
        %v3127 = vshrl.u32 %v3126, 7
        %v3128 = vsub.s32 %v3125, %v3127
        %v3129 = vrot.slane %v3121, %v3128
        %v3131 = vunpack.c.l.s4 1934713408
        %v3132 = vunpack.c.0.s8 %v3131
        %v3133 = vlaneseq
        %v3134 = vshrl.u32 %v3133, 7
        %v3135 = vsub.s32 %v3132, %v3134
        %v3136 = vrot.slane %v3122, %v3135
        %v3137 = vcombine.low %v3113, %v3129
        %v3138 = vcombine.high %v3113, %v3129
        %v3139 = vcombine.low %v3120, %v3136
        %v3140 = vcombine.high %v3120, %v3136
        %3142 = vrot.lane.b32.xlu0 %v3138, 8
        %v3143 = vpop.permute.xlu0 %3142
        %3146 = vrot.lane.b32.xlu0 %v3139, 16
        %v3147 = vpop.permute.xlu0 %3146
        %3150 = vrot.lane.b32.xlu0 %v3140, 24
        %v3151 = vpop.permute.xlu0 %3150
        %v3153 = vsel %vm811, %v3137, %v3143
        %v3154 = vsel %vm1609, %v3153, %v3147
        %v3155 = vsel %vm1611, %v3154, %v3151
        %3156 = vrot.lane.b32.xlu0 %v1739, 32
        %v3157 = vpop.permute.xlu0 %3156
        %3158 = vrot.lane.b32.xlu0 %v1740, 32
        %v3159 = vpop.permute.xlu0 %3158
        %3160 = vrot.lane.b32.xlu0 %v1741, 32
        %v3161 = vpop.permute.xlu0 %3160
        %3162 = vrot.lane.b32.xlu0 %v1742, 32
        %v3163 = vpop.permute.xlu0 %3162
        %3168 = vrot.lane.b32.xlu0 %v1746, 32
        %v3169 = vpop.permute.xlu0 %3168
        %v3172 = vsel %vm295, %v3155, 0
        %3174 = vmatprep.subr.mxu0 0.0
        %3175 = vmatpush1.msra.mxu0 %v3157
        %3176 = vmatprep.subr.mxu0 0.0
        %3177 = vmatpush1.msra.mxu0 %v3159
        %3178 = vmatprep.subr.mxu0 0.0
        %3179 = vmatpush1.msra.mxu0 %v3161
        %3180 = vmatprep.subr.mxu0 0.0
        %3181 = vmatpush1.msra.mxu0 %v3163
        %3182 = vmatprep.subr.mxu0 0.0
        %3183 = vmatpush1.msra.mxu0 0.0
        %3184 = vmatprep.subr.mxu0 0.0
        %3185 = vmatpush1.msra.mxu0 0.0
        %3186 = vmatprep.subr.mxu0 0.0
        %3187 = vmatpush1.msra.mxu0 0.0
        %3188 = vmatprep.subr.mxu0 0.0
        %3189 = vmatpush1.msra.mxu0 0.0
        %3190 = vmatprep.subr.mxu0 0.0
        %3191 = vmatpush1.msra.mxu0 0.0
        %3192 = vmatprep.subr.mxu0 0.0
        %3193 = vmatpush1.msra.mxu0 0.0
        %3194 = vmatprep.subr.mxu0 0.0
        %3195 = vmatpush1.msra.mxu0 0.0
        %3196 = vmatprep.subr.mxu0 0.0
        %3197 = vmatpush1.msra.mxu0 0.0
        %3198 = vmatprep.subr.mxu0 0.0
        %3199 = vmatpush1.msra.mxu0 0.0
        %3200 = vmatprep.subr.mxu0 0.0
        %3201 = vmatpush1.msra.mxu0 0.0
        %3202 = vmatprep.subr.mxu0 0.0
        %3203 = vmatpush1.msra.mxu0 0.0
        %3204 = vmatprep.subr.mxu0 0.0
        %3205 = vmatpush1.msra.mxu0 0.0
        %3206 = vmatprep.subr.mxu0 0.0
        %3207 = vmatpush1.msra.mxu0 0.0
        %3208 = vmatprep.subr.mxu0 0.0
        %3209 = vmatpush1.msra.mxu0 0.0
        %3210 = vmatprep.subr.mxu0 0.0
        %3211 = vmatpush1.msra.mxu0 0.0
        %3212 = vmatprep.subr.mxu0 0.0
        %3213 = vmatpush1.msra.mxu0 0.0
        %3214 = vmatprep.subr.mxu0 0.0
        %3215 = vmatpush1.msra.mxu0 0.0
        %3216 = vmatprep.subr.mxu0 0.0
        %3217 = vmatpush1.msra.mxu0 0.0
        %3218 = vmatprep.subr.mxu0 0.0
        %3219 = vmatpush1.msra.mxu0 0.0
        %3220 = vmatprep.subr.mxu0 0.0
        %3221 = vmatpush1.msra.mxu0 0.0
        %3222 = vmatprep.subr.mxu0 0.0
        %3223 = vmatpush1.msra.mxu0 0.0
        %3224 = vmatprep.subr.mxu0 0.0
        %3225 = vmatpush1.msra.mxu0 0.0
        %3226 = vmatprep.subr.mxu0 0.0
        %3227 = vmatpush1.msra.mxu0 0.0
        %3228 = vmatprep.subr.mxu0 0.0
        %3229 = vmatpush1.msra.mxu0 0.0
        %3230 = vmatprep.subr.mxu0 0.0
        %3231 = vmatpush1.msra.mxu0 0.0
        %3232 = vmatprep.subr.mxu0 0.0
        %3233 = vmatpush1.msra.mxu0 0.0
        %3234 = vmatprep.subr.mxu0 0.0
        %3235 = vmatpush1.msra.mxu0 0.0
        %3236 = vmatprep.subr.mxu0 0.0
        %3237 = vmatpush1.msra.mxu0 0.0
        %3238 = vmatprep.mubr.f32.mxu0 0.0
        %3239 = vmatmul.mubr.f32.gmra.mrb[0].mxu0 %v3172
        %v3240 = vpop.f32.mrb[0].mxu0
        %v3241 = vadd.f32 %v3169, %v3240
        %v3242 = vpop.f32.mrb[0].mxu0
        %3243 = vdwg.mxu0
        %v3244 = vadd.f32 %v1737, %v3241
        %v3245 = vsel %vm295, %v3244, 0.0
        %3246 = vadd.xlane.f32.xlu0 %v3245
        %v3247 = vpop.xlane.xlu0 %3246
        %v3248 = vmul.f32 %v3247, %v1710
        %v3249 = vsub.f32 %v3244, %v3248
        %v3250 = vmul.f32 %v3249, %v3249
        %v3251 = vsel %vm295, %v3250, 0.0
        %3252 = vadd.xlane.f32.xlu0 %v3251
        %v3253 = vpop.xlane.xlu0 %3252
        %v3254 = vmul.f32 %v3253, 0.032258064
        %v3255 = vrsqrt.pop %v3254
        %v3256 = vmul.f32 %v3254, %v3255
        %vm3257 = vcmp.eq.f32.partialorder %v3254, inf
        %v3258 = vsel %vm3257, %v3254, %v3256
        %vm3259 = vcmp.eq.f32.partialorder %v3254, 0.0
        %v3260 = vand.u32 %v3254, 2147483648
        %v3261 = vsel %vm3259, %v3260, %v3258
        %v3262 = vadd.f32 %v3261, 1e-06
        %v3263 = vrcp.pop %v3262
        %v3264 = vmul.f32 %v3249, %v3263
        %3266 = vrot.lane.b32.xlu0 %v3264, 64
        %v3267 = vpop.permute.xlu0 %3266
        %v3269 = vmul.f32 %v1731, %v3267
        %v3270 = vadd.f32 %v3269, %v1735
        %v3271 = vld [vmem:[%s4] sm:$0xff]
        %v3272 = vld [vmem:[%s4 + $0x8] sm:$0xff]
        %v3273 = vld [vmem:[%s4 + $0x10] sm:$0xff]
        %v3274 = vld [vmem:[%s4 + $0x18] sm:$0xff]
        %v3275 = vld [vmem:[%s4 + $0x20] sm:$0xff]
        %v3276 = vld [vmem:[%s4 + $0x28] sm:$0xff]
        %v3277 = vld [vmem:[%s4 + $0x30] sm:$0xff]
        %v3278 = vld [vmem:[%s4 + $0x38] sm:$0xff]
        %v3279 = vld [vmem:[%s4 + $0x40] sm:$0xff]
        %v3280 = vld [vmem:[%s4 + $0x48] sm:$0xff]
        %v3281 = vld [vmem:[%s4 + $0x50] sm:$0xff]
        %v3282 = vld [vmem:[%s4 + $0x58] sm:$0xff]
        %v3283 = vlaneseq
        %v3284 = vshrl.u32 %v3283, 7
        %v3285 = vsub.s32 2, %v3284
        %v3286 = vrot.slane %v286, %v3285
        %3288 = vrot.lane.b32.xlu0 %v3270, 64
        %v3289 = vpop.permute.xlu0 %3288
        %v3290 = vsel %vm295, %v3289, 0
        %3292 = vmatprep.subr.mxu0 0.0
        %3293 = vmatpush1.msra.mxu0 %v3271
        %3294 = vmatprep.subr.mxu0 0.0
        %3295 = vmatpush1.msra.mxu0 %v3272
        %3296 = vmatprep.subr.mxu0 0.0
        %3297 = vmatpush1.msra.mxu0 %v3273
        %3298 = vmatprep.subr.mxu0 0.0
        %3299 = vmatpush1.msra.mxu0 %v3274
        %3300 = vmatprep.subr.mxu0 0.0
        %3301 = vmatpush1.msra.mxu0 0.0
        %3302 = vmatprep.subr.mxu0 0.0
        %3303 = vmatpush1.msra.mxu0 0.0
        %3304 = vmatprep.subr.mxu0 0.0
        %3305 = vmatpush1.msra.mxu0 0.0
        %3306 = vmatprep.subr.mxu0 0.0
        %3307 = vmatpush1.msra.mxu0 0.0
        %3308 = vmatprep.subr.mxu0 0.0
        %3309 = vmatpush1.msra.mxu0 0.0
        %3310 = vmatprep.subr.mxu0 0.0
        %3311 = vmatpush1.msra.mxu0 0.0
        %3312 = vmatprep.subr.mxu0 0.0
        %3313 = vmatpush1.msra.mxu0 0.0
        %3314 = vmatprep.subr.mxu0 0.0
        %3315 = vmatpush1.msra.mxu0 0.0
        %3316 = vmatprep.subr.mxu0 0.0
        %3317 = vmatpush1.msra.mxu0 0.0
        %3318 = vmatprep.subr.mxu0 0.0
        %3319 = vmatpush1.msra.mxu0 0.0
        %3320 = vmatprep.subr.mxu0 0.0
        %3321 = vmatpush1.msra.mxu0 0.0
        %3322 = vmatprep.subr.mxu0 0.0
        %3323 = vmatpush1.msra.mxu0 0.0
        %3324 = vmatprep.subr.mxu0 0.0
        %3325 = vmatpush1.msra.mxu0 0.0
        %3326 = vmatprep.subr.mxu0 0.0
        %3327 = vmatpush1.msra.mxu0 0.0
        %3328 = vmatprep.subr.mxu0 0.0
        %3329 = vmatpush1.msra.mxu0 0.0
        %3330 = vmatprep.subr.mxu0 0.0
        %3331 = vmatpush1.msra.mxu0 0.0
        %3332 = vmatprep.subr.mxu0 0.0
        %3333 = vmatpush1.msra.mxu0 0.0
        %3334 = vmatprep.subr.mxu0 0.0
        %3335 = vmatpush1.msra.mxu0 0.0
        %3336 = vmatprep.subr.mxu0 0.0
        %3337 = vmatpush1.msra.mxu0 0.0
        %3338 = vmatprep.subr.mxu0 0.0
        %3339 = vmatpush1.msra.mxu0 0.0
        %3340 = vmatprep.subr.mxu0 0.0
        %3341 = vmatpush1.msra.mxu0 0.0
        %3342 = vmatprep.subr.mxu0 0.0
        %3343 = vmatpush1.msra.mxu0 0.0
        %3344 = vmatprep.subr.mxu0 0.0
        %3345 = vmatpush1.msra.mxu0 0.0
        %3346 = vmatprep.subr.mxu0 0.0
        %3347 = vmatpush1.msra.mxu0 0.0
        %3348 = vmatprep.subr.mxu0 0.0
        %3349 = vmatpush1.msra.mxu0 0.0
        %3350 = vmatprep.subr.mxu0 0.0
        %3351 = vmatpush1.msra.mxu0 0.0
        %3352 = vmatprep.subr.mxu0 0.0
        %3353 = vmatpush1.msra.mxu0 0.0
        %3354 = vmatprep.subr.mxu0 0.0
        %3355 = vmatpush1.msra.mxu0 0.0
        %3356 = vmatprep.mubr.f32.mxu0 0.0
        %3357 = vmatmul.mubr.f32.gmra.mrb[0].mxu0 %v3290
        %v3358 = vpop.f32.mrb[0].mxu0
        %v3359 = vadd.f32 %v3286, %v3358
        %v3360 = vpop.f32.mrb[0].mxu0
        %3361 = vdwg.mxu0
        %v3362 = vmax.f32 %v3359, 0.0
        %3364 = vrot.lane.b32.xlu0 %v3286, 64
        %v3365 = vpop.permute.xlu0 %3364
        %vm3367 = vcmask 523264
        %v3369 = vsel %vm3367, %v3362, 0
        %3371 = vmatprep.subr.mxu0 0.0
        %3372 = vmatpush1.msra.mxu0 %v3275
        %3373 = vmatprep.subr.mxu0 0.0
        %3374 = vmatpush1.msra.mxu0 %v3276
        %3375 = vmatprep.subr.mxu0 0.0
        %3376 = vmatpush1.msra.mxu0 %v3277
        %3377 = vmatprep.subr.mxu0 0.0
        %3378 = vmatpush1.msra.mxu0 %v3278
        %3379 = vmatprep.subr.mxu0 0.0
        %3380 = vmatpush1.msra.mxu0 %v3279
        %3381 = vmatprep.subr.mxu0 0.0
        %3382 = vmatpush1.msra.mxu0 %v3280
        %3383 = vmatprep.subr.mxu0 0.0
        %3384 = vmatpush1.msra.mxu0 %v3281
        %3385 = vmatprep.subr.mxu0 0.0
        %3386 = vmatpush1.msra.mxu0 %v3282
        %3387 = vmatprep.subr.mxu0 0.0
        %3388 = vmatpush1.msra.mxu0 0.0
        %3389 = vmatprep.subr.mxu0 0.0
        %3390 = vmatpush1.msra.mxu0 0.0
        %3391 = vmatprep.subr.mxu0 0.0
        %3392 = vmatpush1.msra.mxu0 0.0
        %3393 = vmatprep.subr.mxu0 0.0
        %3394 = vmatpush1.msra.mxu0 0.0
        %3395 = vmatprep.subr.mxu0 0.0
        %3396 = vmatpush1.msra.mxu0 0.0
        %3397 = vmatprep.subr.mxu0 0.0
        %3398 = vmatpush1.msra.mxu0 0.0
        %3399 = vmatprep.subr.mxu0 0.0
        %3400 = vmatpush1.msra.mxu0 0.0
        %3401 = vmatprep.subr.mxu0 0.0
        %3402 = vmatpush1.msra.mxu0 0.0
        %3403 = vmatprep.subr.mxu0 0.0
        %3404 = vmatpush1.msra.mxu0 0.0
        %3405 = vmatprep.subr.mxu0 0.0
        %3406 = vmatpush1.msra.mxu0 0.0
        %3407 = vmatprep.subr.mxu0 0.0
        %3408 = vmatpush1.msra.mxu0 0.0
        %3409 = vmatprep.subr.mxu0 0.0
        %3410 = vmatpush1.msra.mxu0 0.0
        %3411 = vmatprep.subr.mxu0 0.0
        %3412 = vmatpush1.msra.mxu0 0.0
        %3413 = vmatprep.subr.mxu0 0.0
        %3414 = vmatpush1.msra.mxu0 0.0
        %3415 = vmatprep.subr.mxu0 0.0
        %3416 = vmatpush1.msra.mxu0 0.0
        %3417 = vmatprep.subr.mxu0 0.0
        %3418 = vmatpush1.msra.mxu0 0.0
        %3419 = vmatprep.subr.mxu0 0.0
        %3420 = vmatpush1.msra.mxu0 0.0
        %3421 = vmatprep.subr.mxu0 0.0
        %3422 = vmatpush1.msra.mxu0 0.0
        %3423 = vmatprep.subr.mxu0 0.0
        %3424 = vmatpush1.msra.mxu0 0.0
        %3425 = vmatprep.subr.mxu0 0.0
        %3426 = vmatpush1.msra.mxu0 0.0
        %3427 = vmatprep.subr.mxu0 0.0
        %3428 = vmatpush1.msra.mxu0 0.0
        %3429 = vmatprep.subr.mxu0 0.0
        %3430 = vmatpush1.msra.mxu0 0.0
        %3431 = vmatprep.subr.mxu0 0.0
        %3432 = vmatpush1.msra.mxu0 0.0
        %3433 = vmatprep.subr.mxu0 0.0
        %3434 = vmatpush1.msra.mxu0 0.0
        %3435 = vmatprep.mubr.f32.mxu0 0.0
        %3436 = vmatmul.mubr.f32.gmra.mrb[0].mxu0 %v3369
        %v3437 = vpop.f32.mrb[0].mxu0
        %v3438 = vadd.f32 %v3365, %v3437
        %v3439 = vpop.f32.mrb[0].mxu0
        %3440 = vdwg.mxu0
        %3442 = vrot.lane.b32.xlu0 %v3438, 64
        %v3443 = vpop.permute.xlu0 %3442
        %v3445 = vadd.f32 %v3270, %v3443
        %3447 = vrot.lane.b32.xlu0 %v3445, 64
        %v3448 = vpop.permute.xlu0 %3447
        %v3450 = vsel %vm295, %v3448, 0.0
        %3451 = vadd.xlane.f32.xlu0 %v3450
        %v3452 = vpop.xlane.xlu0 %3451
        %v3453 = vmul.f32 %v3452, %v1710
        %v3454 = vsub.f32 %v3445, %v3453
        %v3455 = vmul.f32 %v3454, %v3454
        %3457 = vrot.lane.b32.xlu0 %v3455, 64
        %v3458 = vpop.permute.xlu0 %3457
        %v3460 = vsel %vm295, %v3458, 0.0
        %3461 = vadd.xlane.f32.xlu0 %v3460
        %v3462 = vpop.xlane.xlu0 %3461
        %v3463 = vmul.f32 %v3462, 0.032258064
        %v3464 = vrsqrt.pop %v3463
        %v3465 = vmul.f32 %v3463, %v3464
        %vm3466 = vcmp.eq.f32.partialorder %v3463, inf
        %v3467 = vsel %vm3466, %v3463, %v3465
        %vm3468 = vcmp.eq.f32.partialorder %v3463, 0.0
        %v3469 = vand.u32 %v3463, 2147483648
        %v3470 = vsel %vm3468, %v3469, %v3467
        %v3471 = vadd.f32 %v3470, 1e-06
        %v3472 = vrcp.pop %v3471
        %v3473 = vmul.f32 %v3454, %v3472
        %v3474 = vlaneseq
        %v3475 = vshrl.u32 %v3474, 7
        %v3476 = vsub.s32 4, %v3475
        %v3477 = vrot.slane %v286, %v3476
        %3479 = vrot.lane.b32.xlu0 %v3473, 64
        %v3480 = vpop.permute.xlu0 %3479
        %v3482 = vmul.f32 %v3477, %v3480
        %3484 = vrot.lane.b32.xlu0 %v3477, 96
        %v3485 = vpop.permute.xlu0 %3484
        %v3487 = vadd.f32 %v3482, %v3485
        %3488 = vst.msk [vmem:[%s268] sm:$0xff] %vm295, %v3487
        %s3489 = sand.u32 %s169, 1
        %s3490 = scalar_lea.sflag [#allocation3], %s3489
        %s3491 = sand.u32 %s169, 1
        %s3492 = smul.addr %s3491, 8
        %s3493 = scalar_lea.vmem [#allocation2], %s3492
        // Predicated region
        $region45: #{decoder_layer.1} parent=43 // pred_check
          %p3494 = pneg %p179
        $region46: #{decoder_layer.1} parent=43 // pred_check_branch
          %3496 = sbr.rel (%p3494) target = $region48
        $region47: #{decoder_layer.1} parent=43 // pred_region
          %s3498 = ssub.s32 128, 128
          %3499 = vsyncadd %s3490, %s3498
          %s3500 = smul.addr %s20, 128
          %s3501 = scalar_lea.hbm %s6, %s3500
          %s3503 = sshll.u32 %s3493, 4
          %s3504 = int_to_ptr.vmem [resolvable:$true] %s3503
          %3506 = dma.vmem_to_hbm [thread:$0]  %s3504, 128, %s3501, %s3490
        $region48: #{decoder_layer.1} parent=43 // pred_fallthru
          _
      $region44: #{decoder_layer.1} parent=5 // pred_fallthru
        _
      %p3507 = scmp.le.s32.totalorder 2, %s15
      // Predicated region
      $region49: #{decoder_layer.1} parent=5 // pred_check
        %p3508 = pneg %p3507
      $region50: #{decoder_layer.1} parent=5 // pred_check_branch
        %3510 = sbr.rel (%p3508) target = $region52
      $region51: #{decoder_layer.1} parent=5 // pred_region
        %s3511 = ssub.s32 %s15, 2
        // Predicated region
        $region53: #{decoder_layer.1} parent=51 // pred_check
          %p3512 = pneg %p185
        $region54: #{decoder_layer.1} parent=51 // pred_check_branch
          %3514 = sbr.rel (%p3512) target = $region56
        $region55: #{decoder_layer.1} parent=51 // pred_region
          %s3515 = sand.u32 %s170, 1
          %s3516 = scalar_lea.sflag [#allocation3], %s3515
          %s3517 = sand.u32 %s170, 1
          %s3518 = smul.addr %s3517, 8
          %s3519 = scalar_lea.vmem [#allocation2], %s3518
          %3520 = dma.done %s3516, 128
        $region56: #{decoder_layer.1} parent=51 // pred_fallthru
          _
      $region52: #{decoder_layer.1} parent=5 // pred_fallthru
        _
    $region6: #{decoder_layer.1} parent=1 // loop_footer
      %s19 = sadd.s32 1, %s15
    $region7: #{decoder_layer.1} parent=1 // loop_footer_branch
      %14 = sbr.rel target = $region3
    $region8: #{decoder_layer.1} parent=1 // loop_exit
      _
    %3521 = vsyncpa [#allocation3], 1
    %s3522 = scalar_lea.sflag [#allocation3], 1
    %3523 = vsyncpa %s3522, 1

</llo_original>
